<compile_context>
chip_gen: v6e
topology: v6e:2x2x1
jax: 0.10.0
libtpu: 0.0.40
codegen_flags: <defaults>
</compile_context>

<pallas_src>
import jax
import jax.numpy as jnp
from jax.experimental import pallas as pl
from jax.experimental.pallas import tpu as pltpu


# ----------------------------------------------------------------------------
# Fused forward kernel: everything stays in VMEM / vregs; only (bt,1) hits HBM.
# ----------------------------------------------------------------------------
def _fused_forward_kernel(x_ref, w1_ref, b1_ref, w2_ref, b2_ref,
                          w3_ref, b3_ref, w4_ref, b4_ref, w5_ref, b5_ref,
                          o_ref):
    # conv1 + ReLU as a dense bf16 matmul (f32 accumulate). (bt, 896)
    h = jnp.dot(x_ref[...], w1_ref[...], preferred_element_type=jnp.float32)
    h = jnp.maximum(h + b1_ref[...], 0.0)
    # conv2 + ReLU; columns already in torch NCHW .view(-1,1024) order. (bt, 1024)
    h = jnp.dot(h.astype(jnp.bfloat16), w2_ref[...],
                preferred_element_type=jnp.float32)
    h = jnp.maximum(h + b2_ref[...], 0.0)
    # linear1 + ReLU (bt, 512)
    h = jnp.dot(h.astype(jnp.bfloat16), w3_ref[...],
                preferred_element_type=jnp.float32)
    h = jnp.maximum(h + b3_ref[...], 0.0)
    # linear2 + ReLU (bt, 128)
    h = jnp.dot(h.astype(jnp.bfloat16), w4_ref[...],
                preferred_element_type=jnp.float32)
    h = jnp.maximum(h + b4_ref[...], 0.0)
    # linear3: output width 1 -> VPU multiply + lane reduce instead of a
    # 1-wide MXU pass; scalar bias lives in SMEM. Sigmoid stays in f32 with
    # EUP exp + approximate EUP reciprocal.
    y = jnp.sum(h * w5_ref[...], axis=-1, keepdims=True) + b5_ref[0, 0]
    o_ref[...] = pl.reciprocal(1.0 + jnp.exp(-y), approx=True).astype(o_ref.dtype)


# ----------------------------------------------------------------------------
# One-time parameter preparation (outside the hot path)
# ----------------------------------------------------------------------------
def conv_to_dense(w, h_in, w_in):
    """Lower a VALID conv (weights (Cout,Cin,KH,KW), OIHW) on a (Cin,h_in,w_in)
    input to a dense matrix M of shape (Cin*h_in*w_in, Cout*OH*OW) such that
    x_flat_nchw @ M == conv(x)_flat_nchw. Entries are exact copies of w."""
    cout, cin, kh, kw = w.shape
    oh, ow = h_in - kh + 1, w_in - kw + 1
    co, ci, ki, kj, oi, oj = jnp.meshgrid(
        jnp.arange(cout), jnp.arange(cin), jnp.arange(kh), jnp.arange(kw),
        jnp.arange(oh), jnp.arange(ow), indexing="ij")
    rows = ci * (h_in * w_in) + (oi + ki) * w_in + (oj + kj)
    cols = co * (oh * ow) + oi * ow + oj
    vals = jnp.broadcast_to(w[:, :, :, :, None, None], co.shape)
    m = jnp.zeros((cin * h_in * w_in, cout * oh * ow), jnp.float32)
    return m.at[rows.ravel(), cols.ravel()].set(vals.ravel().astype(jnp.float32))


def prepare_params(p):
    """Lower convs to dense matrices, pad to 128-lane alignment, pre-transpose
    linear weights to (in, out), broadcast conv biases, cast MXU operands to
    bf16. Called once, outside the hot path."""
    w1 = conv_to_dense(p["conv1_w"], 16, 16)          # (256, 864), cols = NCHW(6,12,12)
    b1 = jnp.repeat(p["conv1_b"], 12 * 12)            # (864,)
    w1 = jnp.pad(w1, ((0, 0), (0, 32)))               # (256, 896): 7*128 lanes
    b1 = jnp.pad(b1, (0, 32))                         # padded cols -> relu(0) = 0

    w2 = conv_to_dense(p["conv2_w"], 12, 12)          # (864, 1024), cols = NCHW(16,8,8)
    w2 = jnp.pad(w2, ((0, 32), (0, 0)))               # zero rows for the padded h1 lanes
    b2 = jnp.repeat(p["conv2_b"], 8 * 8)              # (1024,) == torch .view(-1,1024) order

    bf = jnp.bfloat16
    f32 = jnp.float32
    return {
        "w1": w1.astype(bf), "b1": b1.reshape(1, 896).astype(f32),
        "w2": w2.astype(bf), "b2": b2.reshape(1, 1024).astype(f32),
        "w3": p["lin1_w"].T.astype(bf), "b3": p["lin1_b"].reshape(1, 512).astype(f32),
        "w4": p["lin2_w"].T.astype(bf), "b4": p["lin2_b"].reshape(1, 128).astype(f32),
        "w5": p["lin3_w"].reshape(1, 128).astype(f32),   # f32: used on the VPU, not MXU
        "b5": p["lin3_b"].reshape(1, 1).astype(f32),
    }


# ----------------------------------------------------------------------------
# Batch tiling: >=2 grid steps (v7x megacore), sublane/MXU-aligned tile rows
# ----------------------------------------------------------------------------
def _round_up(a, m):
    return ((a + m - 1) // m) * m


def _choose_tiling(n, block_rows):
    bt = _round_up(max(-(-n // 2), 16), 16)           # >=16 rows (bf16 sublane pack)
    if bt >= 256:
        bt = _round_up(bt, 256)                       # fill the 256-wide MXU M tile
    bt = min(bt, block_rows)
    n_pad = max(2 * bt, _round_up(n, bt))             # always >= 2 grid steps
    return bt, n_pad


# ----------------------------------------------------------------------------
# Forward pass: a single pallas_call, grid over batch tiles
# ----------------------------------------------------------------------------
def discriminator_conv_forward(x_nchw, prep, block_rows=512):
    n = x_nchw.shape[0]
    xf = x_nchw.reshape(n, 256).astype(jnp.bfloat16)  # NCHW flatten (C=1), contiguous

    bt, n_pad = _choose_tiling(n, block_rows)
    if n_pad != n:
        xf = jnp.pad(xf, ((0, n_pad - n), (0, 0)))

    # Constant-index weights: VMEM-resident, single-buffered (no wasted VMEM).
    resident = lambda shape: pl.BlockSpec(shape, lambda i: (0, 0),
                                          pipeline_mode=pl.Buffered(1))
    out = pl.pallas_call(
        _fused_forward_kernel,
        out_shape=jax.ShapeDtypeStruct((n_pad, 1), jnp.float32),
        grid=(n_pad // bt,),
        in_specs=[
            pl.BlockSpec((bt, 256), lambda i: (i, 0)),            # image tile (bf16)
            resident((256, 896)),  resident((1, 896)),            # conv1 (lowered) + bias
            resident((896, 1024)), resident((1, 1024)),           # conv2 (lowered) + bias
            resident((1024, 512)), resident((1, 512)),            # linear1
            resident((512, 128)),  resident((1, 128)),            # linear2
            resident((1, 128)),                                   # linear3 weight row
            pl.BlockSpec(memory_space=pltpu.MemorySpace.SMEM),    # linear3 scalar bias
        ],
        out_specs=pl.BlockSpec((bt, 1), lambda i: (i, 0)),
        compiler_params=pltpu.CompilerParams(
            dimension_semantics=("parallel",),                    # shard batch across TCs
            vmem_limit_bytes=32 * 1024 * 1024,                    # v5e default is only 16 MiB
        ),
    )(xf, prep["w1"], prep["b1"], prep["w2"], prep["b2"],
      prep["w3"], prep["b3"], prep["w4"], prep["b4"],
      prep["w5"], prep["b5"])
    return out[:n]                                                # (N, 1)


# ----------------------------------------------------------------------------
# Parameter init (PyTorch-style uniform) and pure-JAX reference
# ----------------------------------------------------------------------------
def init_params(key):
    ks = jax.random.split(key, 10)

    def u(k, shape, fan_in):
        bound = 1.0 / jnp.sqrt(jnp.float32(fan_in))
        return jax.random.uniform(k, shape, jnp.float32, -bound, bound)

    return {
        "conv1_w": u(ks[0], (6, 1, 5, 5), 1 * 5 * 5),
        "conv1_b": u(ks[1], (6,), 1 * 5 * 5),
        "conv2_w": u(ks[2], (16, 6, 5, 5), 6 * 5 * 5),
        "conv2_b": u(ks[3], (16,), 6 * 5 * 5),
        "lin1_w": u(ks[4], (512, 1024), 1024),   # torch layout: (out, in)
        "lin1_b": u(ks[5], (512,), 1024),
        "lin2_w": u(ks[6], (128, 512), 512),
        "lin2_b": u(ks[7], (128,), 512),
        "lin3_w": u(ks[8], (1, 128), 128),
        "lin3_b": u(ks[9], (1,), 128),
    }


def reference_forward(x_nchw, p):
    dn = ("NCHW", "OIHW", "NCHW")
    hp = jax.lax.Precision.HIGHEST
    y = jax.lax.conv_general_dilated(x_nchw, p["conv1_w"], (1, 1), "VALID",
                                     dimension_numbers=dn, precision=hp)
    y = jnp.maximum(y + p["conv1_b"].reshape(1, 6, 1, 1), 0.0)
    y = jax.lax.conv_general_dilated(y, p["conv2_w"], (1, 1), "VALID",
                                     dimension_numbers=dn, precision=hp)
    y = jnp.maximum(y + p["conv2_b"].reshape(1, 16, 1, 1), 0.0)
    y = y.reshape(-1, 1024)
    y = jnp.maximum(jnp.dot(y, p["lin1_w"].T, precision=hp) + p["lin1_b"], 0.0)
    y = jnp.maximum(jnp.dot(y, p["lin2_w"].T, precision=hp) + p["lin2_b"], 0.0)
    y = jax.nn.sigmoid(jnp.dot(y, p["lin3_w"].T, precision=hp) + p["lin3_b"])
    return y


if __name__ == "__main__":
    key = jax.random.PRNGKey(0)
    kx, kp = jax.random.split(key)
    params = init_params(kp)
    prep = prepare_params(params)     # one-time weight lowering / cast / pre-transpose

    # Input implied by the module: 16x16 single-channel images -> 1024 flat features.
    x = jax.random.normal(kx, (2, 1, 16, 16), jnp.float32)

    fwd = jax.jit(discriminator_conv_forward)
    out = jax.block_until_ready(fwd(x, prep))
    ref = jax.block_until_ready(reference_forward(x, params))

    assert out.shape == (2, 1), out.shape
    # bf16 matmul operands with f32 accumulation: 2e-2 tolerance on [0,1] outputs.
    assert jnp.allclose(out, ref, atol=2e-2, rtol=2e-2), (out, ref)
    print("KERNEL_OK")
</pallas_src>

<mosaic_0001>
module attributes {stable_mosaic.version = 11 : i64} {
  func.func @_fused_forward_kernel(%arg0: i32, %arg1: memref<16x256xbf16, #tpu.memory_space<vmem>>, %arg2: memref<256x896xbf16, #tpu.memory_space<vmem>>, %arg3: memref<1x896xf32, #tpu.memory_space<vmem>>, %arg4: memref<896x1024xbf16, #tpu.memory_space<vmem>>, %arg5: memref<1x1024xf32, #tpu.memory_space<vmem>>, %arg6: memref<1024x512xbf16, #tpu.memory_space<vmem>>, %arg7: memref<1x512xf32, #tpu.memory_space<vmem>>, %arg8: memref<512x128xbf16, #tpu.memory_space<vmem>>, %arg9: memref<1x128xf32, #tpu.memory_space<vmem>>, %arg10: memref<1x128xf32, #tpu.memory_space<vmem>>, %arg11: memref<1x1xf32, #tpu.memory_space<smem>>, %arg12: memref<16x1xf32, #tpu.memory_space<vmem>>) attributes {dimension_semantics = [#tpu.dimension_semantics<parallel>], iteration_bounds = array<i64: 2>, scalar_prefetch = 0 : i64, scratch_operands = 0 : i64, tpu.core_type = #tpu.core_type<tc>, window_params = [{transform_indices = @transform_0, window_bounds = array<i64: 16, 256>}, {pipeline_mode = #tpu.pipeline_mode<synchronous>, transform_indices = @transform_1, window_bounds = array<i64: 256, 896>}, {pipeline_mode = #tpu.pipeline_mode<synchronous>, transform_indices = @transform_2, window_bounds = array<i64: 1, 896>}, {pipeline_mode = #tpu.pipeline_mode<synchronous>, transform_indices = @transform_3, window_bounds = array<i64: 896, 1024>}, {pipeline_mode = #tpu.pipeline_mode<synchronous>, transform_indices = @transform_4, window_bounds = array<i64: 1, 1024>}, {pipeline_mode = #tpu.pipeline_mode<synchronous>, transform_indices = @transform_5, window_bounds = array<i64: 1024, 512>}, {pipeline_mode = #tpu.pipeline_mode<synchronous>, transform_indices = @transform_6, window_bounds = array<i64: 1, 512>}, {pipeline_mode = #tpu.pipeline_mode<synchronous>, transform_indices = @transform_7, window_bounds = array<i64: 512, 128>}, {pipeline_mode = #tpu.pipeline_mode<synchronous>, transform_indices = @transform_8, window_bounds = array<i64: 1, 128>}, {pipeline_mode = #tpu.pipeline_mode<synchronous>, transform_indices = @transform_9, window_bounds = array<i64: 1, 128>}, {transform_indices = @transform_10, window_bounds = array<i64: 1, 1>}, {transform_indices = @transform_11, window_bounds = array<i64: 16, 1>}]} {
    %c0 = arith.constant 0 : index
    %c0_0 = arith.constant 0 : index
    %0 = vector.load %arg1[%c0, %c0_0] : memref<16x256xbf16, #tpu.memory_space<vmem>>, vector<16x256xbf16>
    %c0_1 = arith.constant 0 : index
    %c0_2 = arith.constant 0 : index
    %1 = vector.load %arg2[%c0_1, %c0_2] : memref<256x896xbf16, #tpu.memory_space<vmem>>, vector<256x896xbf16>
    %cst = arith.constant dense<0.000000e+00> : vector<16x896xf32>
    %2 = tpu.matmul %0, %1, %cst {dimension_numbers = #tpu.dot_dimension_numbers<[1], [0], [0], [1], [0, 0, 1, 1], [], []>} : vector<16x256xbf16>, vector<256x896xbf16>, vector<16x896xf32> -> vector<16x896xf32>
    %c0_3 = arith.constant 0 : index
    %c0_4 = arith.constant 0 : index
    %3 = vector.load %arg3[%c0_3, %c0_4] : memref<1x896xf32, #tpu.memory_space<vmem>>, vector<1x896xf32>
    %4 = vector.broadcast %3 : vector<1x896xf32> to vector<16x896xf32>
    %5 = arith.addf %2, %4 : vector<16x896xf32>
    %cst_5 = arith.constant 0.000000e+00 : f32
    %6 = vector.broadcast %cst_5 : f32 to vector<16x896xf32>
    %7 = arith.maximumf %5, %6 : vector<16x896xf32>
    %8 = arith.truncf %7 : vector<16x896xf32> to vector<16x896xbf16>
    %c0_6 = arith.constant 0 : index
    %c0_7 = arith.constant 0 : index
    %9 = vector.load %arg4[%c0_6, %c0_7] : memref<896x1024xbf16, #tpu.memory_space<vmem>>, vector<896x1024xbf16>
    %cst_8 = arith.constant dense<0.000000e+00> : vector<16x1024xf32>
    %10 = tpu.matmul %8, %9, %cst_8 {dimension_numbers = #tpu.dot_dimension_numbers<[1], [0], [0], [1], [0, 0, 1, 1], [], []>} : vector<16x896xbf16>, vector<896x1024xbf16>, vector<16x1024xf32> -> vector<16x1024xf32>
    %c0_9 = arith.constant 0 : index
    %c0_10 = arith.constant 0 : index
    %11 = vector.load %arg5[%c0_9, %c0_10] : memref<1x1024xf32, #tpu.memory_space<vmem>>, vector<1x1024xf32>
    %12 = vector.broadcast %11 : vector<1x1024xf32> to vector<16x1024xf32>
    %13 = arith.addf %10, %12 : vector<16x1024xf32>
    %cst_11 = arith.constant 0.000000e+00 : f32
    %14 = vector.broadcast %cst_11 : f32 to vector<16x1024xf32>
    %15 = arith.maximumf %13, %14 : vector<16x1024xf32>
    %16 = arith.truncf %15 : vector<16x1024xf32> to vector<16x1024xbf16>
    %c0_12 = arith.constant 0 : index
    %c0_13 = arith.constant 0 : index
    %17 = vector.load %arg6[%c0_12, %c0_13] : memref<1024x512xbf16, #tpu.memory_space<vmem>>, vector<1024x512xbf16>
    %cst_14 = arith.constant dense<0.000000e+00> : vector<16x512xf32>
    %18 = tpu.matmul %16, %17, %cst_14 {dimension_numbers = #tpu.dot_dimension_numbers<[1], [0], [0], [1], [0, 0, 1, 1], [], []>} : vector<16x1024xbf16>, vector<1024x512xbf16>, vector<16x512xf32> -> vector<16x512xf32>
    %c0_15 = arith.constant 0 : index
    %c0_16 = arith.constant 0 : index
    %19 = vector.load %arg7[%c0_15, %c0_16] : memref<1x512xf32, #tpu.memory_space<vmem>>, vector<1x512xf32>
    %20 = vector.broadcast %19 : vector<1x512xf32> to vector<16x512xf32>
    %21 = arith.addf %18, %20 : vector<16x512xf32>
    %cst_17 = arith.constant 0.000000e+00 : f32
    %22 = vector.broadcast %cst_17 : f32 to vector<16x512xf32>
    %23 = arith.maximumf %21, %22 : vector<16x512xf32>
    %24 = arith.truncf %23 : vector<16x512xf32> to vector<16x512xbf16>
    %c0_18 = arith.constant 0 : index
    %c0_19 = arith.constant 0 : index
    %25 = vector.load %arg8[%c0_18, %c0_19] : memref<512x128xbf16, #tpu.memory_space<vmem>>, vector<512x128xbf16>
    %cst_20 = arith.constant dense<0.000000e+00> : vector<16x128xf32>
    %26 = tpu.matmul %24, %25, %cst_20 {dimension_numbers = #tpu.dot_dimension_numbers<[1], [0], [0], [1], [0, 0, 1, 1], [], []>} : vector<16x512xbf16>, vector<512x128xbf16>, vector<16x128xf32> -> vector<16x128xf32>
    %c0_21 = arith.constant 0 : index
    %c0_22 = arith.constant 0 : index
    %27 = vector.load %arg9[%c0_21, %c0_22] : memref<1x128xf32, #tpu.memory_space<vmem>>, vector<1x128xf32>
    %28 = vector.broadcast %27 : vector<1x128xf32> to vector<16x128xf32>
    %29 = arith.addf %26, %28 : vector<16x128xf32>
    %cst_23 = arith.constant 0.000000e+00 : f32
    %30 = vector.broadcast %cst_23 : f32 to vector<16x128xf32>
    %31 = arith.maximumf %29, %30 : vector<16x128xf32>
    %c0_24 = arith.constant 0 : index
    %c0_25 = arith.constant 0 : index
    %32 = vector.load %arg10[%c0_24, %c0_25] : memref<1x128xf32, #tpu.memory_space<vmem>>, vector<1x128xf32>
    %33 = vector.broadcast %32 : vector<1x128xf32> to vector<16x128xf32>
    %34 = arith.mulf %31, %33 : vector<16x128xf32>
    %cst_26 = arith.constant dense<0.000000e+00> : vector<16xf32>
    %35 = vector.multi_reduction <add>, %34, %cst_26 [1] : vector<16x128xf32> to vector<16xf32>
    %36 = vector.shape_cast %35 : vector<16xf32> to vector<16x1xf32>
    %c0_27 = arith.constant 0 : index
    %c0_28 = arith.constant 0 : index
    %37 = memref.load %arg11[%c0_27, %c0_28] : memref<1x1xf32, #tpu.memory_space<smem>>
    %38 = vector.broadcast %37 : f32 to vector<16x1xf32>
    %39 = arith.addf %36, %38 : vector<16x1xf32>
    %cst_29 = arith.constant 0.000000e+00 : f32
    %40 = vector.broadcast %cst_29 : f32 to vector<16x1xf32>
    %41 = arith.subf %40, %39 : vector<16x1xf32>
    %42 = math.exp %41 : vector<16x1xf32>
    %cst_30 = arith.constant 1.000000e+00 : f32
    %43 = vector.broadcast %cst_30 : f32 to vector<16x1xf32>
    %44 = arith.addf %43, %42 : vector<16x1xf32>
    %45 = tpu.reciprocal %44 {approx = true} : vector<16x1xf32> -> vector<16x1xf32>
    %c0_31 = arith.constant 0 : index
    %c0_32 = arith.constant 0 : index
    %46 = vector.load %arg12[%c0_31, %c0_32] : memref<16x1xf32, #tpu.memory_space<vmem>>, vector<16x1xf32>
    tpu.vector_store %arg12[%c0_31, %c0_32], %45 {strides = array<i32>} : memref<16x1xf32, #tpu.memory_space<vmem>>, vector<16x1xf32>,
    return
  }
  func.func @transform_0(%arg0: i32) -> (i32, i32) {
    %c0_i32 = arith.constant 0 : i32
    %c0_i32_0 = arith.constant 0 : i32
    return %arg0, %c0_i32 : i32, i32
  }
  func.func @transform_1(%arg0: i32) -> (i32, i32) {
    %c0_i32 = arith.constant 0 : i32
    %c0_i32_0 = arith.constant 0 : i32
    %c0_i32_1 = arith.constant 0 : i32
    return %c0_i32, %c0_i32_0 : i32, i32
  }
  func.func @transform_2(%arg0: i32) -> (i32, i32) {
    %c0_i32 = arith.constant 0 : i32
    %c0_i32_0 = arith.constant 0 : i32
    %c0_i32_1 = arith.constant 0 : i32
    return %c0_i32, %c0_i32_0 : i32, i32
  }
  func.func @transform_3(%arg0: i32) -> (i32, i32) {
    %c0_i32 = arith.constant 0 : i32
    %c0_i32_0 = arith.constant 0 : i32
    %c0_i32_1 = arith.constant 0 : i32
    return %c0_i32, %c0_i32_0 : i32, i32
  }
  func.func @transform_4(%arg0: i32) -> (i32, i32) {
    %c0_i32 = arith.constant 0 : i32
    %c0_i32_0 = arith.constant 0 : i32
    %c0_i32_1 = arith.constant 0 : i32
    return %c0_i32, %c0_i32_0 : i32, i32
  }
  func.func @transform_5(%arg0: i32) -> (i32, i32) {
    %c0_i32 = arith.constant 0 : i32
    %c0_i32_0 = arith.constant 0 : i32
    %c0_i32_1 = arith.constant 0 : i32
    return %c0_i32, %c0_i32_0 : i32, i32
  }
  func.func @transform_6(%arg0: i32) -> (i32, i32) {
    %c0_i32 = arith.constant 0 : i32
    %c0_i32_0 = arith.constant 0 : i32
    %c0_i32_1 = arith.constant 0 : i32
    return %c0_i32, %c0_i32_0 : i32, i32
  }
  func.func @transform_7(%arg0: i32) -> (i32, i32) {
    %c0_i32 = arith.constant 0 : i32
    %c0_i32_0 = arith.constant 0 : i32
    %c0_i32_1 = arith.constant 0 : i32
    return %c0_i32, %c0_i32_0 : i32, i32
  }
  func.func @transform_8(%arg0: i32) -> (i32, i32) {
    %c0_i32 = arith.constant 0 : i32
    %c0_i32_0 = arith.constant 0 : i32
    %c0_i32_1 = arith.constant 0 : i32
    return %c0_i32, %c0_i32_0 : i32, i32
  }
  func.func @transform_9(%arg0: i32) -> (i32, i32) {
    %c0_i32 = arith.constant 0 : i32
    %c0_i32_0 = arith.constant 0 : i32
    %c0_i32_1 = arith.constant 0 : i32
    return %c0_i32, %c0_i32_0 : i32, i32
  }
  func.func @transform_10(%arg0: i32) -> (i32, i32) {
    %c0_i32 = arith.constant 0 : i32
    %c0_i32_0 = arith.constant 0 : i32
    %c0_i32_1 = arith.constant 0 : i32
    return %c0_i32, %c0_i32_0 : i32, i32
  }
  func.func @transform_11(%arg0: i32) -> (i32, i32) {
    %c0_i32 = arith.constant 0 : i32
    %c0_i32_0 = arith.constant 0 : i32
    return %arg0, %c0_i32 : i32, i32
  }
}

</mosaic_0001>

<llo_original>
// kernel: discriminator_conv_forward.1
$region0: #{discriminator_conv_forward.1}
  #allocation0 [shape = 'u32[]', space=smem, size = 0x4, offset = 0x4, fixed_abs, tag = 'smem constant byte address 0x4 - core index']
  #allocation1 [shape = 'u32[144,128]{1,0:T(1,128)}', space=vmem, size = 0x12000, scoped, tag = 'internal scratch']
  #allocation2 [shape = 'f32[1,1]{1,0:T(1,128)S(6)}', space=smem, size = 0x200, scoped, tag = 'scoped memory for discriminator_conv_forward.1']
  %s0 = inlined_call_operand.vmem [shape: bf16[32,256], index: 0, kind: input, shape index: {}]
  %s1 = inlined_call_operand.hbm [shape: bf16[256,896], index: 1, kind: input, shape index: {}]
  %s2 = inlined_call_operand.hbm [shape: f32[1,896], index: 2, kind: input, shape index: {}]
  %s3 = inlined_call_operand.hbm [shape: bf16[896,1024], index: 3, kind: input, shape index: {}]
  %s4 = inlined_call_operand.hbm [shape: f32[1,1024], index: 4, kind: input, shape index: {}]
  %s5 = inlined_call_operand.hbm [shape: bf16[1024,512], index: 5, kind: input, shape index: {}]
  %s6 = inlined_call_operand.hbm [shape: f32[1,512], index: 6, kind: input, shape index: {}]
  %s7 = inlined_call_operand.hbm [shape: bf16[512,128], index: 7, kind: input, shape index: {}]
  %s8 = inlined_call_operand.hbm [shape: f32[1,128], index: 8, kind: input, shape index: {}]
  %s9 = inlined_call_operand.hbm [shape: f32[1,128], index: 9, kind: input, shape index: {}]
  %s10 = inlined_call_operand.<no memory space> [shape: f32[1,1], index: 10, kind: input, shape index: {}]
  %s11 = inlined_call_operand.vmem [shape: f32[32,1], index: 11, kind: output, shape index: {}]
  %s12 = sld [smem:[#allocation0]]
  $region113: #{discriminator_conv_forward.1} parent=0
    _
  %s14 = ssub.s32 1, %s12
  %s15 = scalar_select 0, %s14, %s12
  %16 = sst [smem:[#allocation2]] %s10
  $region1: #{discriminator_conv_forward.1} parent=0
    #allocation3 [shape = 'u8[458752]{0}', space=vmem, size = 0x70000, scoped, tag = 'input window, operand 1, single buffered']
    #allocation4 [shape = 's32[2]{0}', space=sflag, size = 0x8, scoped, tag = 'scoped memory for discriminator_conv_forward.1']
    #allocation5 [shape = 'u8[3584]{0}', space=vmem, size = 0x1000, scoped, tag = 'input window, operand 2, single buffered']
    #allocation6 [shape = 's32[1]{0}', space=sflag, size = 0x4, scoped, tag = 'scoped memory for discriminator_conv_forward.1']
    #allocation7 [shape = 'u8[1835008]{0}', space=vmem, size = 0x1c0000, scoped, tag = 'input window, operand 3, single buffered']
    #allocation8 [shape = 'u8[4096]{0}', space=vmem, size = 0x1000, scoped, tag = 'input window, operand 4, single buffered']
    #allocation9 [shape = 's32[1]{0}', space=sflag, size = 0x4, scoped, tag = 'scoped memory for discriminator_conv_forward.1']
    #allocation10 [shape = 'u8[1048576]{0}', space=vmem, size = 0x100000, scoped, tag = 'input window, operand 5, single buffered']
    #allocation11 [shape = 'u8[2048]{0}', space=vmem, size = 0x800, scoped, tag = 'input window, operand 6, single buffered']
    #allocation12 [shape = 's32[1]{0}', space=sflag, size = 0x4, scoped, tag = 'scoped memory for discriminator_conv_forward.1']
    #allocation13 [shape = 'u8[131072]{0}', space=vmem, size = 0x20000, scoped, tag = 'input window, operand 7, single buffered']
    #allocation14 [shape = 'u8[512]{0}', space=vmem, size = 0x400, scoped, tag = 'input window, operand 8, single buffered']
    #allocation15 [shape = 's32[1]{0}', space=sflag, size = 0x4, scoped, tag = 'scoped memory for discriminator_conv_forward.1']
    #allocation16 [shape = 'u8[512]{0}', space=vmem, size = 0x400, scoped, tag = 'input window, operand 9, single buffered']
    %17 = vsyncpa [#allocation4], 0
    %18 = vsyncpa [#allocation6], 0
    %19 = vsyncpa [#allocation9], 0
    %20 = vsyncpa [#allocation12], 0
    %21 = vsyncpa [#allocation15], 0
    loop: start=0, step=1, limit=4
    $region2: #{discriminator_conv_forward.1} parent=1 // loop_pre_header
      _
    $region3: #{discriminator_conv_forward.1} parent=1 // loop_header
      %s23 = sphi 0, %s27
      %p24 = scmp.ge.s32.totalorder %s23, 4
      %s33 = sphi 0, %s35
      %s36 = sphi 0, %s33
      %s37 = sphi 0, %s36
      %s53 = sphi 0, %s37
      %s57 = sphi 0, %s57
      %s59 = sphi 0, %s57
      %s60 = sphi 0, %s59
      %s74 = sphi 0, %s60
      %s78 = sphi 0, %s78
      %s80 = sphi 0, %s78
      %s81 = sphi 0, %s80
      %s95 = sphi 0, %s81
      %s99 = sphi 0, %s99
      %s101 = sphi 0, %s99
      %s102 = sphi 0, %s101
      %s116 = sphi 0, %s102
      %s120 = sphi 0, %s120
      %s122 = sphi 0, %s120
      %s123 = sphi 0, %s122
      %s137 = sphi 0, %s123
      %s141 = sphi 0, %s141
      %s143 = sphi 0, %s141
      %s144 = sphi 0, %s143
      %s158 = sphi 0, %s144
      %s162 = sphi 0, %s162
      %s164 = sphi 0, %s162
      %s165 = sphi 0, %s164
      %s179 = sphi 0, %s165
      %s183 = sphi 0, %s183
      %s185 = sphi 0, %s183
      %s186 = sphi 0, %s185
      %s200 = sphi 0, %s186
      %s204 = sphi 0, %s204
      %s206 = sphi 0, %s204
      %s207 = sphi 0, %s206
      %s221 = sphi 0, %s207
      %s225 = sphi 0, %s225
      %s227 = sphi 0, %s225
      %s228 = sphi 0, %s227
      %s242 = sphi 0, %s228
      %s246 = sphi 0, %s246
      %s248 = sphi 0, %s246
      %s249 = sphi 0, %s248
      %s263 = sphi 0, %s249
      %s269 = sphi 0, %s271
      %s272 = sphi 0, %s269
      %s273 = sphi 0, %s272
      %s289 = sphi 0, %s273
    $region4: #{discriminator_conv_forward.1} parent=1 // loop_header_branch
      %26 = sbr.rel (%p24) target = $region8
    $region5: #{discriminator_conv_forward.1} parent=1 // loop_body
      %s28 = ssub.s32 %s23, 1
      %s29 = ssub.s32 %s23, 2
      %s30 = sadd.s32 %s23, 1
      %s31 = ssub.s32 %s23, %s30
      %p32 = scmp.eq.s32.totalorder %s31, 0
      %s34 = sadd.s32 %s33, 1
      %s35 = scalar_select %p32, %s33, %s34
      %p38 = pneg %p32
      %p39 = scmp.eq.s32.totalorder %s23, 1
      %p40 = por %p38, %p39
      %p41 = scmp.ne.s32.totalorder %s33, %s36
      %p42 = scmp.eq.s32.totalorder %s23, 0
      %p43 = por %p41, %p42
      %p44 = scmp.ne.s32.totalorder %s33, %s36
      %p45 = scmp.eq.s32.totalorder %s28, 1
      %p46 = por %p44, %p45
      %p47 = scmp.ne.s32.totalorder %s36, %s37
      %p48 = scmp.eq.s32.totalorder %s28, 0
      %p49 = por %p47, %p48
      %p50 = scmp.ne.s32.totalorder %s36, %s37
      %p51 = scmp.eq.s32.totalorder %s29, 1
      %p52 = por %p50, %p51
      %p54 = scmp.ne.s32.totalorder %s37, %s53
      %p55 = scmp.eq.s32.totalorder %s29, 0
      %p56 = por %p54, %p55
      %s58 = sadd.s32 %s57, 1
      %p61 = scmp.eq.s32.totalorder %s23, 1
      %p62 = scmp.ne.s32.totalorder %s57, %s59
      %p63 = scmp.eq.s32.totalorder %s23, 0
      %p64 = por %p62, %p63
      %p65 = scmp.ne.s32.totalorder %s57, %s59
      %p66 = scmp.eq.s32.totalorder %s28, 1
      %p67 = por %p65, %p66
      %p68 = scmp.ne.s32.totalorder %s59, %s60
      %p69 = scmp.eq.s32.totalorder %s28, 0
      %p70 = por %p68, %p69
      %p71 = scmp.ne.s32.totalorder %s59, %s60
      %p72 = scmp.eq.s32.totalorder %s29, 1
      %p73 = por %p71, %p72
      %p75 = scmp.ne.s32.totalorder %s60, %s74
      %p76 = scmp.eq.s32.totalorder %s29, 0
      %p77 = por %p75, %p76
      %s79 = sadd.s32 %s78, 1
      %p82 = scmp.eq.s32.totalorder %s23, 1
      %p83 = scmp.ne.s32.totalorder %s78, %s80
      %p84 = scmp.eq.s32.totalorder %s23, 0
      %p85 = por %p83, %p84
      %p86 = scmp.ne.s32.totalorder %s78, %s80
      %p87 = scmp.eq.s32.totalorder %s28, 1
      %p88 = por %p86, %p87
      %p89 = scmp.ne.s32.totalorder %s80, %s81
      %p90 = scmp.eq.s32.totalorder %s28, 0
      %p91 = por %p89, %p90
      %p92 = scmp.ne.s32.totalorder %s80, %s81
      %p93 = scmp.eq.s32.totalorder %s29, 1
      %p94 = por %p92, %p93
      %p96 = scmp.ne.s32.totalorder %s81, %s95
      %p97 = scmp.eq.s32.totalorder %s29, 0
      %p98 = por %p96, %p97
      %s100 = sadd.s32 %s99, 1
      %p103 = scmp.eq.s32.totalorder %s23, 1
      %p104 = scmp.ne.s32.totalorder %s99, %s101
      %p105 = scmp.eq.s32.totalorder %s23, 0
      %p106 = por %p104, %p105
      %p107 = scmp.ne.s32.totalorder %s99, %s101
      %p108 = scmp.eq.s32.totalorder %s28, 1
      %p109 = por %p107, %p108
      %p110 = scmp.ne.s32.totalorder %s101, %s102
      %p111 = scmp.eq.s32.totalorder %s28, 0
      %p112 = por %p110, %p111
      %p113 = scmp.ne.s32.totalorder %s101, %s102
      %p114 = scmp.eq.s32.totalorder %s29, 1
      %p115 = por %p113, %p114
      %p117 = scmp.ne.s32.totalorder %s102, %s116
      %p118 = scmp.eq.s32.totalorder %s29, 0
      %p119 = por %p117, %p118
      %s121 = sadd.s32 %s120, 1
      %p124 = scmp.eq.s32.totalorder %s23, 1
      %p125 = scmp.ne.s32.totalorder %s120, %s122
      %p126 = scmp.eq.s32.totalorder %s23, 0
      %p127 = por %p125, %p126
      %p128 = scmp.ne.s32.totalorder %s120, %s122
      %p129 = scmp.eq.s32.totalorder %s28, 1
      %p130 = por %p128, %p129
      %p131 = scmp.ne.s32.totalorder %s122, %s123
      %p132 = scmp.eq.s32.totalorder %s28, 0
      %p133 = por %p131, %p132
      %p134 = scmp.ne.s32.totalorder %s122, %s123
      %p135 = scmp.eq.s32.totalorder %s29, 1
      %p136 = por %p134, %p135
      %p138 = scmp.ne.s32.totalorder %s123, %s137
      %p139 = scmp.eq.s32.totalorder %s29, 0
      %p140 = por %p138, %p139
      %s142 = sadd.s32 %s141, 1
      %p145 = scmp.eq.s32.totalorder %s23, 1
      %p146 = scmp.ne.s32.totalorder %s141, %s143
      %p147 = scmp.eq.s32.totalorder %s23, 0
      %p148 = por %p146, %p147
      %p149 = scmp.ne.s32.totalorder %s141, %s143
      %p150 = scmp.eq.s32.totalorder %s28, 1
      %p151 = por %p149, %p150
      %p152 = scmp.ne.s32.totalorder %s143, %s144
      %p153 = scmp.eq.s32.totalorder %s28, 0
      %p154 = por %p152, %p153
      %p155 = scmp.ne.s32.totalorder %s143, %s144
      %p156 = scmp.eq.s32.totalorder %s29, 1
      %p157 = por %p155, %p156
      %p159 = scmp.ne.s32.totalorder %s144, %s158
      %p160 = scmp.eq.s32.totalorder %s29, 0
      %p161 = por %p159, %p160
      %s163 = sadd.s32 %s162, 1
      %p166 = scmp.eq.s32.totalorder %s23, 1
      %p167 = scmp.ne.s32.totalorder %s162, %s164
      %p168 = scmp.eq.s32.totalorder %s23, 0
      %p169 = por %p167, %p168
      %p170 = scmp.ne.s32.totalorder %s162, %s164
      %p171 = scmp.eq.s32.totalorder %s28, 1
      %p172 = por %p170, %p171
      %p173 = scmp.ne.s32.totalorder %s164, %s165
      %p174 = scmp.eq.s32.totalorder %s28, 0
      %p175 = por %p173, %p174
      %p176 = scmp.ne.s32.totalorder %s164, %s165
      %p177 = scmp.eq.s32.totalorder %s29, 1
      %p178 = por %p176, %p177
      %p180 = scmp.ne.s32.totalorder %s165, %s179
      %p181 = scmp.eq.s32.totalorder %s29, 0
      %p182 = por %p180, %p181
      %s184 = sadd.s32 %s183, 1
      %p187 = scmp.eq.s32.totalorder %s23, 1
      %p188 = scmp.ne.s32.totalorder %s183, %s185
      %p189 = scmp.eq.s32.totalorder %s23, 0
      %p190 = por %p188, %p189
      %p191 = scmp.ne.s32.totalorder %s183, %s185
      %p192 = scmp.eq.s32.totalorder %s28, 1
      %p193 = por %p191, %p192
      %p194 = scmp.ne.s32.totalorder %s185, %s186
      %p195 = scmp.eq.s32.totalorder %s28, 0
      %p196 = por %p194, %p195
      %p197 = scmp.ne.s32.totalorder %s185, %s186
      %p198 = scmp.eq.s32.totalorder %s29, 1
      %p199 = por %p197, %p198
      %p201 = scmp.ne.s32.totalorder %s186, %s200
      %p202 = scmp.eq.s32.totalorder %s29, 0
      %p203 = por %p201, %p202
      %s205 = sadd.s32 %s204, 1
      %p208 = scmp.eq.s32.totalorder %s23, 1
      %p209 = scmp.ne.s32.totalorder %s204, %s206
      %p210 = scmp.eq.s32.totalorder %s23, 0
      %p211 = por %p209, %p210
      %p212 = scmp.ne.s32.totalorder %s204, %s206
      %p213 = scmp.eq.s32.totalorder %s28, 1
      %p214 = por %p212, %p213
      %p215 = scmp.ne.s32.totalorder %s206, %s207
      %p216 = scmp.eq.s32.totalorder %s28, 0
      %p217 = por %p215, %p216
      %p218 = scmp.ne.s32.totalorder %s206, %s207
      %p219 = scmp.eq.s32.totalorder %s29, 1
      %p220 = por %p218, %p219
      %p222 = scmp.ne.s32.totalorder %s207, %s221
      %p223 = scmp.eq.s32.totalorder %s29, 0
      %p224 = por %p222, %p223
      %s226 = sadd.s32 %s225, 1
      %p229 = scmp.eq.s32.totalorder %s23, 1
      %p230 = scmp.ne.s32.totalorder %s225, %s227
      %p231 = scmp.eq.s32.totalorder %s23, 0
      %p232 = por %p230, %p231
      %p233 = scmp.ne.s32.totalorder %s225, %s227
      %p234 = scmp.eq.s32.totalorder %s28, 1
      %p235 = por %p233, %p234
      %p236 = scmp.ne.s32.totalorder %s227, %s228
      %p237 = scmp.eq.s32.totalorder %s28, 0
      %p238 = por %p236, %p237
      %p239 = scmp.ne.s32.totalorder %s227, %s228
      %p240 = scmp.eq.s32.totalorder %s29, 1
      %p241 = por %p239, %p240
      %p243 = scmp.ne.s32.totalorder %s228, %s242
      %p244 = scmp.eq.s32.totalorder %s29, 0
      %p245 = por %p243, %p244
      %s247 = sadd.s32 %s246, 1
      %p250 = scmp.eq.s32.totalorder %s23, 1
      %p251 = scmp.ne.s32.totalorder %s246, %s248
      %p252 = scmp.eq.s32.totalorder %s23, 0
      %p253 = por %p251, %p252
      %p254 = scmp.ne.s32.totalorder %s246, %s248
      %p255 = scmp.eq.s32.totalorder %s28, 1
      %p256 = por %p254, %p255
      %p257 = scmp.ne.s32.totalorder %s248, %s249
      %p258 = scmp.eq.s32.totalorder %s28, 0
      %p259 = por %p257, %p258
      %p260 = scmp.ne.s32.totalorder %s248, %s249
      %p261 = scmp.eq.s32.totalorder %s29, 1
      %p262 = por %p260, %p261
      %p264 = scmp.ne.s32.totalorder %s249, %s263
      %p265 = scmp.eq.s32.totalorder %s29, 0
      %p266 = por %p264, %p265
      %s267 = ssub.s32 %s23, %s30
      %p268 = scmp.eq.s32.totalorder %s267, 0
      %s270 = sadd.s32 %s269, 1
      %s271 = scalar_select %p268, %s269, %s270
      %p274 = pneg %p268
      %p275 = scmp.eq.s32.totalorder %s23, 1
      %p276 = por %p274, %p275
      %p277 = scmp.ne.s32.totalorder %s269, %s272
      %p278 = scmp.eq.s32.totalorder %s23, 0
      %p279 = por %p277, %p278
      %p280 = scmp.ne.s32.totalorder %s269, %s272
      %p281 = scmp.eq.s32.totalorder %s28, 1
      %p282 = por %p280, %p281
      %p283 = scmp.ne.s32.totalorder %s272, %s273
      %p284 = scmp.eq.s32.totalorder %s28, 0
      %p285 = por %p283, %p284
      %p286 = scmp.ne.s32.totalorder %s272, %s273
      %p287 = scmp.eq.s32.totalorder %s29, 1
      %p288 = por %p286, %p287
      %p290 = scmp.ne.s32.totalorder %s273, %s289
      %p291 = scmp.eq.s32.totalorder %s29, 0
      %p292 = por %p290, %p291
      %p293 = scmp.le.s32.totalorder 1, %s23
      %p294 = scmp.lt.s32.totalorder %s23, 3
      %p295 = pnand %p293, %p294
      %p296 = pneg %p295
      // Predicated region
      $region9: #{discriminator_conv_forward.1} parent=5 // pred_check
        _
      $region10: #{discriminator_conv_forward.1} parent=5 // pred_check_branch
        %298 = sbr.rel (%p295) target = $region12
      $region11: #{discriminator_conv_forward.1} parent=5 // pred_region
        %s299 = ssub.s32 %s23, 1
        // Predicated region
        $region13: #{discriminator_conv_forward.1} parent=11 // pred_check
          %p300 = pneg %p70
        $region14: #{discriminator_conv_forward.1} parent=11 // pred_check_branch
          %302 = sbr.rel (%p300) target = $region16
        $region15: #{discriminator_conv_forward.1} parent=11 // pred_region
          %s304 = ssub.s32 14336, 14336
          %305 = vsyncadd [#allocation4], %s304
          %s306 = sshll.u32 [#allocation3], 4
          %s307 = int_to_ptr.vmem [resolvable:$true] %s306
          %312 = dma.hbm_to_vmem [thread:$0]  %s1, 14336, %s307, [#allocation4], 448, 448, 28
        $region16: #{discriminator_conv_forward.1} parent=11 // pred_fallthru
          _
        // Predicated region
        $region17: #{discriminator_conv_forward.1} parent=11 // pred_check
          %p313 = pneg %p91
        $region18: #{discriminator_conv_forward.1} parent=11 // pred_check_branch
          %315 = sbr.rel (%p313) target = $region20
        $region19: #{discriminator_conv_forward.1} parent=11 // pred_region
          %s317 = ssub.s32 112, 112
          %318 = vsyncadd [#allocation6], %s317
          %s320 = sshll.u32 [#allocation5], 4
          %s321 = int_to_ptr.vmem [resolvable:$true] %s320
          %323 = dma.hbm_to_vmem [thread:$0]  %s2, 112, %s321, [#allocation6]
        $region20: #{discriminator_conv_forward.1} parent=11 // pred_fallthru
          _
        // Predicated region
        $region21: #{discriminator_conv_forward.1} parent=11 // pred_check
          %p324 = pneg %p112
        $region22: #{discriminator_conv_forward.1} parent=11 // pred_check_branch
          %326 = sbr.rel (%p324) target = $region24
        $region23: #{discriminator_conv_forward.1} parent=11 // pred_region
          %s328 = ssub.s32 57344, 57344
          %329 = vsyncadd [#allocation6], %s328
          %s330 = sshll.u32 [#allocation7], 4
          %s331 = int_to_ptr.vmem [resolvable:$true] %s330
          %336 = dma.hbm_to_vmem [thread:$0]  %s3, 57344, %s331, [#allocation6], 512, 512, 32
        $region24: #{discriminator_conv_forward.1} parent=11 // pred_fallthru
          _
        // Predicated region
        $region25: #{discriminator_conv_forward.1} parent=11 // pred_check
          %p337 = pneg %p133
        $region26: #{discriminator_conv_forward.1} parent=11 // pred_check_branch
          %339 = sbr.rel (%p337) target = $region28
        $region27: #{discriminator_conv_forward.1} parent=11 // pred_region
          %s341 = ssub.s32 128, 128
          %342 = vsyncadd [#allocation9], %s341
          %s344 = sshll.u32 [#allocation8], 4
          %s345 = int_to_ptr.vmem [resolvable:$true] %s344
          %347 = dma.hbm_to_vmem [thread:$0]  %s4, 128, %s345, [#allocation9]
        $region28: #{discriminator_conv_forward.1} parent=11 // pred_fallthru
          _
        // Predicated region
        $region29: #{discriminator_conv_forward.1} parent=11 // pred_check
          %p348 = pneg %p154
        $region30: #{discriminator_conv_forward.1} parent=11 // pred_check_branch
          %350 = sbr.rel (%p348) target = $region32
        $region31: #{discriminator_conv_forward.1} parent=11 // pred_region
          %s352 = ssub.s32 32768, 32768
          %353 = vsyncadd [#allocation9], %s352
          %s354 = sshll.u32 [#allocation10], 4
          %s355 = int_to_ptr.vmem [resolvable:$true] %s354
          %360 = dma.hbm_to_vmem [thread:$0]  %s5, 32768, %s355, [#allocation9], 256, 256, 16
        $region32: #{discriminator_conv_forward.1} parent=11 // pred_fallthru
          _
        // Predicated region
        $region33: #{discriminator_conv_forward.1} parent=11 // pred_check
          %p361 = pneg %p175
        $region34: #{discriminator_conv_forward.1} parent=11 // pred_check_branch
          %363 = sbr.rel (%p361) target = $region36
        $region35: #{discriminator_conv_forward.1} parent=11 // pred_region
          %s365 = ssub.s32 64, 64
          %366 = vsyncadd [#allocation12], %s365
          %s368 = sshll.u32 [#allocation11], 4
          %s369 = int_to_ptr.vmem [resolvable:$true] %s368
          %371 = dma.hbm_to_vmem [thread:$0]  %s6, 64, %s369, [#allocation12]
        $region36: #{discriminator_conv_forward.1} parent=11 // pred_fallthru
          _
        // Predicated region
        $region37: #{discriminator_conv_forward.1} parent=11 // pred_check
          %p372 = pneg %p196
        $region38: #{discriminator_conv_forward.1} parent=11 // pred_check_branch
          %374 = sbr.rel (%p372) target = $region40
        $region39: #{discriminator_conv_forward.1} parent=11 // pred_region
          %s376 = ssub.s32 4096, 4096
          %377 = vsyncadd [#allocation12], %s376
          %s378 = sshll.u32 [#allocation13], 4
          %s379 = int_to_ptr.vmem [resolvable:$true] %s378
          %384 = dma.hbm_to_vmem [thread:$0]  %s7, 4096, %s379, [#allocation12], 64, 64, 4
        $region40: #{discriminator_conv_forward.1} parent=11 // pred_fallthru
          _
        // Predicated region
        $region41: #{discriminator_conv_forward.1} parent=11 // pred_check
          %p385 = pneg %p217
        $region42: #{discriminator_conv_forward.1} parent=11 // pred_check_branch
          %387 = sbr.rel (%p385) target = $region44
        $region43: #{discriminator_conv_forward.1} parent=11 // pred_region
          %s389 = ssub.s32 16, 16
          %390 = vsyncadd [#allocation15], %s389
          %s392 = sshll.u32 [#allocation14], 4
          %s393 = int_to_ptr.vmem [resolvable:$true] %s392
          %395 = dma.hbm_to_vmem [thread:$0]  %s8, 16, %s393, [#allocation15]
        $region44: #{discriminator_conv_forward.1} parent=11 // pred_fallthru
          _
        // Predicated region
        $region45: #{discriminator_conv_forward.1} parent=11 // pred_check
          %p396 = pneg %p238
        $region46: #{discriminator_conv_forward.1} parent=11 // pred_check_branch
          %398 = sbr.rel (%p396) target = $region48
        $region47: #{discriminator_conv_forward.1} parent=11 // pred_region
          %s400 = ssub.s32 16, 16
          %401 = vsyncadd [#allocation15], %s400
          %s403 = sshll.u32 [#allocation16], 4
          %s404 = int_to_ptr.vmem [resolvable:$true] %s403
          %406 = dma.hbm_to_vmem [thread:$0]  %s9, 16, %s404, [#allocation15]
        $region48: #{discriminator_conv_forward.1} parent=11 // pred_fallthru
          _
        // Predicated region
        $region49: #{discriminator_conv_forward.1} parent=11 // pred_check
          %p407 = pneg %p259
        $region50: #{discriminator_conv_forward.1} parent=11 // pred_check_branch
          %409 = sbr.rel (%p407) target = $region52
        $region51: #{discriminator_conv_forward.1} parent=11 // pred_region
          _
        $region52: #{discriminator_conv_forward.1} parent=11 // pred_fallthru
          _
      $region12: #{discriminator_conv_forward.1} parent=5 // pred_fallthru
        _
      %p410 = scmp.lt.s32.totalorder %s23, 2
      // Predicated region
      $region53: #{discriminator_conv_forward.1} parent=5 // pred_check
        %p411 = pneg %p410
      $region54: #{discriminator_conv_forward.1} parent=5 // pred_check_branch
        %413 = sbr.rel (%p411) target = $region56
      $region55: #{discriminator_conv_forward.1} parent=5 // pred_region
        // Predicated region
        $region57: #{discriminator_conv_forward.1} parent=55 // pred_check
          %p414 = pneg %p43
        $region58: #{discriminator_conv_forward.1} parent=55 // pred_check_branch
          %416 = sbr.rel (%p414) target = $region60
        $region59: #{discriminator_conv_forward.1} parent=55 // pred_region
          %s417 = smul.u32 2, %s23
          %p418 = scmp.lt.s32.totalorder %s417, 3
          %s419 = scalar_select %p418, %s417, 3
          %s420 = smul.addr %s419, 2
          %s421 = smul.addr %s420, 4
          %s422 = scalar_lea.vmem %s0, %s421
          %s423 = smul.u32 2, %s23
        $region60: #{discriminator_conv_forward.1} parent=55 // pred_fallthru
          _
      $region56: #{discriminator_conv_forward.1} parent=5 // pred_fallthru
        _
      %p424 = scmp.le.s32.totalorder 1, %s23
      %p425 = scmp.lt.s32.totalorder %s23, 3
      %p426 = pnand %p424, %p425
      %p427 = pneg %p426
      // Predicated region
      $region61: #{discriminator_conv_forward.1} parent=5 // pred_check
        _
      $region62: #{discriminator_conv_forward.1} parent=5 // pred_check_branch
        %429 = sbr.rel (%p426) target = $region64
      $region63: #{discriminator_conv_forward.1} parent=5 // pred_region
        %s430 = ssub.s32 %s23, 1
        // Predicated region
        $region65: #{discriminator_conv_forward.1} parent=63 // pred_check
          %p431 = pneg %p70
        $region66: #{discriminator_conv_forward.1} parent=63 // pred_check_branch
          %433 = sbr.rel (%p431) target = $region68
        $region67: #{discriminator_conv_forward.1} parent=63 // pred_region
          %434 = dma.done [#allocation4], 14336
        $region68: #{discriminator_conv_forward.1} parent=63 // pred_fallthru
          _
        // Predicated region
        $region69: #{discriminator_conv_forward.1} parent=63 // pred_check
          %p435 = pneg %p91
        $region70: #{discriminator_conv_forward.1} parent=63 // pred_check_branch
          %437 = sbr.rel (%p435) target = $region72
        $region71: #{discriminator_conv_forward.1} parent=63 // pred_region
          %438 = dma.done [#allocation6], 112
        $region72: #{discriminator_conv_forward.1} parent=63 // pred_fallthru
          _
        // Predicated region
        $region73: #{discriminator_conv_forward.1} parent=63 // pred_check
          %p439 = pneg %p112
        $region74: #{discriminator_conv_forward.1} parent=63 // pred_check_branch
          %441 = sbr.rel (%p439) target = $region76
        $region75: #{discriminator_conv_forward.1} parent=63 // pred_region
          %442 = dma.done [#allocation6], 57344
        $region76: #{discriminator_conv_forward.1} parent=63 // pred_fallthru
          _
        // Predicated region
        $region77: #{discriminator_conv_forward.1} parent=63 // pred_check
          %p443 = pneg %p133
        $region78: #{discriminator_conv_forward.1} parent=63 // pred_check_branch
          %445 = sbr.rel (%p443) target = $region80
        $region79: #{discriminator_conv_forward.1} parent=63 // pred_region
          %446 = dma.done [#allocation9], 128
        $region80: #{discriminator_conv_forward.1} parent=63 // pred_fallthru
          _
        // Predicated region
        $region81: #{discriminator_conv_forward.1} parent=63 // pred_check
          %p447 = pneg %p154
        $region82: #{discriminator_conv_forward.1} parent=63 // pred_check_branch
          %449 = sbr.rel (%p447) target = $region84
        $region83: #{discriminator_conv_forward.1} parent=63 // pred_region
          %450 = dma.done [#allocation9], 32768
        $region84: #{discriminator_conv_forward.1} parent=63 // pred_fallthru
          _
        // Predicated region
        $region85: #{discriminator_conv_forward.1} parent=63 // pred_check
          %p451 = pneg %p175
        $region86: #{discriminator_conv_forward.1} parent=63 // pred_check_branch
          %453 = sbr.rel (%p451) target = $region88
        $region87: #{discriminator_conv_forward.1} parent=63 // pred_region
          %454 = dma.done [#allocation12], 64
        $region88: #{discriminator_conv_forward.1} parent=63 // pred_fallthru
          _
        // Predicated region
        $region89: #{discriminator_conv_forward.1} parent=63 // pred_check
          %p455 = pneg %p196
        $region90: #{discriminator_conv_forward.1} parent=63 // pred_check_branch
          %457 = sbr.rel (%p455) target = $region92
        $region91: #{discriminator_conv_forward.1} parent=63 // pred_region
          %458 = dma.done [#allocation12], 4096
        $region92: #{discriminator_conv_forward.1} parent=63 // pred_fallthru
          _
        // Predicated region
        $region93: #{discriminator_conv_forward.1} parent=63 // pred_check
          %p459 = pneg %p217
        $region94: #{discriminator_conv_forward.1} parent=63 // pred_check_branch
          %461 = sbr.rel (%p459) target = $region96
        $region95: #{discriminator_conv_forward.1} parent=63 // pred_region
          %462 = dma.done [#allocation15], 16
        $region96: #{discriminator_conv_forward.1} parent=63 // pred_fallthru
          _
        // Predicated region
        $region97: #{discriminator_conv_forward.1} parent=63 // pred_check
          %p463 = pneg %p238
        $region98: #{discriminator_conv_forward.1} parent=63 // pred_check_branch
          %465 = sbr.rel (%p463) target = $region100
        $region99: #{discriminator_conv_forward.1} parent=63 // pred_region
          %466 = dma.done [#allocation15], 16
        $region100: #{discriminator_conv_forward.1} parent=63 // pred_fallthru
          _
        %s467 = smul.u32 2, %s28
        %p468 = scmp.lt.s32.totalorder %s467, 3
        %s469 = scalar_select %p468, %s467, 3
        %s470 = smul.addr %s469, 2
        %s471 = smul.addr %s470, 4
        %s472 = scalar_lea.vmem %s0, %s471
        %p473 = pneg %p49
        %p474 = pneg %p46
        %p475 = pneg %p70
        %p476 = pneg %p67
        %p477 = pneg %p91
        %p478 = pneg %p88
        %p479 = pneg %p112
        %p480 = pneg %p109
        %p481 = pneg %p133
        %p482 = pneg %p130
        %p483 = pneg %p154
        %p484 = pneg %p151
        %p485 = pneg %p175
        %p486 = pneg %p172
        %p487 = pneg %p196
        %p488 = pneg %p193
        %p489 = pneg %p217
        %p490 = pneg %p214
        %p491 = pneg %p238
        %p492 = pneg %p235
        %p493 = pneg %p259
        %p494 = pneg %p256
        %p495 = pneg %p285
        %p496 = pneg %p282
        %s497 = smul.u32 2, %s28
        %p498 = scmp.lt.s32.totalorder %s497, 3
        %s499 = scalar_select %p498, %s497, 3
        %s500 = smul.addr %s499, 8
        %s501 = scalar_lea.vmem %s11, %s500
        %s502 = smul.u32 2, %s28
        %p503 = scmp.lt.s32.totalorder %s502, 3
        %s504 = scalar_select %p503, %s502, 3
        %s505 = smul.addr %s504, 2
        %s506 = smul.addr %s505, 4
        %s507 = scalar_lea.vmem %s0, %s506
        %s508 = smul.u32 2, %s28
        %s509 = smul.u32 2, %s28
        %p510 = scmp.lt.s32.totalorder %s509, 3
        %s511 = scalar_select %p510, %s509, 3
        %s512 = smul.addr %s511, 8
        %s513 = scalar_lea.vmem %s11, %s512
        %s514 = smul.u32 2, %s28
        %v516 = vld [vmem:[%s507] sm:$0xff]
        %v517 = vld [vmem:[%s507 + $0x8] sm:$0xff]
        %v518 = vld [vmem:[#allocation3] sm:$0xff]
        %v519 = vld [vmem:[#allocation3 + $0x8] sm:$0xff]
        %v520 = vld [vmem:[#allocation3 + $0x10] sm:$0xff]
        %v521 = vld [vmem:[#allocation3 + $0x18] sm:$0xf]
        %v522 = vld [vmem:[#allocation3 + $0x1c] sm:$0xff]
        %v523 = vld [vmem:[#allocation3 + $0x24] sm:$0xff]
        %v524 = vld [vmem:[#allocation3 + $0x2c] sm:$0xff]
        %v525 = vld [vmem:[#allocation3 + $0x34] sm:$0xf]
        %v526 = vld [vmem:[#allocation3 + $0x38] sm:$0xff]
        %v527 = vld [vmem:[#allocation3 + $0x40] sm:$0xff]
        %v528 = vld [vmem:[#allocation3 + $0x48] sm:$0xff]
        %v529 = vld [vmem:[#allocation3 + $0x50] sm:$0xf]
        %v530 = vld [vmem:[#allocation3 + $0x54] sm:$0xff]
        %v531 = vld [vmem:[#allocation3 + $0x5c] sm:$0xff]
        %v532 = vld [vmem:[#allocation3 + $0x64] sm:$0xff]
        %v533 = vld [vmem:[#allocation3 + $0x6c] sm:$0xf]
        %v534 = vld [vmem:[#allocation3 + $0x70] sm:$0xff]
        %v535 = vld [vmem:[#allocation3 + $0x78] sm:$0xff]
        %v536 = vld [vmem:[#allocation3 + $0x80] sm:$0xff]
        %v537 = vld [vmem:[#allocation3 + $0x88] sm:$0xf]
        %v538 = vld [vmem:[#allocation3 + $0x8c] sm:$0xff]
        %v539 = vld [vmem:[#allocation3 + $0x94] sm:$0xff]
        %v540 = vld [vmem:[#allocation3 + $0x9c] sm:$0xff]
        %v541 = vld [vmem:[#allocation3 + $0xa4] sm:$0xf]
        %v542 = vld [vmem:[#allocation3 + $0xa8] sm:$0xff]
        %v543 = vld [vmem:[#allocation3 + $0xb0] sm:$0xff]
        %v544 = vld [vmem:[#allocation3 + $0xb8] sm:$0xff]
        %v545 = vld [vmem:[#allocation3 + $0xc0] sm:$0xf]
        %v546 = vld [vmem:[#allocation3 + $0xc4] sm:$0xff]
        %v547 = vld [vmem:[#allocation3 + $0xcc] sm:$0xff]
        %v548 = vld [vmem:[#allocation3 + $0xd4] sm:$0xff]
        %v549 = vld [vmem:[#allocation3 + $0xdc] sm:$0xf]
        %v550 = vld [vmem:[#allocation3 + $0xe0] sm:$0xff]
        %v551 = vld [vmem:[#allocation3 + $0xe8] sm:$0xff]
        %v552 = vld [vmem:[#allocation3 + $0xf0] sm:$0xff]
        %v553 = vld [vmem:[#allocation3 + $0xf8] sm:$0xf]
        %v554 = vld [vmem:[#allocation3 + $0xfc] sm:$0xff]
        %v555 = vld [vmem:[#allocation3 + $0x104] sm:$0xff]
        %v556 = vld [vmem:[#allocation3 + $0x10c] sm:$0xff]
        %v557 = vld [vmem:[#allocation3 + $0x114] sm:$0xf]
        %v558 = vld [vmem:[#allocation3 + $0x118] sm:$0xff]
        %v559 = vld [vmem:[#allocation3 + $0x120] sm:$0xff]
        %v560 = vld [vmem:[#allocation3 + $0x128] sm:$0xff]
        %v561 = vld [vmem:[#allocation3 + $0x130] sm:$0xf]
        %v562 = vld [vmem:[#allocation3 + $0x134] sm:$0xff]
        %v563 = vld [vmem:[#allocation3 + $0x13c] sm:$0xff]
        %v564 = vld [vmem:[#allocation3 + $0x144] sm:$0xff]
        %v565 = vld [vmem:[#allocation3 + $0x14c] sm:$0xf]
        %v566 = vld [vmem:[#allocation3 + $0x150] sm:$0xff]
        %v567 = vld [vmem:[#allocation3 + $0x158] sm:$0xff]
        %v568 = vld [vmem:[#allocation3 + $0x160] sm:$0xff]
        %v569 = vld [vmem:[#allocation3 + $0x168] sm:$0xf]
        %v570 = vld [vmem:[#allocation3 + $0x16c] sm:$0xff]
        %v571 = vld [vmem:[#allocation3 + $0x174] sm:$0xff]
        %v572 = vld [vmem:[#allocation3 + $0x17c] sm:$0xff]
        %v573 = vld [vmem:[#allocation3 + $0x184] sm:$0xf]
        %v574 = vld [vmem:[#allocation3 + $0x188] sm:$0xff]
        %v575 = vld [vmem:[#allocation3 + $0x190] sm:$0xff]
        %v576 = vld [vmem:[#allocation3 + $0x198] sm:$0xff]
        %v577 = vld [vmem:[#allocation3 + $0x1a0] sm:$0xf]
        %v578 = vld [vmem:[#allocation3 + $0x1a4] sm:$0xff]
        %v579 = vld [vmem:[#allocation3 + $0x1ac] sm:$0xff]
        %v580 = vld [vmem:[#allocation3 + $0x1b4] sm:$0xff]
        %v581 = vld [vmem:[#allocation3 + $0x1bc] sm:$0xf]
        %v582 = vld [vmem:[#allocation3 + $0x1c0] sm:$0xff]
        %v583 = vld [vmem:[#allocation3 + $0x1c8] sm:$0xff]
        %v584 = vld [vmem:[#allocation3 + $0x1d0] sm:$0xff]
        %v585 = vld [vmem:[#allocation3 + $0x1d8] sm:$0xf]
        %v586 = vld [vmem:[#allocation3 + $0x1dc] sm:$0xff]
        %v587 = vld [vmem:[#allocation3 + $0x1e4] sm:$0xff]
        %v588 = vld [vmem:[#allocation3 + $0x1ec] sm:$0xff]
        %v589 = vld [vmem:[#allocation3 + $0x1f4] sm:$0xf]
        %v590 = vld [vmem:[#allocation3 + $0x1f8] sm:$0xff]
        %v591 = vld [vmem:[#allocation3 + $0x200] sm:$0xff]
        %v592 = vld [vmem:[#allocation3 + $0x208] sm:$0xff]
        %v593 = vld [vmem:[#allocation3 + $0x210] sm:$0xf]
        %v594 = vld [vmem:[#allocation3 + $0x214] sm:$0xff]
        %v595 = vld [vmem:[#allocation3 + $0x21c] sm:$0xff]
        %v596 = vld [vmem:[#allocation3 + $0x224] sm:$0xff]
        %v597 = vld [vmem:[#allocation3 + $0x22c] sm:$0xf]
        %v598 = vld [vmem:[#allocation3 + $0x230] sm:$0xff]
        %v599 = vld [vmem:[#allocation3 + $0x238] sm:$0xff]
        %v600 = vld [vmem:[#allocation3 + $0x240] sm:$0xff]
        %v601 = vld [vmem:[#allocation3 + $0x248] sm:$0xf]
        %v602 = vld [vmem:[#allocation3 + $0x24c] sm:$0xff]
        %v603 = vld [vmem:[#allocation3 + $0x254] sm:$0xff]
        %v604 = vld [vmem:[#allocation3 + $0x25c] sm:$0xff]
        %v605 = vld [vmem:[#allocation3 + $0x264] sm:$0xf]
        %v606 = vld [vmem:[#allocation3 + $0x268] sm:$0xff]
        %v607 = vld [vmem:[#allocation3 + $0x270] sm:$0xff]
        %v608 = vld [vmem:[#allocation3 + $0x278] sm:$0xff]
        %v609 = vld [vmem:[#allocation3 + $0x280] sm:$0xf]
        %v610 = vld [vmem:[#allocation3 + $0x284] sm:$0xff]
        %v611 = vld [vmem:[#allocation3 + $0x28c] sm:$0xff]
        %v612 = vld [vmem:[#allocation3 + $0x294] sm:$0xff]
        %v613 = vld [vmem:[#allocation3 + $0x29c] sm:$0xf]
        %v614 = vld [vmem:[#allocation3 + $0x2a0] sm:$0xff]
        %v615 = vld [vmem:[#allocation3 + $0x2a8] sm:$0xff]
        %v616 = vld [vmem:[#allocation3 + $0x2b0] sm:$0xff]
        %v617 = vld [vmem:[#allocation3 + $0x2b8] sm:$0xf]
        %v618 = vld [vmem:[#allocation3 + $0x2bc] sm:$0xff]
        %v619 = vld [vmem:[#allocation3 + $0x2c4] sm:$0xff]
        %v620 = vld [vmem:[#allocation3 + $0x2cc] sm:$0xff]
        %v621 = vld [vmem:[#allocation3 + $0x2d4] sm:$0xf]
        %v622 = vld [vmem:[#allocation3 + $0x2d8] sm:$0xff]
        %v623 = vld [vmem:[#allocation3 + $0x2e0] sm:$0xff]
        %v624 = vld [vmem:[#allocation3 + $0x2e8] sm:$0xff]
        %v625 = vld [vmem:[#allocation3 + $0x2f0] sm:$0xf]
        %v626 = vld [vmem:[#allocation3 + $0x2f4] sm:$0xff]
        %v627 = vld [vmem:[#allocation3 + $0x2fc] sm:$0xff]
        %v628 = vld [vmem:[#allocation3 + $0x304] sm:$0xff]
        %v629 = vld [vmem:[#allocation3 + $0x30c] sm:$0xf]
        %v630 = vld [vmem:[#allocation3 + $0x310] sm:$0xff]
        %v631 = vld [vmem:[#allocation3 + $0x318] sm:$0xff]
        %v632 = vld [vmem:[#allocation3 + $0x320] sm:$0xff]
        %v633 = vld [vmem:[#allocation3 + $0x328] sm:$0xf]
        %v634 = vld [vmem:[#allocation3 + $0x32c] sm:$0xff]
        %v635 = vld [vmem:[#allocation3 + $0x334] sm:$0xff]
        %v636 = vld [vmem:[#allocation3 + $0x33c] sm:$0xff]
        %v637 = vld [vmem:[#allocation3 + $0x344] sm:$0xf]
        %v638 = vld [vmem:[#allocation3 + $0x348] sm:$0xff]
        %v639 = vld [vmem:[#allocation3 + $0x350] sm:$0xff]
        %v640 = vld [vmem:[#allocation3 + $0x358] sm:$0xff]
        %v641 = vld [vmem:[#allocation3 + $0x360] sm:$0xf]
        %v642 = vld [vmem:[#allocation3 + $0x364] sm:$0xff]
        %v643 = vld [vmem:[#allocation3 + $0x36c] sm:$0xff]
        %v644 = vld [vmem:[#allocation3 + $0x374] sm:$0xff]
        %v645 = vld [vmem:[#allocation3 + $0x37c] sm:$0xf]
        %v646 = vld [vmem:[#allocation5] sm:$0xff]
        %v648 = vlaneseq
        %v649 = vshrl.u32 %v648, 7
        %v650 = vsub.s32 0, %v649
        %v651 = vrot.slane %v646, %v650
        %v652 = vlaneseq
        %v653 = vshrl.u32 %v652, 7
        %v654 = vsub.s32 1, %v653
        %v655 = vrot.slane %v646, %v654
        %v656 = vlaneseq
        %v657 = vshrl.u32 %v656, 7
        %v658 = vsub.s32 2, %v657
        %v659 = vrot.slane %v646, %v658
        %v660 = vlaneseq
        %v661 = vshrl.u32 %v660, 7
        %v662 = vsub.s32 3, %v661
        %v663 = vrot.slane %v646, %v662
        %v664 = vlaneseq
        %v665 = vshrl.u32 %v664, 7
        %v666 = vsub.s32 4, %v665
        %v667 = vrot.slane %v646, %v666
        %v668 = vlaneseq
        %v669 = vshrl.u32 %v668, 7
        %v670 = vsub.s32 5, %v669
        %v671 = vrot.slane %v646, %v670
        %v672 = vlaneseq
        %v673 = vshrl.u32 %v672, 7
        %v674 = vsub.s32 6, %v673
        %v675 = vrot.slane %v646, %v674
        %v685 = vunpack.c.l.b16 %v516
        %v686 = vunpack.c.h.b16 %v516
        %v687 = vunpack.c.l.b16 %v517
        %v688 = vunpack.c.h.b16 %v517
        %v689 = vpack.c.b16 %v687, %v685
        %v690 = vpack.c.b16 %v688, %v686
        %v821 = vunpack.c.l.b16 %v518
        %v822 = vunpack.c.h.b16 %v518
        %v823 = vunpack.c.l.b16 %v519
        %v824 = vunpack.c.h.b16 %v519
        %v825 = vunpack.c.l.b16 %v520
        %v826 = vunpack.c.h.b16 %v520
        %v827 = vunpack.c.l.b16 %v521
        %v828 = vunpack.c.l.b16 %v522
        %v829 = vunpack.c.h.b16 %v522
        %v830 = vunpack.c.l.b16 %v523
        %v831 = vunpack.c.h.b16 %v523
        %v832 = vunpack.c.l.b16 %v524
        %v833 = vunpack.c.h.b16 %v524
        %v834 = vunpack.c.l.b16 %v525
        %v835 = vunpack.c.l.b16 %v526
        %v836 = vunpack.c.h.b16 %v526
        %v837 = vunpack.c.l.b16 %v527
        %v838 = vunpack.c.h.b16 %v527
        %v839 = vunpack.c.l.b16 %v528
        %v840 = vunpack.c.h.b16 %v528
        %v841 = vunpack.c.l.b16 %v529
        %v842 = vunpack.c.l.b16 %v530
        %v843 = vunpack.c.h.b16 %v530
        %v844 = vunpack.c.l.b16 %v531
        %v845 = vunpack.c.h.b16 %v531
        %v846 = vunpack.c.l.b16 %v532
        %v847 = vunpack.c.h.b16 %v532
        %v848 = vunpack.c.l.b16 %v533
        %v849 = vunpack.c.l.b16 %v534
        %v850 = vunpack.c.h.b16 %v534
        %v851 = vunpack.c.l.b16 %v535
        %v852 = vunpack.c.h.b16 %v535
        %v853 = vunpack.c.l.b16 %v536
        %v854 = vunpack.c.h.b16 %v536
        %v855 = vunpack.c.l.b16 %v537
        %v856 = vunpack.c.l.b16 %v538
        %v857 = vunpack.c.h.b16 %v538
        %v858 = vunpack.c.l.b16 %v539
        %v859 = vunpack.c.h.b16 %v539
        %v860 = vunpack.c.l.b16 %v540
        %v861 = vunpack.c.h.b16 %v540
        %v862 = vunpack.c.l.b16 %v541
        %v863 = vunpack.c.l.b16 %v542
        %v864 = vunpack.c.h.b16 %v542
        %v865 = vunpack.c.l.b16 %v543
        %v866 = vunpack.c.h.b16 %v543
        %v867 = vunpack.c.l.b16 %v544
        %v868 = vunpack.c.h.b16 %v544
        %v869 = vunpack.c.l.b16 %v545
        %v870 = vunpack.c.l.b16 %v546
        %v871 = vunpack.c.h.b16 %v546
        %v872 = vunpack.c.l.b16 %v547
        %v873 = vunpack.c.h.b16 %v547
        %v874 = vunpack.c.l.b16 %v548
        %v875 = vunpack.c.h.b16 %v548
        %v876 = vunpack.c.l.b16 %v549
        %v877 = vunpack.c.l.b16 %v550
        %v878 = vunpack.c.h.b16 %v550
        %v879 = vunpack.c.l.b16 %v551
        %v880 = vunpack.c.h.b16 %v551
        %v881 = vunpack.c.l.b16 %v552
        %v882 = vunpack.c.h.b16 %v552
        %v883 = vunpack.c.l.b16 %v553
        %v884 = vunpack.c.l.b16 %v554
        %v885 = vunpack.c.h.b16 %v554
        %v886 = vunpack.c.l.b16 %v555
        %v887 = vunpack.c.h.b16 %v555
        %v888 = vunpack.c.l.b16 %v556
        %v889 = vunpack.c.h.b16 %v556
        %v890 = vunpack.c.l.b16 %v557
        %v891 = vunpack.c.l.b16 %v558
        %v892 = vunpack.c.h.b16 %v558
        %v893 = vunpack.c.l.b16 %v559
        %v894 = vunpack.c.h.b16 %v559
        %v895 = vunpack.c.l.b16 %v560
        %v896 = vunpack.c.h.b16 %v560
        %v897 = vunpack.c.l.b16 %v561
        %v898 = vunpack.c.l.b16 %v562
        %v899 = vunpack.c.h.b16 %v562
        %v900 = vunpack.c.l.b16 %v563
        %v901 = vunpack.c.h.b16 %v563
        %v902 = vunpack.c.l.b16 %v564
        %v903 = vunpack.c.h.b16 %v564
        %v904 = vunpack.c.l.b16 %v565
        %v905 = vunpack.c.l.b16 %v566
        %v906 = vunpack.c.h.b16 %v566
        %v907 = vunpack.c.l.b16 %v567
        %v908 = vunpack.c.h.b16 %v567
        %v909 = vunpack.c.l.b16 %v568
        %v910 = vunpack.c.h.b16 %v568
        %v911 = vunpack.c.l.b16 %v569
        %v912 = vunpack.c.l.b16 %v570
        %v913 = vunpack.c.h.b16 %v570
        %v914 = vunpack.c.l.b16 %v571
        %v915 = vunpack.c.h.b16 %v571
        %v916 = vunpack.c.l.b16 %v572
        %v917 = vunpack.c.h.b16 %v572
        %v918 = vunpack.c.l.b16 %v573
        %v919 = vunpack.c.l.b16 %v574
        %v920 = vunpack.c.h.b16 %v574
        %v921 = vunpack.c.l.b16 %v575
        %v922 = vunpack.c.h.b16 %v575
        %v923 = vunpack.c.l.b16 %v576
        %v924 = vunpack.c.h.b16 %v576
        %v925 = vunpack.c.l.b16 %v577
        %v926 = vunpack.c.l.b16 %v578
        %v927 = vunpack.c.h.b16 %v578
        %v928 = vunpack.c.l.b16 %v579
        %v929 = vunpack.c.h.b16 %v579
        %v930 = vunpack.c.l.b16 %v580
        %v931 = vunpack.c.h.b16 %v580
        %v932 = vunpack.c.l.b16 %v581
        %v933 = vunpack.c.l.b16 %v582
        %v934 = vunpack.c.h.b16 %v582
        %v935 = vunpack.c.l.b16 %v583
        %v936 = vunpack.c.h.b16 %v583
        %v937 = vunpack.c.l.b16 %v584
        %v938 = vunpack.c.h.b16 %v584
        %v939 = vunpack.c.l.b16 %v585
        %v940 = vunpack.c.l.b16 %v586
        %v941 = vunpack.c.h.b16 %v586
        %v942 = vunpack.c.l.b16 %v587
        %v943 = vunpack.c.h.b16 %v587
        %v944 = vunpack.c.l.b16 %v588
        %v945 = vunpack.c.h.b16 %v588
        %v946 = vunpack.c.l.b16 %v589
        %v947 = vunpack.c.l.b16 %v590
        %v948 = vunpack.c.h.b16 %v590
        %v949 = vunpack.c.l.b16 %v591
        %v950 = vunpack.c.h.b16 %v591
        %v951 = vunpack.c.l.b16 %v592
        %v952 = vunpack.c.h.b16 %v592
        %v953 = vunpack.c.l.b16 %v593
        %v954 = vunpack.c.l.b16 %v594
        %v955 = vunpack.c.h.b16 %v594
        %v956 = vunpack.c.l.b16 %v595
        %v957 = vunpack.c.h.b16 %v595
        %v958 = vunpack.c.l.b16 %v596
        %v959 = vunpack.c.h.b16 %v596
        %v960 = vunpack.c.l.b16 %v597
        %v961 = vunpack.c.l.b16 %v598
        %v962 = vunpack.c.h.b16 %v598
        %v963 = vunpack.c.l.b16 %v599
        %v964 = vunpack.c.h.b16 %v599
        %v965 = vunpack.c.l.b16 %v600
        %v966 = vunpack.c.h.b16 %v600
        %v967 = vunpack.c.l.b16 %v601
        %v968 = vunpack.c.l.b16 %v602
        %v969 = vunpack.c.h.b16 %v602
        %v970 = vunpack.c.l.b16 %v603
        %v971 = vunpack.c.h.b16 %v603
        %v972 = vunpack.c.l.b16 %v604
        %v973 = vunpack.c.h.b16 %v604
        %v974 = vunpack.c.l.b16 %v605
        %v975 = vunpack.c.l.b16 %v606
        %v976 = vunpack.c.h.b16 %v606
        %v977 = vunpack.c.l.b16 %v607
        %v978 = vunpack.c.h.b16 %v607
        %v979 = vunpack.c.l.b16 %v608
        %v980 = vunpack.c.h.b16 %v608
        %v981 = vunpack.c.l.b16 %v609
        %v982 = vunpack.c.l.b16 %v610
        %v983 = vunpack.c.h.b16 %v610
        %v984 = vunpack.c.l.b16 %v611
        %v985 = vunpack.c.h.b16 %v611
        %v986 = vunpack.c.l.b16 %v612
        %v987 = vunpack.c.h.b16 %v612
        %v988 = vunpack.c.l.b16 %v613
        %v989 = vunpack.c.l.b16 %v614
        %v990 = vunpack.c.h.b16 %v614
        %v991 = vunpack.c.l.b16 %v615
        %v992 = vunpack.c.h.b16 %v615
        %v993 = vunpack.c.l.b16 %v616
        %v994 = vunpack.c.h.b16 %v616
        %v995 = vunpack.c.l.b16 %v617
        %v996 = vunpack.c.l.b16 %v618
        %v997 = vunpack.c.h.b16 %v618
        %v998 = vunpack.c.l.b16 %v619
        %v999 = vunpack.c.h.b16 %v619
        %v1000 = vunpack.c.l.b16 %v620
        %v1001 = vunpack.c.h.b16 %v620
        %v1002 = vunpack.c.l.b16 %v621
        %v1003 = vunpack.c.l.b16 %v622
        %v1004 = vunpack.c.h.b16 %v622
        %v1005 = vunpack.c.l.b16 %v623
        %v1006 = vunpack.c.h.b16 %v623
        %v1007 = vunpack.c.l.b16 %v624
        %v1008 = vunpack.c.h.b16 %v624
        %v1009 = vunpack.c.l.b16 %v625
        %v1010 = vunpack.c.l.b16 %v626
        %v1011 = vunpack.c.h.b16 %v626
        %v1012 = vunpack.c.l.b16 %v627
        %v1013 = vunpack.c.h.b16 %v627
        %v1014 = vunpack.c.l.b16 %v628
        %v1015 = vunpack.c.h.b16 %v628
        %v1016 = vunpack.c.l.b16 %v629
        %v1017 = vunpack.c.l.b16 %v630
        %v1018 = vunpack.c.h.b16 %v630
        %v1019 = vunpack.c.l.b16 %v631
        %v1020 = vunpack.c.h.b16 %v631
        %v1021 = vunpack.c.l.b16 %v632
        %v1022 = vunpack.c.h.b16 %v632
        %v1023 = vunpack.c.l.b16 %v633
        %v1024 = vunpack.c.l.b16 %v634
        %v1025 = vunpack.c.h.b16 %v634
        %v1026 = vunpack.c.l.b16 %v635
        %v1027 = vunpack.c.h.b16 %v635
        %v1028 = vunpack.c.l.b16 %v636
        %v1029 = vunpack.c.h.b16 %v636
        %v1030 = vunpack.c.l.b16 %v637
        %v1031 = vunpack.c.l.b16 %v638
        %v1032 = vunpack.c.h.b16 %v638
        %v1033 = vunpack.c.l.b16 %v639
        %v1034 = vunpack.c.h.b16 %v639
        %v1035 = vunpack.c.l.b16 %v640
        %v1036 = vunpack.c.h.b16 %v640
        %v1037 = vunpack.c.l.b16 %v641
        %v1038 = vunpack.c.l.b16 %v642
        %v1039 = vunpack.c.h.b16 %v642
        %v1040 = vunpack.c.l.b16 %v643
        %v1041 = vunpack.c.h.b16 %v643
        %v1042 = vunpack.c.l.b16 %v644
        %v1043 = vunpack.c.h.b16 %v644
        %v1044 = vunpack.c.l.b16 %v645
        %v1045 = vpack.c.b16 %v828, %v821
        %v1046 = vpack.c.b16 %v829, %v822
        %v1047 = vpack.c.b16 %v830, %v823
        %v1048 = vpack.c.b16 %v831, %v824
        %v1049 = vpack.c.b16 %v832, %v825
        %v1050 = vpack.c.b16 %v833, %v826
        %v1051 = vpack.c.b16 %v834, %v827
        %v1052 = vpack.c.b16 %v842, %v835
        %v1053 = vpack.c.b16 %v843, %v836
        %v1054 = vpack.c.b16 %v844, %v837
        %v1055 = vpack.c.b16 %v845, %v838
        %v1056 = vpack.c.b16 %v846, %v839
        %v1057 = vpack.c.b16 %v847, %v840
        %v1058 = vpack.c.b16 %v848, %v841
        %v1059 = vpack.c.b16 %v856, %v849
        %v1060 = vpack.c.b16 %v857, %v850
        %v1061 = vpack.c.b16 %v858, %v851
        %v1062 = vpack.c.b16 %v859, %v852
        %v1063 = vpack.c.b16 %v860, %v853
        %v1064 = vpack.c.b16 %v861, %v854
        %v1065 = vpack.c.b16 %v862, %v855
        %v1066 = vpack.c.b16 %v870, %v863
        %v1067 = vpack.c.b16 %v871, %v864
        %v1068 = vpack.c.b16 %v872, %v865
        %v1069 = vpack.c.b16 %v873, %v866
        %v1070 = vpack.c.b16 %v874, %v867
        %v1071 = vpack.c.b16 %v875, %v868
        %v1072 = vpack.c.b16 %v876, %v869
        %v1073 = vpack.c.b16 %v884, %v877
        %v1074 = vpack.c.b16 %v885, %v878
        %v1075 = vpack.c.b16 %v886, %v879
        %v1076 = vpack.c.b16 %v887, %v880
        %v1077 = vpack.c.b16 %v888, %v881
        %v1078 = vpack.c.b16 %v889, %v882
        %v1079 = vpack.c.b16 %v890, %v883
        %v1080 = vpack.c.b16 %v898, %v891
        %v1081 = vpack.c.b16 %v899, %v892
        %v1082 = vpack.c.b16 %v900, %v893
        %v1083 = vpack.c.b16 %v901, %v894
        %v1084 = vpack.c.b16 %v902, %v895
        %v1085 = vpack.c.b16 %v903, %v896
        %v1086 = vpack.c.b16 %v904, %v897
        %v1087 = vpack.c.b16 %v912, %v905
        %v1088 = vpack.c.b16 %v913, %v906
        %v1089 = vpack.c.b16 %v914, %v907
        %v1090 = vpack.c.b16 %v915, %v908
        %v1091 = vpack.c.b16 %v916, %v909
        %v1092 = vpack.c.b16 %v917, %v910
        %v1093 = vpack.c.b16 %v918, %v911
        %v1094 = vpack.c.b16 %v926, %v919
        %v1095 = vpack.c.b16 %v927, %v920
        %v1096 = vpack.c.b16 %v928, %v921
        %v1097 = vpack.c.b16 %v929, %v922
        %v1098 = vpack.c.b16 %v930, %v923
        %v1099 = vpack.c.b16 %v931, %v924
        %v1100 = vpack.c.b16 %v932, %v925
        %v1101 = vpack.c.b16 %v940, %v933
        %v1102 = vpack.c.b16 %v941, %v934
        %v1103 = vpack.c.b16 %v942, %v935
        %v1104 = vpack.c.b16 %v943, %v936
        %v1105 = vpack.c.b16 %v944, %v937
        %v1106 = vpack.c.b16 %v945, %v938
        %v1107 = vpack.c.b16 %v946, %v939
        %v1108 = vpack.c.b16 %v954, %v947
        %v1109 = vpack.c.b16 %v955, %v948
        %v1110 = vpack.c.b16 %v956, %v949
        %v1111 = vpack.c.b16 %v957, %v950
        %v1112 = vpack.c.b16 %v958, %v951
        %v1113 = vpack.c.b16 %v959, %v952
        %v1114 = vpack.c.b16 %v960, %v953
        %v1115 = vpack.c.b16 %v968, %v961
        %v1116 = vpack.c.b16 %v969, %v962
        %v1117 = vpack.c.b16 %v970, %v963
        %v1118 = vpack.c.b16 %v971, %v964
        %v1119 = vpack.c.b16 %v972, %v965
        %v1120 = vpack.c.b16 %v973, %v966
        %v1121 = vpack.c.b16 %v974, %v967
        %v1122 = vpack.c.b16 %v982, %v975
        %v1123 = vpack.c.b16 %v983, %v976
        %v1124 = vpack.c.b16 %v984, %v977
        %v1125 = vpack.c.b16 %v985, %v978
        %v1126 = vpack.c.b16 %v986, %v979
        %v1127 = vpack.c.b16 %v987, %v980
        %v1128 = vpack.c.b16 %v988, %v981
        %v1129 = vpack.c.b16 %v996, %v989
        %v1130 = vpack.c.b16 %v997, %v990
        %v1131 = vpack.c.b16 %v998, %v991
        %v1132 = vpack.c.b16 %v999, %v992
        %v1133 = vpack.c.b16 %v1000, %v993
        %v1134 = vpack.c.b16 %v1001, %v994
        %v1135 = vpack.c.b16 %v1002, %v995
        %v1136 = vpack.c.b16 %v1010, %v1003
        %v1137 = vpack.c.b16 %v1011, %v1004
        %v1138 = vpack.c.b16 %v1012, %v1005
        %v1139 = vpack.c.b16 %v1013, %v1006
        %v1140 = vpack.c.b16 %v1014, %v1007
        %v1141 = vpack.c.b16 %v1015, %v1008
        %v1142 = vpack.c.b16 %v1016, %v1009
        %v1143 = vpack.c.b16 %v1024, %v1017
        %v1144 = vpack.c.b16 %v1025, %v1018
        %v1145 = vpack.c.b16 %v1026, %v1019
        %v1146 = vpack.c.b16 %v1027, %v1020
        %v1147 = vpack.c.b16 %v1028, %v1021
        %v1148 = vpack.c.b16 %v1029, %v1022
        %v1149 = vpack.c.b16 %v1030, %v1023
        %v1150 = vpack.c.b16 %v1038, %v1031
        %v1151 = vpack.c.b16 %v1039, %v1032
        %v1152 = vpack.c.b16 %v1040, %v1033
        %v1153 = vpack.c.b16 %v1041, %v1034
        %v1154 = vpack.c.b16 %v1042, %v1035
        %v1155 = vpack.c.b16 %v1043, %v1036
        %v1156 = vpack.c.b16 %v1044, %v1037
        %1269 = vmatprep.subr.bf16.mxu0 %v1095
        %1270 = vmatpush1.bf16.msra.mxu0 %v1094
        %1271 = vmatprep.subr.bf16.mxu0 %v1088
        %1272 = vmatpush1.bf16.msra.mxu0 %v1087
        %1273 = vmatprep.subr.bf16.mxu0 %v1081
        %1274 = vmatpush1.bf16.msra.mxu0 %v1080
        %1275 = vmatprep.subr.bf16.mxu0 %v1074
        %1276 = vmatpush1.bf16.msra.mxu0 %v1073
        %1277 = vmatprep.subr.bf16.mxu0 %v1067
        %1278 = vmatpush1.bf16.msra.mxu0 %v1066
        %1279 = vmatprep.subr.bf16.mxu0 %v1060
        %1280 = vmatpush1.bf16.msra.mxu0 %v1059
        %1281 = vmatprep.subr.bf16.mxu0 %v1053
        %1282 = vmatpush1.bf16.msra.mxu0 %v1052
        %1283 = vmatprep.subr.bf16.mxu0 %v1046
        %1284 = vmatpush1.bf16.msra.mxu0 %v1045
        %1285 = vmatprep.subr.bf16.mxu0 %v1151
        %1286 = vmatpush2.bf16.msra.mxu0 %v1150
        %1287 = vmatprep.subr.bf16.mxu0 %v1144
        %1288 = vmatpush2.bf16.msra.mxu0 %v1143
        %1289 = vmatprep.subr.bf16.mxu0 %v1137
        %1290 = vmatpush2.bf16.msra.mxu0 %v1136
        %1291 = vmatprep.subr.bf16.mxu0 %v1130
        %1292 = vmatpush2.bf16.msra.mxu0 %v1129
        %1293 = vmatprep.subr.bf16.mxu0 %v1123
        %1294 = vmatpush2.bf16.msra.mxu0 %v1122
        %1295 = vmatprep.subr.bf16.mxu0 %v1116
        %1296 = vmatpush2.bf16.msra.mxu0 %v1115
        %1297 = vmatprep.subr.bf16.mxu0 %v1109
        %1298 = vmatpush2.bf16.msra.mxu0 %v1108
        %1299 = vmatprep.subr.bf16.mxu0 %v1102
        %1300 = vmatpush2.bf16.msra.mxu0 %v1101
        %1301 = vmatprep.mubr.bf16.mxu0 %v690
        %1302 = vmatmul.mubr.bf16.gmra.mxu0 %v689
        %v1303 = vpop.f32.mrf.mxu0
        %v1304 = vadd.f32 %v651, %v1303
        %v1305 = vpop.f32.mrf.mxu0
        %v1306 = vadd.f32 %v655, %v1305
        %v1307 = vpop.f32.mrf.mxu0
        %v1308 = vadd.f32 %v651, %v1307
        %v1309 = vpop.f32.mrf.mxu0
        %v1310 = vadd.f32 %v655, %v1309
        %1311 = vdwg.mxu0
        %1312 = vmatprep.subr.bf16.mxu0 %v1097
        %1313 = vmatpush1.bf16.msra.mxu0 %v1096
        %1314 = vmatprep.subr.bf16.mxu0 %v1090
        %1315 = vmatpush1.bf16.msra.mxu0 %v1089
        %1316 = vmatprep.subr.bf16.mxu0 %v1083
        %1317 = vmatpush1.bf16.msra.mxu0 %v1082
        %1318 = vmatprep.subr.bf16.mxu0 %v1076
        %1319 = vmatpush1.bf16.msra.mxu0 %v1075
        %1320 = vmatprep.subr.bf16.mxu0 %v1069
        %1321 = vmatpush1.bf16.msra.mxu0 %v1068
        %1322 = vmatprep.subr.bf16.mxu0 %v1062
        %1323 = vmatpush1.bf16.msra.mxu0 %v1061
        %1324 = vmatprep.subr.bf16.mxu0 %v1055
        %1325 = vmatpush1.bf16.msra.mxu0 %v1054
        %1326 = vmatprep.subr.bf16.mxu0 %v1048
        %1327 = vmatpush1.bf16.msra.mxu0 %v1047
        %1328 = vmatprep.subr.bf16.mxu0 %v1153
        %1329 = vmatpush2.bf16.msra.mxu0 %v1152
        %1330 = vmatprep.subr.bf16.mxu0 %v1146
        %1331 = vmatpush2.bf16.msra.mxu0 %v1145
        %1332 = vmatprep.subr.bf16.mxu0 %v1139
        %1333 = vmatpush2.bf16.msra.mxu0 %v1138
        %1334 = vmatprep.subr.bf16.mxu0 %v1132
        %1335 = vmatpush2.bf16.msra.mxu0 %v1131
        %1336 = vmatprep.subr.bf16.mxu0 %v1125
        %1337 = vmatpush2.bf16.msra.mxu0 %v1124
        %1338 = vmatprep.subr.bf16.mxu0 %v1118
        %1339 = vmatpush2.bf16.msra.mxu0 %v1117
        %1340 = vmatprep.subr.bf16.mxu0 %v1111
        %1341 = vmatpush2.bf16.msra.mxu0 %v1110
        %1342 = vmatprep.subr.bf16.mxu0 %v1104
        %1343 = vmatpush2.bf16.msra.mxu0 %v1103
        %1344 = vmatprep.mubr.bf16.mxu0 %v690
        %1345 = vmatmul.mubr.bf16.gmra.mxu0 %v689
        %v1346 = vpop.f32.mrf.mxu0
        %v1347 = vadd.f32 %v659, %v1346
        %v1348 = vpop.f32.mrf.mxu0
        %v1349 = vadd.f32 %v663, %v1348
        %v1350 = vpop.f32.mrf.mxu0
        %v1351 = vadd.f32 %v659, %v1350
        %v1352 = vpop.f32.mrf.mxu0
        %v1353 = vadd.f32 %v663, %v1352
        %1354 = vdwg.mxu0
        %1355 = vmatprep.subr.bf16.mxu0 %v1099
        %1356 = vmatpush1.bf16.msra.mxu0 %v1098
        %1357 = vmatprep.subr.bf16.mxu0 %v1092
        %1358 = vmatpush1.bf16.msra.mxu0 %v1091
        %1359 = vmatprep.subr.bf16.mxu0 %v1085
        %1360 = vmatpush1.bf16.msra.mxu0 %v1084
        %1361 = vmatprep.subr.bf16.mxu0 %v1078
        %1362 = vmatpush1.bf16.msra.mxu0 %v1077
        %1363 = vmatprep.subr.bf16.mxu0 %v1071
        %1364 = vmatpush1.bf16.msra.mxu0 %v1070
        %1365 = vmatprep.subr.bf16.mxu0 %v1064
        %1366 = vmatpush1.bf16.msra.mxu0 %v1063
        %1367 = vmatprep.subr.bf16.mxu0 %v1057
        %1368 = vmatpush1.bf16.msra.mxu0 %v1056
        %1369 = vmatprep.subr.bf16.mxu0 %v1050
        %1370 = vmatpush1.bf16.msra.mxu0 %v1049
        %1371 = vmatprep.subr.bf16.mxu0 %v1155
        %1372 = vmatpush2.bf16.msra.mxu0 %v1154
        %1373 = vmatprep.subr.bf16.mxu0 %v1148
        %1374 = vmatpush2.bf16.msra.mxu0 %v1147
        %1375 = vmatprep.subr.bf16.mxu0 %v1141
        %1376 = vmatpush2.bf16.msra.mxu0 %v1140
        %1377 = vmatprep.subr.bf16.mxu0 %v1134
        %1378 = vmatpush2.bf16.msra.mxu0 %v1133
        %1379 = vmatprep.subr.bf16.mxu0 %v1127
        %1380 = vmatpush2.bf16.msra.mxu0 %v1126
        %1381 = vmatprep.subr.bf16.mxu0 %v1120
        %1382 = vmatpush2.bf16.msra.mxu0 %v1119
        %1383 = vmatprep.subr.bf16.mxu0 %v1113
        %1384 = vmatpush2.bf16.msra.mxu0 %v1112
        %1385 = vmatprep.subr.bf16.mxu0 %v1106
        %1386 = vmatpush2.bf16.msra.mxu0 %v1105
        %1387 = vmatprep.mubr.bf16.mxu0 %v690
        %1388 = vmatmul.mubr.bf16.gmra.mxu0 %v689
        %v1389 = vpop.f32.mrf.mxu0
        %v1390 = vadd.f32 %v667, %v1389
        %v1391 = vpop.f32.mrf.mxu0
        %v1392 = vadd.f32 %v671, %v1391
        %v1393 = vpop.f32.mrf.mxu0
        %v1394 = vadd.f32 %v667, %v1393
        %v1395 = vpop.f32.mrf.mxu0
        %v1396 = vadd.f32 %v671, %v1395
        %1397 = vdwg.mxu0
        %1398 = vmatprep.subr.bf16.mxu0 0
        %1399 = vmatpush1.bf16.msra.mxu0 %v1100
        %1400 = vmatprep.subr.bf16.mxu0 0
        %1401 = vmatpush1.bf16.msra.mxu0 %v1093
        %1402 = vmatprep.subr.bf16.mxu0 0
        %1403 = vmatpush1.bf16.msra.mxu0 %v1086
        %1404 = vmatprep.subr.bf16.mxu0 0
        %1405 = vmatpush1.bf16.msra.mxu0 %v1079
        %1406 = vmatprep.subr.bf16.mxu0 0
        %1407 = vmatpush1.bf16.msra.mxu0 %v1072
        %1408 = vmatprep.subr.bf16.mxu0 0
        %1409 = vmatpush1.bf16.msra.mxu0 %v1065
        %1410 = vmatprep.subr.bf16.mxu0 0
        %1411 = vmatpush1.bf16.msra.mxu0 %v1058
        %1412 = vmatprep.subr.bf16.mxu0 0
        %1413 = vmatpush1.bf16.msra.mxu0 %v1051
        %1414 = vmatprep.subr.bf16.mxu0 0
        %1415 = vmatpush2.bf16.msra.mxu0 %v1156
        %1416 = vmatprep.subr.bf16.mxu0 0
        %1417 = vmatpush2.bf16.msra.mxu0 %v1149
        %1418 = vmatprep.subr.bf16.mxu0 0
        %1419 = vmatpush2.bf16.msra.mxu0 %v1142
        %1420 = vmatprep.subr.bf16.mxu0 0
        %1421 = vmatpush2.bf16.msra.mxu0 %v1135
        %1422 = vmatprep.subr.bf16.mxu0 0
        %1423 = vmatpush2.bf16.msra.mxu0 %v1128
        %1424 = vmatprep.subr.bf16.mxu0 0
        %1425 = vmatpush2.bf16.msra.mxu0 %v1121
        %1426 = vmatprep.subr.bf16.mxu0 0
        %1427 = vmatpush2.bf16.msra.mxu0 %v1114
        %1428 = vmatprep.subr.bf16.mxu0 0
        %1429 = vmatpush2.bf16.msra.mxu0 %v1107
        %1430 = vmatprep.mubr.bf16.mxu0 %v690
        %1431 = vmatmul.mubr.bf16.gmra.mxu0 %v689
        %v1432 = vpop.f32.mrf.mxu0
        %v1433 = vadd.f32 %v675, %v1432
        %v1434 = vpop.f32.mrf.mxu0
        %v1435 = vpop.f32.mrf.mxu0
        %v1436 = vadd.f32 %v675, %v1435
        %v1437 = vpop.f32.mrf.mxu0
        %1438 = vdwg.mxu0
        %v1439 = vmax.f32 %v1304, 0.0
        %v1440 = vmax.f32 %v1306, 0.0
        %v1441 = vmax.f32 %v1347, 0.0
        %v1442 = vmax.f32 %v1349, 0.0
        %v1443 = vmax.f32 %v1390, 0.0
        %v1444 = vmax.f32 %v1392, 0.0
        %v1445 = vmax.f32 %v1433, 0.0
        %v1446 = vmax.f32 %v1308, 0.0
        %v1447 = vmax.f32 %v1310, 0.0
        %v1448 = vmax.f32 %v1351, 0.0
        %v1449 = vmax.f32 %v1353, 0.0
        %v1450 = vmax.f32 %v1394, 0.0
        %v1451 = vmax.f32 %v1396, 0.0
        %v1452 = vmax.f32 %v1436, 0.0
        %v1453 = vpack.c.bf16 %v1446, %v1439
        %v1454 = vpack.c.bf16 %v1447, %v1440
        %v1455 = vpack.c.bf16 %v1448, %v1441
        %v1456 = vpack.c.bf16 %v1449, %v1442
        %v1457 = vpack.c.bf16 %v1450, %v1443
        %v1458 = vpack.c.bf16 %v1451, %v1444
        %v1459 = vpack.c.bf16 %v1452, %v1445
        %v1460 = vld [vmem:[#allocation7] sm:$0xff]
        %v1461 = vld [vmem:[#allocation7 + $0x8] sm:$0xff]
        %v1462 = vld [vmem:[#allocation7 + $0x10] sm:$0xff]
        %v1463 = vld [vmem:[#allocation7 + $0x18] sm:$0xff]
        %v1464 = vld [vmem:[#allocation7 + $0x20] sm:$0xff]
        %v1465 = vld [vmem:[#allocation7 + $0x28] sm:$0xff]
        %v1466 = vld [vmem:[#allocation7 + $0x30] sm:$0xff]
        %v1467 = vld [vmem:[#allocation7 + $0x38] sm:$0xff]
        %v1468 = vld [vmem:[#allocation7 + $0x40] sm:$0xff]
        %v1469 = vld [vmem:[#allocation7 + $0x48] sm:$0xff]
        %v1470 = vld [vmem:[#allocation7 + $0x50] sm:$0xff]
        %v1471 = vld [vmem:[#allocation7 + $0x58] sm:$0xff]
        %v1472 = vld [vmem:[#allocation7 + $0x60] sm:$0xff]
        %v1473 = vld [vmem:[#allocation7 + $0x68] sm:$0xff]
        %v1474 = vld [vmem:[#allocation7 + $0x70] sm:$0xff]
        %v1475 = vld [vmem:[#allocation7 + $0x78] sm:$0xff]
        %v1476 = vld [vmem:[#allocation7 + $0x80] sm:$0xff]
        %v1477 = vld [vmem:[#allocation7 + $0x88] sm:$0xff]
        %v1478 = vld [vmem:[#allocation7 + $0x90] sm:$0xff]
        %v1479 = vld [vmem:[#allocation7 + $0x98] sm:$0xff]
        %v1480 = vld [vmem:[#allocation7 + $0xa0] sm:$0xff]
        %v1481 = vld [vmem:[#allocation7 + $0xa8] sm:$0xff]
        %v1482 = vld [vmem:[#allocation7 + $0xb0] sm:$0xff]
        %v1483 = vld [vmem:[#allocation7 + $0xb8] sm:$0xff]
        %v1484 = vld [vmem:[#allocation7 + $0xc0] sm:$0xff]
        %v1485 = vld [vmem:[#allocation7 + $0xc8] sm:$0xff]
        %v1486 = vld [vmem:[#allocation7 + $0xd0] sm:$0xff]
        %v1487 = vld [vmem:[#allocation7 + $0xd8] sm:$0xff]
        %v1488 = vld [vmem:[#allocation7 + $0xe0] sm:$0xff]
        %v1489 = vld [vmem:[#allocation7 + $0xe8] sm:$0xff]
        %v1490 = vld [vmem:[#allocation7 + $0xf0] sm:$0xff]
        %v1491 = vld [vmem:[#allocation7 + $0xf8] sm:$0xff]
        %v1492 = vld [vmem:[#allocation7 + $0x100] sm:$0xff]
        %v1493 = vld [vmem:[#allocation7 + $0x108] sm:$0xff]
        %v1494 = vld [vmem:[#allocation7 + $0x110] sm:$0xff]
        %v1495 = vld [vmem:[#allocation7 + $0x118] sm:$0xff]
        %v1496 = vld [vmem:[#allocation7 + $0x120] sm:$0xff]
        %v1497 = vld [vmem:[#allocation7 + $0x128] sm:$0xff]
        %v1498 = vld [vmem:[#allocation7 + $0x130] sm:$0xff]
        %v1499 = vld [vmem:[#allocation7 + $0x138] sm:$0xff]
        %v1500 = vld [vmem:[#allocation7 + $0x140] sm:$0xff]
        %v1501 = vld [vmem:[#allocation7 + $0x148] sm:$0xff]
        %v1502 = vld [vmem:[#allocation7 + $0x150] sm:$0xff]
        %v1503 = vld [vmem:[#allocation7 + $0x158] sm:$0xff]
        %v1504 = vld [vmem:[#allocation7 + $0x160] sm:$0xff]
        %v1505 = vld [vmem:[#allocation7 + $0x168] sm:$0xff]
        %v1506 = vld [vmem:[#allocation7 + $0x170] sm:$0xff]
        %v1507 = vld [vmem:[#allocation7 + $0x178] sm:$0xff]
        %v1508 = vld [vmem:[#allocation7 + $0x180] sm:$0xff]
        %v1509 = vld [vmem:[#allocation7 + $0x188] sm:$0xff]
        %v1510 = vld [vmem:[#allocation7 + $0x190] sm:$0xff]
        %v1511 = vld [vmem:[#allocation7 + $0x198] sm:$0xff]
        %v1512 = vld [vmem:[#allocation7 + $0x1a0] sm:$0xff]
        %v1513 = vld [vmem:[#allocation7 + $0x1a8] sm:$0xff]
        %v1514 = vld [vmem:[#allocation7 + $0x1b0] sm:$0xff]
        %v1515 = vld [vmem:[#allocation7 + $0x1b8] sm:$0xff]
        %v1516 = vld [vmem:[#allocation7 + $0x1c0] sm:$0xff]
        %v1517 = vld [vmem:[#allocation7 + $0x1c8] sm:$0xff]
        %v1518 = vld [vmem:[#allocation7 + $0x1d0] sm:$0xff]
        %v1519 = vld [vmem:[#allocation7 + $0x1d8] sm:$0xff]
        %v1520 = vld [vmem:[#allocation7 + $0x1e0] sm:$0xff]
        %v1521 = vld [vmem:[#allocation7 + $0x1e8] sm:$0xff]
        %v1522 = vld [vmem:[#allocation7 + $0x1f0] sm:$0xff]
        %v1523 = vld [vmem:[#allocation7 + $0x1f8] sm:$0xff]
        %v1524 = vld [vmem:[#allocation7 + $0x200] sm:$0xff]
        %v1525 = vld [vmem:[#allocation7 + $0x208] sm:$0xff]
        %v1526 = vld [vmem:[#allocation7 + $0x210] sm:$0xff]
        %v1527 = vld [vmem:[#allocation7 + $0x218] sm:$0xff]
        %v1528 = vld [vmem:[#allocation7 + $0x220] sm:$0xff]
        %v1529 = vld [vmem:[#allocation7 + $0x228] sm:$0xff]
        %v1530 = vld [vmem:[#allocation7 + $0x230] sm:$0xff]
        %v1531 = vld [vmem:[#allocation7 + $0x238] sm:$0xff]
        %v1532 = vld [vmem:[#allocation7 + $0x240] sm:$0xff]
        %v1533 = vld [vmem:[#allocation7 + $0x248] sm:$0xff]
        %v1534 = vld [vmem:[#allocation7 + $0x250] sm:$0xff]
        %v1535 = vld [vmem:[#allocation7 + $0x258] sm:$0xff]
        %v1536 = vld [vmem:[#allocation7 + $0x260] sm:$0xff]
        %v1537 = vld [vmem:[#allocation7 + $0x268] sm:$0xff]
        %v1538 = vld [vmem:[#allocation7 + $0x270] sm:$0xff]
        %v1539 = vld [vmem:[#allocation7 + $0x278] sm:$0xff]
        %v1540 = vld [vmem:[#allocation7 + $0x280] sm:$0xff]
        %v1541 = vld [vmem:[#allocation7 + $0x288] sm:$0xff]
        %v1542 = vld [vmem:[#allocation7 + $0x290] sm:$0xff]
        %v1543 = vld [vmem:[#allocation7 + $0x298] sm:$0xff]
        %v1544 = vld [vmem:[#allocation7 + $0x2a0] sm:$0xff]
        %v1545 = vld [vmem:[#allocation7 + $0x2a8] sm:$0xff]
        %v1546 = vld [vmem:[#allocation7 + $0x2b0] sm:$0xff]
        %v1547 = vld [vmem:[#allocation7 + $0x2b8] sm:$0xff]
        %v1548 = vld [vmem:[#allocation7 + $0x2c0] sm:$0xff]
        %v1549 = vld [vmem:[#allocation7 + $0x2c8] sm:$0xff]
        %v1550 = vld [vmem:[#allocation7 + $0x2d0] sm:$0xff]
        %v1551 = vld [vmem:[#allocation7 + $0x2d8] sm:$0xff]
        %v1552 = vld [vmem:[#allocation7 + $0x2e0] sm:$0xff]
        %v1553 = vld [vmem:[#allocation7 + $0x2e8] sm:$0xff]
        %v1554 = vld [vmem:[#allocation7 + $0x2f0] sm:$0xff]
        %v1555 = vld [vmem:[#allocation7 + $0x2f8] sm:$0xff]
        %v1556 = vld [vmem:[#allocation7 + $0x300] sm:$0xff]
        %v1557 = vld [vmem:[#allocation7 + $0x308] sm:$0xff]
        %v1558 = vld [vmem:[#allocation7 + $0x310] sm:$0xff]
        %v1559 = vld [vmem:[#allocation7 + $0x318] sm:$0xff]
        %v1560 = vld [vmem:[#allocation7 + $0x320] sm:$0xff]
        %v1561 = vld [vmem:[#allocation7 + $0x328] sm:$0xff]
        %v1562 = vld [vmem:[#allocation7 + $0x330] sm:$0xff]
        %v1563 = vld [vmem:[#allocation7 + $0x338] sm:$0xff]
        %v1564 = vld [vmem:[#allocation7 + $0x340] sm:$0xff]
        %v1565 = vld [vmem:[#allocation7 + $0x348] sm:$0xff]
        %v1566 = vld [vmem:[#allocation7 + $0x350] sm:$0xff]
        %v1567 = vld [vmem:[#allocation7 + $0x358] sm:$0xff]
        %v1568 = vld [vmem:[#allocation7 + $0x360] sm:$0xff]
        %v1569 = vld [vmem:[#allocation7 + $0x368] sm:$0xff]
        %v1570 = vld [vmem:[#allocation7 + $0x370] sm:$0xff]
        %v1571 = vld [vmem:[#allocation7 + $0x378] sm:$0xff]
        %v1572 = vld [vmem:[#allocation7 + $0x380] sm:$0xff]
        %v1573 = vld [vmem:[#allocation7 + $0x388] sm:$0xff]
        %v1574 = vld [vmem:[#allocation7 + $0x390] sm:$0xff]
        %v1575 = vld [vmem:[#allocation7 + $0x398] sm:$0xff]
        %v1576 = vld [vmem:[#allocation7 + $0x3a0] sm:$0xff]
        %v1577 = vld [vmem:[#allocation7 + $0x3a8] sm:$0xff]
        %v1578 = vld [vmem:[#allocation7 + $0x3b0] sm:$0xff]
        %v1579 = vld [vmem:[#allocation7 + $0x3b8] sm:$0xff]
        %v1580 = vld [vmem:[#allocation7 + $0x3c0] sm:$0xff]
        %v1581 = vld [vmem:[#allocation7 + $0x3c8] sm:$0xff]
        %v1582 = vld [vmem:[#allocation7 + $0x3d0] sm:$0xff]
        %v1583 = vld [vmem:[#allocation7 + $0x3d8] sm:$0xff]
        %v1584 = vld [vmem:[#allocation7 + $0x3e0] sm:$0xff]
        %v1585 = vld [vmem:[#allocation7 + $0x3e8] sm:$0xff]
        %v1586 = vld [vmem:[#allocation7 + $0x3f0] sm:$0xff]
        %v1587 = vld [vmem:[#allocation7 + $0x3f8] sm:$0xff]
        %v1588 = vld [vmem:[#allocation7 + $0x400] sm:$0xff]
        %v1589 = vld [vmem:[#allocation7 + $0x408] sm:$0xff]
        %v1590 = vld [vmem:[#allocation7 + $0x410] sm:$0xff]
        %v1591 = vld [vmem:[#allocation7 + $0x418] sm:$0xff]
        %v1592 = vld [vmem:[#allocation7 + $0x420] sm:$0xff]
        %v1593 = vld [vmem:[#allocation7 + $0x428] sm:$0xff]
        %v1594 = vld [vmem:[#allocation7 + $0x430] sm:$0xff]
        %v1595 = vld [vmem:[#allocation7 + $0x438] sm:$0xff]
        %v1596 = vld [vmem:[#allocation7 + $0x440] sm:$0xff]
        %v1597 = vld [vmem:[#allocation7 + $0x448] sm:$0xff]
        %v1598 = vld [vmem:[#allocation7 + $0x450] sm:$0xff]
        %v1599 = vld [vmem:[#allocation7 + $0x458] sm:$0xff]
        %v1600 = vld [vmem:[#allocation7 + $0x460] sm:$0xff]
        %v1601 = vld [vmem:[#allocation7 + $0x468] sm:$0xff]
        %v1602 = vld [vmem:[#allocation7 + $0x470] sm:$0xff]
        %v1603 = vld [vmem:[#allocation7 + $0x478] sm:$0xff]
        %v1604 = vld [vmem:[#allocation7 + $0x480] sm:$0xff]
        %v1605 = vld [vmem:[#allocation7 + $0x488] sm:$0xff]
        %v1606 = vld [vmem:[#allocation7 + $0x490] sm:$0xff]
        %v1607 = vld [vmem:[#allocation7 + $0x498] sm:$0xff]
        %v1608 = vld [vmem:[#allocation7 + $0x4a0] sm:$0xff]
        %v1609 = vld [vmem:[#allocation7 + $0x4a8] sm:$0xff]
        %v1610 = vld [vmem:[#allocation7 + $0x4b0] sm:$0xff]
        %v1611 = vld [vmem:[#allocation7 + $0x4b8] sm:$0xff]
        %v1612 = vld [vmem:[#allocation7 + $0x4c0] sm:$0xff]
        %v1613 = vld [vmem:[#allocation7 + $0x4c8] sm:$0xff]
        %v1614 = vld [vmem:[#allocation7 + $0x4d0] sm:$0xff]
        %v1615 = vld [vmem:[#allocation7 + $0x4d8] sm:$0xff]
        %v1616 = vld [vmem:[#allocation7 + $0x4e0] sm:$0xff]
        %v1617 = vld [vmem:[#allocation7 + $0x4e8] sm:$0xff]
        %v1618 = vld [vmem:[#allocation7 + $0x4f0] sm:$0xff]
        %v1619 = vld [vmem:[#allocation7 + $0x4f8] sm:$0xff]
        %v1620 = vld [vmem:[#allocation7 + $0x500] sm:$0xff]
        %v1621 = vld [vmem:[#allocation7 + $0x508] sm:$0xff]
        %v1622 = vld [vmem:[#allocation7 + $0x510] sm:$0xff]
        %v1623 = vld [vmem:[#allocation7 + $0x518] sm:$0xff]
        %v1624 = vld [vmem:[#allocation7 + $0x520] sm:$0xff]
        %v1625 = vld [vmem:[#allocation7 + $0x528] sm:$0xff]
        %v1626 = vld [vmem:[#allocation7 + $0x530] sm:$0xff]
        %v1627 = vld [vmem:[#allocation7 + $0x538] sm:$0xff]
        %v1628 = vld [vmem:[#allocation7 + $0x540] sm:$0xff]
        %v1629 = vld [vmem:[#allocation7 + $0x548] sm:$0xff]
        %v1630 = vld [vmem:[#allocation7 + $0x550] sm:$0xff]
        %v1631 = vld [vmem:[#allocation7 + $0x558] sm:$0xff]
        %v1632 = vld [vmem:[#allocation7 + $0x560] sm:$0xff]
        %v1633 = vld [vmem:[#allocation7 + $0x568] sm:$0xff]
        %v1634 = vld [vmem:[#allocation7 + $0x570] sm:$0xff]
        %v1635 = vld [vmem:[#allocation7 + $0x578] sm:$0xff]
        %v1636 = vld [vmem:[#allocation7 + $0x580] sm:$0xff]
        %v1637 = vld [vmem:[#allocation7 + $0x588] sm:$0xff]
        %v1638 = vld [vmem:[#allocation7 + $0x590] sm:$0xff]
        %v1639 = vld [vmem:[#allocation7 + $0x598] sm:$0xff]
        %v1640 = vld [vmem:[#allocation7 + $0x5a0] sm:$0xff]
        %v1641 = vld [vmem:[#allocation7 + $0x5a8] sm:$0xff]
        %v1642 = vld [vmem:[#allocation7 + $0x5b0] sm:$0xff]
        %v1643 = vld [vmem:[#allocation7 + $0x5b8] sm:$0xff]
        %v1644 = vld [vmem:[#allocation7 + $0x5c0] sm:$0xff]
        %v1645 = vld [vmem:[#allocation7 + $0x5c8] sm:$0xff]
        %v1646 = vld [vmem:[#allocation7 + $0x5d0] sm:$0xff]
        %v1647 = vld [vmem:[#allocation7 + $0x5d8] sm:$0xff]
        %v1648 = vld [vmem:[#allocation7 + $0x5e0] sm:$0xff]
        %v1649 = vld [vmem:[#allocation7 + $0x5e8] sm:$0xff]
        %v1650 = vld [vmem:[#allocation7 + $0x5f0] sm:$0xff]
        %v1651 = vld [vmem:[#allocation7 + $0x5f8] sm:$0xff]
        %v1652 = vld [vmem:[#allocation7 + $0x600] sm:$0xff]
        %v1653 = vld [vmem:[#allocation7 + $0x608] sm:$0xff]
        %v1654 = vld [vmem:[#allocation7 + $0x610] sm:$0xff]
        %v1655 = vld [vmem:[#allocation7 + $0x618] sm:$0xff]
        %v1656 = vld [vmem:[#allocation7 + $0x620] sm:$0xff]
        %v1657 = vld [vmem:[#allocation7 + $0x628] sm:$0xff]
        %v1658 = vld [vmem:[#allocation7 + $0x630] sm:$0xff]
        %v1659 = vld [vmem:[#allocation7 + $0x638] sm:$0xff]
        %v1660 = vld [vmem:[#allocation7 + $0x640] sm:$0xff]
        %v1661 = vld [vmem:[#allocation7 + $0x648] sm:$0xff]
        %v1662 = vld [vmem:[#allocation7 + $0x650] sm:$0xff]
        %v1663 = vld [vmem:[#allocation7 + $0x658] sm:$0xff]
        %v1664 = vld [vmem:[#allocation7 + $0x660] sm:$0xff]
        %v1665 = vld [vmem:[#allocation7 + $0x668] sm:$0xff]
        %v1666 = vld [vmem:[#allocation7 + $0x670] sm:$0xff]
        %v1667 = vld [vmem:[#allocation7 + $0x678] sm:$0xff]
        %v1668 = vld [vmem:[#allocation7 + $0x680] sm:$0xff]
        %v1669 = vld [vmem:[#allocation7 + $0x688] sm:$0xff]
        %v1670 = vld [vmem:[#allocation7 + $0x690] sm:$0xff]
        %v1671 = vld [vmem:[#allocation7 + $0x698] sm:$0xff]
        %v1672 = vld [vmem:[#allocation7 + $0x6a0] sm:$0xff]
        %v1673 = vld [vmem:[#allocation7 + $0x6a8] sm:$0xff]
        %v1674 = vld [vmem:[#allocation7 + $0x6b0] sm:$0xff]
        %v1675 = vld [vmem:[#allocation7 + $0x6b8] sm:$0xff]
        %v1676 = vld [vmem:[#allocation7 + $0x6c0] sm:$0xff]
        %v1677 = vld [vmem:[#allocation7 + $0x6c8] sm:$0xff]
        %v1678 = vld [vmem:[#allocation7 + $0x6d0] sm:$0xff]
        %v1679 = vld [vmem:[#allocation7 + $0x6d8] sm:$0xff]
        %v1680 = vld [vmem:[#allocation7 + $0x6e0] sm:$0xff]
        %v1681 = vld [vmem:[#allocation7 + $0x6e8] sm:$0xff]
        %v1682 = vld [vmem:[#allocation7 + $0x6f0] sm:$0xff]
        %v1683 = vld [vmem:[#allocation7 + $0x6f8] sm:$0xff]
        %v1684 = vld [vmem:[#allocation7 + $0x700] sm:$0xff]
        %v1685 = vld [vmem:[#allocation7 + $0x708] sm:$0xff]
        %v1686 = vld [vmem:[#allocation7 + $0x710] sm:$0xff]
        %v1687 = vld [vmem:[#allocation7 + $0x718] sm:$0xff]
        %v1688 = vld [vmem:[#allocation7 + $0x720] sm:$0xff]
        %v1689 = vld [vmem:[#allocation7 + $0x728] sm:$0xff]
        %v1690 = vld [vmem:[#allocation7 + $0x730] sm:$0xff]
        %v1691 = vld [vmem:[#allocation7 + $0x738] sm:$0xff]
        %v1692 = vld [vmem:[#allocation7 + $0x740] sm:$0xff]
        %v1693 = vld [vmem:[#allocation7 + $0x748] sm:$0xff]
        %v1694 = vld [vmem:[#allocation7 + $0x750] sm:$0xff]
        %v1695 = vld [vmem:[#allocation7 + $0x758] sm:$0xff]
        %v1696 = vld [vmem:[#allocation7 + $0x760] sm:$0xff]
        %v1697 = vld [vmem:[#allocation7 + $0x768] sm:$0xff]
        %v1698 = vld [vmem:[#allocation7 + $0x770] sm:$0xff]
        %v1699 = vld [vmem:[#allocation7 + $0x778] sm:$0xff]
        %v1700 = vld [vmem:[#allocation7 + $0x780] sm:$0xff]
        %v1701 = vld [vmem:[#allocation7 + $0x788] sm:$0xff]
        %v1702 = vld [vmem:[#allocation7 + $0x790] sm:$0xff]
        %v1703 = vld [vmem:[#allocation7 + $0x798] sm:$0xff]
        %v1704 = vld [vmem:[#allocation7 + $0x7a0] sm:$0xff]
        %v1705 = vld [vmem:[#allocation7 + $0x7a8] sm:$0xff]
        %v1706 = vld [vmem:[#allocation7 + $0x7b0] sm:$0xff]
        %v1707 = vld [vmem:[#allocation7 + $0x7b8] sm:$0xff]
        %v1708 = vld [vmem:[#allocation7 + $0x7c0] sm:$0xff]
        %v1709 = vld [vmem:[#allocation7 + $0x7c8] sm:$0xff]
        %v1710 = vld [vmem:[#allocation7 + $0x7d0] sm:$0xff]
        %v1711 = vld [vmem:[#allocation7 + $0x7d8] sm:$0xff]
        %v1712 = vld [vmem:[#allocation7 + $0x7e0] sm:$0xff]
        %v1713 = vld [vmem:[#allocation7 + $0x7e8] sm:$0xff]
        %v1714 = vld [vmem:[#allocation7 + $0x7f0] sm:$0xff]
        %v1715 = vld [vmem:[#allocation7 + $0x7f8] sm:$0xff]
        %v1716 = vld [vmem:[#allocation7 + $0x800] sm:$0xff]
        %v1717 = vld [vmem:[#allocation7 + $0x808] sm:$0xff]
        %v1718 = vld [vmem:[#allocation7 + $0x810] sm:$0xff]
        %v1719 = vld [vmem:[#allocation7 + $0x818] sm:$0xff]
        %v1720 = vld [vmem:[#allocation7 + $0x820] sm:$0xff]
        %v1721 = vld [vmem:[#allocation7 + $0x828] sm:$0xff]
        %v1722 = vld [vmem:[#allocation7 + $0x830] sm:$0xff]
        %v1723 = vld [vmem:[#allocation7 + $0x838] sm:$0xff]
        %v1724 = vld [vmem:[#allocation7 + $0x840] sm:$0xff]
        %v1725 = vld [vmem:[#allocation7 + $0x848] sm:$0xff]
        %v1726 = vld [vmem:[#allocation7 + $0x850] sm:$0xff]
        %v1727 = vld [vmem:[#allocation7 + $0x858] sm:$0xff]
        %v1728 = vld [vmem:[#allocation7 + $0x860] sm:$0xff]
        %v1729 = vld [vmem:[#allocation7 + $0x868] sm:$0xff]
        %v1730 = vld [vmem:[#allocation7 + $0x870] sm:$0xff]
        %v1731 = vld [vmem:[#allocation7 + $0x878] sm:$0xff]
        %v1732 = vld [vmem:[#allocation7 + $0x880] sm:$0xff]
        %v1733 = vld [vmem:[#allocation7 + $0x888] sm:$0xff]
        %v1734 = vld [vmem:[#allocation7 + $0x890] sm:$0xff]
        %v1735 = vld [vmem:[#allocation7 + $0x898] sm:$0xff]
        %v1736 = vld [vmem:[#allocation7 + $0x8a0] sm:$0xff]
        %v1737 = vld [vmem:[#allocation7 + $0x8a8] sm:$0xff]
        %v1738 = vld [vmem:[#allocation7 + $0x8b0] sm:$0xff]
        %v1739 = vld [vmem:[#allocation7 + $0x8b8] sm:$0xff]
        %v1740 = vld [vmem:[#allocation7 + $0x8c0] sm:$0xff]
        %v1741 = vld [vmem:[#allocation7 + $0x8c8] sm:$0xff]
        %v1742 = vld [vmem:[#allocation7 + $0x8d0] sm:$0xff]
        %v1743 = vld [vmem:[#allocation7 + $0x8d8] sm:$0xff]
        %v1744 = vld [vmem:[#allocation7 + $0x8e0] sm:$0xff]
        %v1745 = vld [vmem:[#allocation7 + $0x8e8] sm:$0xff]
        %v1746 = vld [vmem:[#allocation7 + $0x8f0] sm:$0xff]
        %v1747 = vld [vmem:[#allocation7 + $0x8f8] sm:$0xff]
        %v1748 = vld [vmem:[#allocation7 + $0x900] sm:$0xff]
        %v1749 = vld [vmem:[#allocation7 + $0x908] sm:$0xff]
        %v1750 = vld [vmem:[#allocation7 + $0x910] sm:$0xff]
        %v1751 = vld [vmem:[#allocation7 + $0x918] sm:$0xff]
        %v1752 = vld [vmem:[#allocation7 + $0x920] sm:$0xff]
        %v1753 = vld [vmem:[#allocation7 + $0x928] sm:$0xff]
        %v1754 = vld [vmem:[#allocation7 + $0x930] sm:$0xff]
        %v1755 = vld [vmem:[#allocation7 + $0x938] sm:$0xff]
        %v1756 = vld [vmem:[#allocation7 + $0x940] sm:$0xff]
        %v1757 = vld [vmem:[#allocation7 + $0x948] sm:$0xff]
        %v1758 = vld [vmem:[#allocation7 + $0x950] sm:$0xff]
        %v1759 = vld [vmem:[#allocation7 + $0x958] sm:$0xff]
        %v1760 = vld [vmem:[#allocation7 + $0x960] sm:$0xff]
        %v1761 = vld [vmem:[#allocation7 + $0x968] sm:$0xff]
        %v1762 = vld [vmem:[#allocation7 + $0x970] sm:$0xff]
        %v1763 = vld [vmem:[#allocation7 + $0x978] sm:$0xff]
        %v1764 = vld [vmem:[#allocation7 + $0x980] sm:$0xff]
        %v1765 = vld [vmem:[#allocation7 + $0x988] sm:$0xff]
        %v1766 = vld [vmem:[#allocation7 + $0x990] sm:$0xff]
        %v1767 = vld [vmem:[#allocation7 + $0x998] sm:$0xff]
        %v1768 = vld [vmem:[#allocation7 + $0x9a0] sm:$0xff]
        %v1769 = vld [vmem:[#allocation7 + $0x9a8] sm:$0xff]
        %v1770 = vld [vmem:[#allocation7 + $0x9b0] sm:$0xff]
        %v1771 = vld [vmem:[#allocation7 + $0x9b8] sm:$0xff]
        %v1772 = vld [vmem:[#allocation7 + $0x9c0] sm:$0xff]
        %v1773 = vld [vmem:[#allocation7 + $0x9c8] sm:$0xff]
        %v1774 = vld [vmem:[#allocation7 + $0x9d0] sm:$0xff]
        %v1775 = vld [vmem:[#allocation7 + $0x9d8] sm:$0xff]
        %v1776 = vld [vmem:[#allocation7 + $0x9e0] sm:$0xff]
        %v1777 = vld [vmem:[#allocation7 + $0x9e8] sm:$0xff]
        %v1778 = vld [vmem:[#allocation7 + $0x9f0] sm:$0xff]
        %v1779 = vld [vmem:[#allocation7 + $0x9f8] sm:$0xff]
        %v1780 = vld [vmem:[#allocation7 + $0xa00] sm:$0xff]
        %v1781 = vld [vmem:[#allocation7 + $0xa08] sm:$0xff]
        %v1782 = vld [vmem:[#allocation7 + $0xa10] sm:$0xff]
        %v1783 = vld [vmem:[#allocation7 + $0xa18] sm:$0xff]
        %v1784 = vld [vmem:[#allocation7 + $0xa20] sm:$0xff]
        %v1785 = vld [vmem:[#allocation7 + $0xa28] sm:$0xff]
        %v1786 = vld [vmem:[#allocation7 + $0xa30] sm:$0xff]
        %v1787 = vld [vmem:[#allocation7 + $0xa38] sm:$0xff]
        %v1788 = vld [vmem:[#allocation7 + $0xa40] sm:$0xff]
        %v1789 = vld [vmem:[#allocation7 + $0xa48] sm:$0xff]
        %v1790 = vld [vmem:[#allocation7 + $0xa50] sm:$0xff]
        %v1791 = vld [vmem:[#allocation7 + $0xa58] sm:$0xff]
        %v1792 = vld [vmem:[#allocation7 + $0xa60] sm:$0xff]
        %v1793 = vld [vmem:[#allocation7 + $0xa68] sm:$0xff]
        %v1794 = vld [vmem:[#allocation7 + $0xa70] sm:$0xff]
        %v1795 = vld [vmem:[#allocation7 + $0xa78] sm:$0xff]
        %v1796 = vld [vmem:[#allocation7 + $0xa80] sm:$0xff]
        %v1797 = vld [vmem:[#allocation7 + $0xa88] sm:$0xff]
        %v1798 = vld [vmem:[#allocation7 + $0xa90] sm:$0xff]
        %v1799 = vld [vmem:[#allocation7 + $0xa98] sm:$0xff]
        %v1800 = vld [vmem:[#allocation7 + $0xaa0] sm:$0xff]
        %v1801 = vld [vmem:[#allocation7 + $0xaa8] sm:$0xff]
        %v1802 = vld [vmem:[#allocation7 + $0xab0] sm:$0xff]
        %v1803 = vld [vmem:[#allocation7 + $0xab8] sm:$0xff]
        %v1804 = vld [vmem:[#allocation7 + $0xac0] sm:$0xff]
        %v1805 = vld [vmem:[#allocation7 + $0xac8] sm:$0xff]
        %v1806 = vld [vmem:[#allocation7 + $0xad0] sm:$0xff]
        %v1807 = vld [vmem:[#allocation7 + $0xad8] sm:$0xff]
        %v1808 = vld [vmem:[#allocation7 + $0xae0] sm:$0xff]
        %v1809 = vld [vmem:[#allocation7 + $0xae8] sm:$0xff]
        %v1810 = vld [vmem:[#allocation7 + $0xaf0] sm:$0xff]
        %v1811 = vld [vmem:[#allocation7 + $0xaf8] sm:$0xff]
        %v1812 = vld [vmem:[#allocation7 + $0xb00] sm:$0xff]
        %v1813 = vld [vmem:[#allocation7 + $0xb08] sm:$0xff]
        %v1814 = vld [vmem:[#allocation7 + $0xb10] sm:$0xff]
        %v1815 = vld [vmem:[#allocation7 + $0xb18] sm:$0xff]
        %v1816 = vld [vmem:[#allocation7 + $0xb20] sm:$0xff]
        %v1817 = vld [vmem:[#allocation7 + $0xb28] sm:$0xff]
        %v1818 = vld [vmem:[#allocation7 + $0xb30] sm:$0xff]
        %v1819 = vld [vmem:[#allocation7 + $0xb38] sm:$0xff]
        %v1820 = vld [vmem:[#allocation7 + $0xb40] sm:$0xff]
        %v1821 = vld [vmem:[#allocation7 + $0xb48] sm:$0xff]
        %v1822 = vld [vmem:[#allocation7 + $0xb50] sm:$0xff]
        %v1823 = vld [vmem:[#allocation7 + $0xb58] sm:$0xff]
        %v1824 = vld [vmem:[#allocation7 + $0xb60] sm:$0xff]
        %v1825 = vld [vmem:[#allocation7 + $0xb68] sm:$0xff]
        %v1826 = vld [vmem:[#allocation7 + $0xb70] sm:$0xff]
        %v1827 = vld [vmem:[#allocation7 + $0xb78] sm:$0xff]
        %v1828 = vld [vmem:[#allocation7 + $0xb80] sm:$0xff]
        %v1829 = vld [vmem:[#allocation7 + $0xb88] sm:$0xff]
        %v1830 = vld [vmem:[#allocation7 + $0xb90] sm:$0xff]
        %v1831 = vld [vmem:[#allocation7 + $0xb98] sm:$0xff]
        %v1832 = vld [vmem:[#allocation7 + $0xba0] sm:$0xff]
        %v1833 = vld [vmem:[#allocation7 + $0xba8] sm:$0xff]
        %v1834 = vld [vmem:[#allocation7 + $0xbb0] sm:$0xff]
        %v1835 = vld [vmem:[#allocation7 + $0xbb8] sm:$0xff]
        %v1836 = vld [vmem:[#allocation7 + $0xbc0] sm:$0xff]
        %v1837 = vld [vmem:[#allocation7 + $0xbc8] sm:$0xff]
        %v1838 = vld [vmem:[#allocation7 + $0xbd0] sm:$0xff]
        %v1839 = vld [vmem:[#allocation7 + $0xbd8] sm:$0xff]
        %v1840 = vld [vmem:[#allocation7 + $0xbe0] sm:$0xff]
        %v1841 = vld [vmem:[#allocation7 + $0xbe8] sm:$0xff]
        %v1842 = vld [vmem:[#allocation7 + $0xbf0] sm:$0xff]
        %v1843 = vld [vmem:[#allocation7 + $0xbf8] sm:$0xff]
        %v1844 = vld [vmem:[#allocation7 + $0xc00] sm:$0xff]
        %v1845 = vld [vmem:[#allocation7 + $0xc08] sm:$0xff]
        %v1846 = vld [vmem:[#allocation7 + $0xc10] sm:$0xff]
        %v1847 = vld [vmem:[#allocation7 + $0xc18] sm:$0xff]
        %v1848 = vld [vmem:[#allocation7 + $0xc20] sm:$0xff]
        %v1849 = vld [vmem:[#allocation7 + $0xc28] sm:$0xff]
        %v1850 = vld [vmem:[#allocation7 + $0xc30] sm:$0xff]
        %v1851 = vld [vmem:[#allocation7 + $0xc38] sm:$0xff]
        %v1852 = vld [vmem:[#allocation7 + $0xc40] sm:$0xff]
        %v1853 = vld [vmem:[#allocation7 + $0xc48] sm:$0xff]
        %v1854 = vld [vmem:[#allocation7 + $0xc50] sm:$0xff]
        %v1855 = vld [vmem:[#allocation7 + $0xc58] sm:$0xff]
        %v1856 = vld [vmem:[#allocation7 + $0xc60] sm:$0xff]
        %v1857 = vld [vmem:[#allocation7 + $0xc68] sm:$0xff]
        %v1858 = vld [vmem:[#allocation7 + $0xc70] sm:$0xff]
        %v1859 = vld [vmem:[#allocation7 + $0xc78] sm:$0xff]
        %v1860 = vld [vmem:[#allocation7 + $0xc80] sm:$0xff]
        %v1861 = vld [vmem:[#allocation7 + $0xc88] sm:$0xff]
        %v1862 = vld [vmem:[#allocation7 + $0xc90] sm:$0xff]
        %v1863 = vld [vmem:[#allocation7 + $0xc98] sm:$0xff]
        %v1864 = vld [vmem:[#allocation7 + $0xca0] sm:$0xff]
        %v1865 = vld [vmem:[#allocation7 + $0xca8] sm:$0xff]
        %v1866 = vld [vmem:[#allocation7 + $0xcb0] sm:$0xff]
        %v1867 = vld [vmem:[#allocation7 + $0xcb8] sm:$0xff]
        %v1868 = vld [vmem:[#allocation7 + $0xcc0] sm:$0xff]
        %v1869 = vld [vmem:[#allocation7 + $0xcc8] sm:$0xff]
        %v1870 = vld [vmem:[#allocation7 + $0xcd0] sm:$0xff]
        %v1871 = vld [vmem:[#allocation7 + $0xcd8] sm:$0xff]
        %v1872 = vld [vmem:[#allocation7 + $0xce0] sm:$0xff]
        %v1873 = vld [vmem:[#allocation7 + $0xce8] sm:$0xff]
        %v1874 = vld [vmem:[#allocation7 + $0xcf0] sm:$0xff]
        %v1875 = vld [vmem:[#allocation7 + $0xcf8] sm:$0xff]
        %v1876 = vld [vmem:[#allocation7 + $0xd00] sm:$0xff]
        %v1877 = vld [vmem:[#allocation7 + $0xd08] sm:$0xff]
        %v1878 = vld [vmem:[#allocation7 + $0xd10] sm:$0xff]
        %v1879 = vld [vmem:[#allocation7 + $0xd18] sm:$0xff]
        %v1880 = vld [vmem:[#allocation7 + $0xd20] sm:$0xff]
        %v1881 = vld [vmem:[#allocation7 + $0xd28] sm:$0xff]
        %v1882 = vld [vmem:[#allocation7 + $0xd30] sm:$0xff]
        %v1883 = vld [vmem:[#allocation7 + $0xd38] sm:$0xff]
        %v1884 = vld [vmem:[#allocation7 + $0xd40] sm:$0xff]
        %v1885 = vld [vmem:[#allocation7 + $0xd48] sm:$0xff]
        %v1886 = vld [vmem:[#allocation7 + $0xd50] sm:$0xff]
        %v1887 = vld [vmem:[#allocation7 + $0xd58] sm:$0xff]
        %v1888 = vld [vmem:[#allocation7 + $0xd60] sm:$0xff]
        %v1889 = vld [vmem:[#allocation7 + $0xd68] sm:$0xff]
        %v1890 = vld [vmem:[#allocation7 + $0xd70] sm:$0xff]
        %v1891 = vld [vmem:[#allocation7 + $0xd78] sm:$0xff]
        %v1892 = vld [vmem:[#allocation7 + $0xd80] sm:$0xff]
        %v1893 = vld [vmem:[#allocation7 + $0xd88] sm:$0xff]
        %v1894 = vld [vmem:[#allocation7 + $0xd90] sm:$0xff]
        %v1895 = vld [vmem:[#allocation7 + $0xd98] sm:$0xff]
        %v1896 = vld [vmem:[#allocation7 + $0xda0] sm:$0xff]
        %v1897 = vld [vmem:[#allocation7 + $0xda8] sm:$0xff]
        %v1898 = vld [vmem:[#allocation7 + $0xdb0] sm:$0xff]
        %v1899 = vld [vmem:[#allocation7 + $0xdb8] sm:$0xff]
        %v1900 = vld [vmem:[#allocation7 + $0xdc0] sm:$0xff]
        %v1901 = vld [vmem:[#allocation7 + $0xdc8] sm:$0xff]
        %v1902 = vld [vmem:[#allocation7 + $0xdd0] sm:$0xff]
        %v1903 = vld [vmem:[#allocation7 + $0xdd8] sm:$0xff]
        %v1904 = vld [vmem:[#allocation7 + $0xde0] sm:$0xff]
        %v1905 = vld [vmem:[#allocation7 + $0xde8] sm:$0xff]
        %v1906 = vld [vmem:[#allocation7 + $0xdf0] sm:$0xff]
        %v1907 = vld [vmem:[#allocation7 + $0xdf8] sm:$0xff]
        %v1908 = vld [vmem:[#allocation8] sm:$0xff]
        %v1910 = vlaneseq
        %v1911 = vshrl.u32 %v1910, 7
        %v1912 = vsub.s32 0, %v1911
        %v1913 = vrot.slane %v1908, %v1912
        %v1914 = vlaneseq
        %v1915 = vshrl.u32 %v1914, 7
        %v1916 = vsub.s32 1, %v1915
        %v1917 = vrot.slane %v1908, %v1916
        %v1918 = vlaneseq
        %v1919 = vshrl.u32 %v1918, 7
        %v1920 = vsub.s32 2, %v1919
        %v1921 = vrot.slane %v1908, %v1920
        %v1922 = vlaneseq
        %v1923 = vshrl.u32 %v1922, 7
        %v1924 = vsub.s32 3, %v1923
        %v1925 = vrot.slane %v1908, %v1924
        %v1926 = vlaneseq
        %v1927 = vshrl.u32 %v1926, 7
        %v1928 = vsub.s32 4, %v1927
        %v1929 = vrot.slane %v1908, %v1928
        %v1930 = vlaneseq
        %v1931 = vshrl.u32 %v1930, 7
        %v1932 = vsub.s32 5, %v1931
        %v1933 = vrot.slane %v1908, %v1932
        %v1934 = vlaneseq
        %v1935 = vshrl.u32 %v1934, 7
        %v1936 = vsub.s32 6, %v1935
        %v1937 = vrot.slane %v1908, %v1936
        %v1938 = vlaneseq
        %v1939 = vshrl.u32 %v1938, 7
        %v1940 = vsub.s32 7, %v1939
        %v1941 = vrot.slane %v1908, %v1940
        %v2398 = vunpack.c.l.b16 %v1460
        %v2399 = vunpack.c.h.b16 %v1460
        %v2400 = vunpack.c.l.b16 %v1461
        %v2401 = vunpack.c.h.b16 %v1461
        %v2402 = vunpack.c.l.b16 %v1462
        %v2403 = vunpack.c.h.b16 %v1462
        %v2404 = vunpack.c.l.b16 %v1463
        %v2405 = vunpack.c.h.b16 %v1463
        %v2406 = vunpack.c.l.b16 %v1464
        %v2407 = vunpack.c.h.b16 %v1464
        %v2408 = vunpack.c.l.b16 %v1465
        %v2409 = vunpack.c.h.b16 %v1465
        %v2410 = vunpack.c.l.b16 %v1466
        %v2411 = vunpack.c.h.b16 %v1466
        %v2412 = vunpack.c.l.b16 %v1467
        %v2413 = vunpack.c.h.b16 %v1467
        %v2414 = vunpack.c.l.b16 %v1468
        %v2415 = vunpack.c.h.b16 %v1468
        %v2416 = vunpack.c.l.b16 %v1469
        %v2417 = vunpack.c.h.b16 %v1469
        %v2418 = vunpack.c.l.b16 %v1470
        %v2419 = vunpack.c.h.b16 %v1470
        %v2420 = vunpack.c.l.b16 %v1471
        %v2421 = vunpack.c.h.b16 %v1471
        %v2422 = vunpack.c.l.b16 %v1472
        %v2423 = vunpack.c.h.b16 %v1472
        %v2424 = vunpack.c.l.b16 %v1473
        %v2425 = vunpack.c.h.b16 %v1473
        %v2426 = vunpack.c.l.b16 %v1474
        %v2427 = vunpack.c.h.b16 %v1474
        %v2428 = vunpack.c.l.b16 %v1475
        %v2429 = vunpack.c.h.b16 %v1475
        %v2430 = vunpack.c.l.b16 %v1476
        %v2431 = vunpack.c.h.b16 %v1476
        %v2432 = vunpack.c.l.b16 %v1477
        %v2433 = vunpack.c.h.b16 %v1477
        %v2434 = vunpack.c.l.b16 %v1478
        %v2435 = vunpack.c.h.b16 %v1478
        %v2436 = vunpack.c.l.b16 %v1479
        %v2437 = vunpack.c.h.b16 %v1479
        %v2438 = vunpack.c.l.b16 %v1480
        %v2439 = vunpack.c.h.b16 %v1480
        %v2440 = vunpack.c.l.b16 %v1481
        %v2441 = vunpack.c.h.b16 %v1481
        %v2442 = vunpack.c.l.b16 %v1482
        %v2443 = vunpack.c.h.b16 %v1482
        %v2444 = vunpack.c.l.b16 %v1483
        %v2445 = vunpack.c.h.b16 %v1483
        %v2446 = vunpack.c.l.b16 %v1484
        %v2447 = vunpack.c.h.b16 %v1484
        %v2448 = vunpack.c.l.b16 %v1485
        %v2449 = vunpack.c.h.b16 %v1485
        %v2450 = vunpack.c.l.b16 %v1486
        %v2451 = vunpack.c.h.b16 %v1486
        %v2452 = vunpack.c.l.b16 %v1487
        %v2453 = vunpack.c.h.b16 %v1487
        %v2454 = vunpack.c.l.b16 %v1488
        %v2455 = vunpack.c.h.b16 %v1488
        %v2456 = vunpack.c.l.b16 %v1489
        %v2457 = vunpack.c.h.b16 %v1489
        %v2458 = vunpack.c.l.b16 %v1490
        %v2459 = vunpack.c.h.b16 %v1490
        %v2460 = vunpack.c.l.b16 %v1491
        %v2461 = vunpack.c.h.b16 %v1491
        %v2462 = vunpack.c.l.b16 %v1492
        %v2463 = vunpack.c.h.b16 %v1492
        %v2464 = vunpack.c.l.b16 %v1493
        %v2465 = vunpack.c.h.b16 %v1493
        %v2466 = vunpack.c.l.b16 %v1494
        %v2467 = vunpack.c.h.b16 %v1494
        %v2468 = vunpack.c.l.b16 %v1495
        %v2469 = vunpack.c.h.b16 %v1495
        %v2470 = vunpack.c.l.b16 %v1496
        %v2471 = vunpack.c.h.b16 %v1496
        %v2472 = vunpack.c.l.b16 %v1497
        %v2473 = vunpack.c.h.b16 %v1497
        %v2474 = vunpack.c.l.b16 %v1498
        %v2475 = vunpack.c.h.b16 %v1498
        %v2476 = vunpack.c.l.b16 %v1499
        %v2477 = vunpack.c.h.b16 %v1499
        %v2478 = vunpack.c.l.b16 %v1500
        %v2479 = vunpack.c.h.b16 %v1500
        %v2480 = vunpack.c.l.b16 %v1501
        %v2481 = vunpack.c.h.b16 %v1501
        %v2482 = vunpack.c.l.b16 %v1502
        %v2483 = vunpack.c.h.b16 %v1502
        %v2484 = vunpack.c.l.b16 %v1503
        %v2485 = vunpack.c.h.b16 %v1503
        %v2486 = vunpack.c.l.b16 %v1504
        %v2487 = vunpack.c.h.b16 %v1504
        %v2488 = vunpack.c.l.b16 %v1505
        %v2489 = vunpack.c.h.b16 %v1505
        %v2490 = vunpack.c.l.b16 %v1506
        %v2491 = vunpack.c.h.b16 %v1506
        %v2492 = vunpack.c.l.b16 %v1507
        %v2493 = vunpack.c.h.b16 %v1507
        %v2494 = vunpack.c.l.b16 %v1508
        %v2495 = vunpack.c.h.b16 %v1508
        %v2496 = vunpack.c.l.b16 %v1509
        %v2497 = vunpack.c.h.b16 %v1509
        %v2498 = vunpack.c.l.b16 %v1510
        %v2499 = vunpack.c.h.b16 %v1510
        %v2500 = vunpack.c.l.b16 %v1511
        %v2501 = vunpack.c.h.b16 %v1511
        %v2502 = vunpack.c.l.b16 %v1512
        %v2503 = vunpack.c.h.b16 %v1512
        %v2504 = vunpack.c.l.b16 %v1513
        %v2505 = vunpack.c.h.b16 %v1513
        %v2506 = vunpack.c.l.b16 %v1514
        %v2507 = vunpack.c.h.b16 %v1514
        %v2508 = vunpack.c.l.b16 %v1515
        %v2509 = vunpack.c.h.b16 %v1515
        %v2510 = vunpack.c.l.b16 %v1516
        %v2511 = vunpack.c.h.b16 %v1516
        %v2512 = vunpack.c.l.b16 %v1517
        %v2513 = vunpack.c.h.b16 %v1517
        %v2514 = vunpack.c.l.b16 %v1518
        %v2515 = vunpack.c.h.b16 %v1518
        %v2516 = vunpack.c.l.b16 %v1519
        %v2517 = vunpack.c.h.b16 %v1519
        %v2518 = vunpack.c.l.b16 %v1520
        %v2519 = vunpack.c.h.b16 %v1520
        %v2520 = vunpack.c.l.b16 %v1521
        %v2521 = vunpack.c.h.b16 %v1521
        %v2522 = vunpack.c.l.b16 %v1522
        %v2523 = vunpack.c.h.b16 %v1522
        %v2524 = vunpack.c.l.b16 %v1523
        %v2525 = vunpack.c.h.b16 %v1523
        %v2526 = vunpack.c.l.b16 %v1524
        %v2527 = vunpack.c.h.b16 %v1524
        %v2528 = vunpack.c.l.b16 %v1525
        %v2529 = vunpack.c.h.b16 %v1525
        %v2530 = vunpack.c.l.b16 %v1526
        %v2531 = vunpack.c.h.b16 %v1526
        %v2532 = vunpack.c.l.b16 %v1527
        %v2533 = vunpack.c.h.b16 %v1527
        %v2534 = vunpack.c.l.b16 %v1528
        %v2535 = vunpack.c.h.b16 %v1528
        %v2536 = vunpack.c.l.b16 %v1529
        %v2537 = vunpack.c.h.b16 %v1529
        %v2538 = vunpack.c.l.b16 %v1530
        %v2539 = vunpack.c.h.b16 %v1530
        %v2540 = vunpack.c.l.b16 %v1531
        %v2541 = vunpack.c.h.b16 %v1531
        %v2542 = vunpack.c.l.b16 %v1532
        %v2543 = vunpack.c.h.b16 %v1532
        %v2544 = vunpack.c.l.b16 %v1533
        %v2545 = vunpack.c.h.b16 %v1533
        %v2546 = vunpack.c.l.b16 %v1534
        %v2547 = vunpack.c.h.b16 %v1534
        %v2548 = vunpack.c.l.b16 %v1535
        %v2549 = vunpack.c.h.b16 %v1535
        %v2550 = vunpack.c.l.b16 %v1536
        %v2551 = vunpack.c.h.b16 %v1536
        %v2552 = vunpack.c.l.b16 %v1537
        %v2553 = vunpack.c.h.b16 %v1537
        %v2554 = vunpack.c.l.b16 %v1538
        %v2555 = vunpack.c.h.b16 %v1538
        %v2556 = vunpack.c.l.b16 %v1539
        %v2557 = vunpack.c.h.b16 %v1539
        %v2558 = vunpack.c.l.b16 %v1540
        %v2559 = vunpack.c.h.b16 %v1540
        %v2560 = vunpack.c.l.b16 %v1541
        %v2561 = vunpack.c.h.b16 %v1541
        %v2562 = vunpack.c.l.b16 %v1542
        %v2563 = vunpack.c.h.b16 %v1542
        %v2564 = vunpack.c.l.b16 %v1543
        %v2565 = vunpack.c.h.b16 %v1543
        %v2566 = vunpack.c.l.b16 %v1544
        %v2567 = vunpack.c.h.b16 %v1544
        %v2568 = vunpack.c.l.b16 %v1545
        %v2569 = vunpack.c.h.b16 %v1545
        %v2570 = vunpack.c.l.b16 %v1546
        %v2571 = vunpack.c.h.b16 %v1546
        %v2572 = vunpack.c.l.b16 %v1547
        %v2573 = vunpack.c.h.b16 %v1547
        %v2574 = vunpack.c.l.b16 %v1548
        %v2575 = vunpack.c.h.b16 %v1548
        %v2576 = vunpack.c.l.b16 %v1549
        %v2577 = vunpack.c.h.b16 %v1549
        %v2578 = vunpack.c.l.b16 %v1550
        %v2579 = vunpack.c.h.b16 %v1550
        %v2580 = vunpack.c.l.b16 %v1551
        %v2581 = vunpack.c.h.b16 %v1551
        %v2582 = vunpack.c.l.b16 %v1552
        %v2583 = vunpack.c.h.b16 %v1552
        %v2584 = vunpack.c.l.b16 %v1553
        %v2585 = vunpack.c.h.b16 %v1553
        %v2586 = vunpack.c.l.b16 %v1554
        %v2587 = vunpack.c.h.b16 %v1554
        %v2588 = vunpack.c.l.b16 %v1555
        %v2589 = vunpack.c.h.b16 %v1555
        %v2590 = vunpack.c.l.b16 %v1556
        %v2591 = vunpack.c.h.b16 %v1556
        %v2592 = vunpack.c.l.b16 %v1557
        %v2593 = vunpack.c.h.b16 %v1557
        %v2594 = vunpack.c.l.b16 %v1558
        %v2595 = vunpack.c.h.b16 %v1558
        %v2596 = vunpack.c.l.b16 %v1559
        %v2597 = vunpack.c.h.b16 %v1559
        %v2598 = vunpack.c.l.b16 %v1560
        %v2599 = vunpack.c.h.b16 %v1560
        %v2600 = vunpack.c.l.b16 %v1561
        %v2601 = vunpack.c.h.b16 %v1561
        %v2602 = vunpack.c.l.b16 %v1562
        %v2603 = vunpack.c.h.b16 %v1562
        %v2604 = vunpack.c.l.b16 %v1563
        %v2605 = vunpack.c.h.b16 %v1563
        %v2606 = vunpack.c.l.b16 %v1564
        %v2607 = vunpack.c.h.b16 %v1564
        %v2608 = vunpack.c.l.b16 %v1565
        %v2609 = vunpack.c.h.b16 %v1565
        %v2610 = vunpack.c.l.b16 %v1566
        %v2611 = vunpack.c.h.b16 %v1566
        %v2612 = vunpack.c.l.b16 %v1567
        %v2613 = vunpack.c.h.b16 %v1567
        %v2614 = vunpack.c.l.b16 %v1568
        %v2615 = vunpack.c.h.b16 %v1568
        %v2616 = vunpack.c.l.b16 %v1569
        %v2617 = vunpack.c.h.b16 %v1569
        %v2618 = vunpack.c.l.b16 %v1570
        %v2619 = vunpack.c.h.b16 %v1570
        %v2620 = vunpack.c.l.b16 %v1571
        %v2621 = vunpack.c.h.b16 %v1571
        %v2622 = vunpack.c.l.b16 %v1572
        %v2623 = vunpack.c.h.b16 %v1572
        %v2624 = vunpack.c.l.b16 %v1573
        %v2625 = vunpack.c.h.b16 %v1573
        %v2626 = vunpack.c.l.b16 %v1574
        %v2627 = vunpack.c.h.b16 %v1574
        %v2628 = vunpack.c.l.b16 %v1575
        %v2629 = vunpack.c.h.b16 %v1575
        %v2630 = vunpack.c.l.b16 %v1576
        %v2631 = vunpack.c.h.b16 %v1576
        %v2632 = vunpack.c.l.b16 %v1577
        %v2633 = vunpack.c.h.b16 %v1577
        %v2634 = vunpack.c.l.b16 %v1578
        %v2635 = vunpack.c.h.b16 %v1578
        %v2636 = vunpack.c.l.b16 %v1579
        %v2637 = vunpack.c.h.b16 %v1579
        %v2638 = vunpack.c.l.b16 %v1580
        %v2639 = vunpack.c.h.b16 %v1580
        %v2640 = vunpack.c.l.b16 %v1581
        %v2641 = vunpack.c.h.b16 %v1581
        %v2642 = vunpack.c.l.b16 %v1582
        %v2643 = vunpack.c.h.b16 %v1582
        %v2644 = vunpack.c.l.b16 %v1583
        %v2645 = vunpack.c.h.b16 %v1583
        %v2646 = vunpack.c.l.b16 %v1584
        %v2647 = vunpack.c.h.b16 %v1584
        %v2648 = vunpack.c.l.b16 %v1585
        %v2649 = vunpack.c.h.b16 %v1585
        %v2650 = vunpack.c.l.b16 %v1586
        %v2651 = vunpack.c.h.b16 %v1586
        %v2652 = vunpack.c.l.b16 %v1587
        %v2653 = vunpack.c.h.b16 %v1587
        %v2654 = vunpack.c.l.b16 %v1588
        %v2655 = vunpack.c.h.b16 %v1588
        %v2656 = vunpack.c.l.b16 %v1589
        %v2657 = vunpack.c.h.b16 %v1589
        %v2658 = vunpack.c.l.b16 %v1590
        %v2659 = vunpack.c.h.b16 %v1590
        %v2660 = vunpack.c.l.b16 %v1591
        %v2661 = vunpack.c.h.b16 %v1591
        %v2662 = vunpack.c.l.b16 %v1592
        %v2663 = vunpack.c.h.b16 %v1592
        %v2664 = vunpack.c.l.b16 %v1593
        %v2665 = vunpack.c.h.b16 %v1593
        %v2666 = vunpack.c.l.b16 %v1594
        %v2667 = vunpack.c.h.b16 %v1594
        %v2668 = vunpack.c.l.b16 %v1595
        %v2669 = vunpack.c.h.b16 %v1595
        %v2670 = vunpack.c.l.b16 %v1596
        %v2671 = vunpack.c.h.b16 %v1596
        %v2672 = vunpack.c.l.b16 %v1597
        %v2673 = vunpack.c.h.b16 %v1597
        %v2674 = vunpack.c.l.b16 %v1598
        %v2675 = vunpack.c.h.b16 %v1598
        %v2676 = vunpack.c.l.b16 %v1599
        %v2677 = vunpack.c.h.b16 %v1599
        %v2678 = vunpack.c.l.b16 %v1600
        %v2679 = vunpack.c.h.b16 %v1600
        %v2680 = vunpack.c.l.b16 %v1601
        %v2681 = vunpack.c.h.b16 %v1601
        %v2682 = vunpack.c.l.b16 %v1602
        %v2683 = vunpack.c.h.b16 %v1602
        %v2684 = vunpack.c.l.b16 %v1603
        %v2685 = vunpack.c.h.b16 %v1603
        %v2686 = vunpack.c.l.b16 %v1604
        %v2687 = vunpack.c.h.b16 %v1604
        %v2688 = vunpack.c.l.b16 %v1605
        %v2689 = vunpack.c.h.b16 %v1605
        %v2690 = vunpack.c.l.b16 %v1606
        %v2691 = vunpack.c.h.b16 %v1606
        %v2692 = vunpack.c.l.b16 %v1607
        %v2693 = vunpack.c.h.b16 %v1607
        %v2694 = vunpack.c.l.b16 %v1608
        %v2695 = vunpack.c.h.b16 %v1608
        %v2696 = vunpack.c.l.b16 %v1609
        %v2697 = vunpack.c.h.b16 %v1609
        %v2698 = vunpack.c.l.b16 %v1610
        %v2699 = vunpack.c.h.b16 %v1610
        %v2700 = vunpack.c.l.b16 %v1611
        %v2701 = vunpack.c.h.b16 %v1611
        %v2702 = vunpack.c.l.b16 %v1612
        %v2703 = vunpack.c.h.b16 %v1612
        %v2704 = vunpack.c.l.b16 %v1613
        %v2705 = vunpack.c.h.b16 %v1613
        %v2706 = vunpack.c.l.b16 %v1614
        %v2707 = vunpack.c.h.b16 %v1614
        %v2708 = vunpack.c.l.b16 %v1615
        %v2709 = vunpack.c.h.b16 %v1615
        %v2710 = vunpack.c.l.b16 %v1616
        %v2711 = vunpack.c.h.b16 %v1616
        %v2712 = vunpack.c.l.b16 %v1617
        %v2713 = vunpack.c.h.b16 %v1617
        %v2714 = vunpack.c.l.b16 %v1618
        %v2715 = vunpack.c.h.b16 %v1618
        %v2716 = vunpack.c.l.b16 %v1619
        %v2717 = vunpack.c.h.b16 %v1619
        %v2718 = vunpack.c.l.b16 %v1620
        %v2719 = vunpack.c.h.b16 %v1620
        %v2720 = vunpack.c.l.b16 %v1621
        %v2721 = vunpack.c.h.b16 %v1621
        %v2722 = vunpack.c.l.b16 %v1622
        %v2723 = vunpack.c.h.b16 %v1622
        %v2724 = vunpack.c.l.b16 %v1623
        %v2725 = vunpack.c.h.b16 %v1623
        %v2726 = vunpack.c.l.b16 %v1624
        %v2727 = vunpack.c.h.b16 %v1624
        %v2728 = vunpack.c.l.b16 %v1625
        %v2729 = vunpack.c.h.b16 %v1625
        %v2730 = vunpack.c.l.b16 %v1626
        %v2731 = vunpack.c.h.b16 %v1626
        %v2732 = vunpack.c.l.b16 %v1627
        %v2733 = vunpack.c.h.b16 %v1627
        %v2734 = vunpack.c.l.b16 %v1628
        %v2735 = vunpack.c.h.b16 %v1628
        %v2736 = vunpack.c.l.b16 %v1629
        %v2737 = vunpack.c.h.b16 %v1629
        %v2738 = vunpack.c.l.b16 %v1630
        %v2739 = vunpack.c.h.b16 %v1630
        %v2740 = vunpack.c.l.b16 %v1631
        %v2741 = vunpack.c.h.b16 %v1631
        %v2742 = vunpack.c.l.b16 %v1632
        %v2743 = vunpack.c.h.b16 %v1632
        %v2744 = vunpack.c.l.b16 %v1633
        %v2745 = vunpack.c.h.b16 %v1633
        %v2746 = vunpack.c.l.b16 %v1634
        %v2747 = vunpack.c.h.b16 %v1634
        %v2748 = vunpack.c.l.b16 %v1635
        %v2749 = vunpack.c.h.b16 %v1635
        %v2750 = vunpack.c.l.b16 %v1636
        %v2751 = vunpack.c.h.b16 %v1636
        %v2752 = vunpack.c.l.b16 %v1637
        %v2753 = vunpack.c.h.b16 %v1637
        %v2754 = vunpack.c.l.b16 %v1638
        %v2755 = vunpack.c.h.b16 %v1638
        %v2756 = vunpack.c.l.b16 %v1639
        %v2757 = vunpack.c.h.b16 %v1639
        %v2758 = vunpack.c.l.b16 %v1640
        %v2759 = vunpack.c.h.b16 %v1640
        %v2760 = vunpack.c.l.b16 %v1641
        %v2761 = vunpack.c.h.b16 %v1641
        %v2762 = vunpack.c.l.b16 %v1642
        %v2763 = vunpack.c.h.b16 %v1642
        %v2764 = vunpack.c.l.b16 %v1643
        %v2765 = vunpack.c.h.b16 %v1643
        %v2766 = vunpack.c.l.b16 %v1644
        %v2767 = vunpack.c.h.b16 %v1644
        %v2768 = vunpack.c.l.b16 %v1645
        %v2769 = vunpack.c.h.b16 %v1645
        %v2770 = vunpack.c.l.b16 %v1646
        %v2771 = vunpack.c.h.b16 %v1646
        %v2772 = vunpack.c.l.b16 %v1647
        %v2773 = vunpack.c.h.b16 %v1647
        %v2774 = vunpack.c.l.b16 %v1648
        %v2775 = vunpack.c.h.b16 %v1648
        %v2776 = vunpack.c.l.b16 %v1649
        %v2777 = vunpack.c.h.b16 %v1649
        %v2778 = vunpack.c.l.b16 %v1650
        %v2779 = vunpack.c.h.b16 %v1650
        %v2780 = vunpack.c.l.b16 %v1651
        %v2781 = vunpack.c.h.b16 %v1651
        %v2782 = vunpack.c.l.b16 %v1652
        %v2783 = vunpack.c.h.b16 %v1652
        %v2784 = vunpack.c.l.b16 %v1653
        %v2785 = vunpack.c.h.b16 %v1653
        %v2786 = vunpack.c.l.b16 %v1654
        %v2787 = vunpack.c.h.b16 %v1654
        %v2788 = vunpack.c.l.b16 %v1655
        %v2789 = vunpack.c.h.b16 %v1655
        %v2790 = vunpack.c.l.b16 %v1656
        %v2791 = vunpack.c.h.b16 %v1656
        %v2792 = vunpack.c.l.b16 %v1657
        %v2793 = vunpack.c.h.b16 %v1657
        %v2794 = vunpack.c.l.b16 %v1658
        %v2795 = vunpack.c.h.b16 %v1658
        %v2796 = vunpack.c.l.b16 %v1659
        %v2797 = vunpack.c.h.b16 %v1659
        %v2798 = vunpack.c.l.b16 %v1660
        %v2799 = vunpack.c.h.b16 %v1660
        %v2800 = vunpack.c.l.b16 %v1661
        %v2801 = vunpack.c.h.b16 %v1661
        %v2802 = vunpack.c.l.b16 %v1662
        %v2803 = vunpack.c.h.b16 %v1662
        %v2804 = vunpack.c.l.b16 %v1663
        %v2805 = vunpack.c.h.b16 %v1663
        %v2806 = vunpack.c.l.b16 %v1664
        %v2807 = vunpack.c.h.b16 %v1664
        %v2808 = vunpack.c.l.b16 %v1665
        %v2809 = vunpack.c.h.b16 %v1665
        %v2810 = vunpack.c.l.b16 %v1666
        %v2811 = vunpack.c.h.b16 %v1666
        %v2812 = vunpack.c.l.b16 %v1667
        %v2813 = vunpack.c.h.b16 %v1667
        %v2814 = vunpack.c.l.b16 %v1668
        %v2815 = vunpack.c.h.b16 %v1668
        %v2816 = vunpack.c.l.b16 %v1669
        %v2817 = vunpack.c.h.b16 %v1669
        %v2818 = vunpack.c.l.b16 %v1670
        %v2819 = vunpack.c.h.b16 %v1670
        %v2820 = vunpack.c.l.b16 %v1671
        %v2821 = vunpack.c.h.b16 %v1671
        %v2822 = vunpack.c.l.b16 %v1672
        %v2823 = vunpack.c.h.b16 %v1672
        %v2824 = vunpack.c.l.b16 %v1673
        %v2825 = vunpack.c.h.b16 %v1673
        %v2826 = vunpack.c.l.b16 %v1674
        %v2827 = vunpack.c.h.b16 %v1674
        %v2828 = vunpack.c.l.b16 %v1675
        %v2829 = vunpack.c.h.b16 %v1675
        %v2830 = vunpack.c.l.b16 %v1676
        %v2831 = vunpack.c.h.b16 %v1676
        %v2832 = vunpack.c.l.b16 %v1677
        %v2833 = vunpack.c.h.b16 %v1677
        %v2834 = vunpack.c.l.b16 %v1678
        %v2835 = vunpack.c.h.b16 %v1678
        %v2836 = vunpack.c.l.b16 %v1679
        %v2837 = vunpack.c.h.b16 %v1679
        %v2838 = vunpack.c.l.b16 %v1680
        %v2839 = vunpack.c.h.b16 %v1680
        %v2840 = vunpack.c.l.b16 %v1681
        %v2841 = vunpack.c.h.b16 %v1681
        %v2842 = vunpack.c.l.b16 %v1682
        %v2843 = vunpack.c.h.b16 %v1682
        %v2844 = vunpack.c.l.b16 %v1683
        %v2845 = vunpack.c.h.b16 %v1683
        %v2846 = vunpack.c.l.b16 %v1684
        %v2847 = vunpack.c.h.b16 %v1684
        %v2848 = vunpack.c.l.b16 %v1685
        %v2849 = vunpack.c.h.b16 %v1685
        %v2850 = vunpack.c.l.b16 %v1686
        %v2851 = vunpack.c.h.b16 %v1686
        %v2852 = vunpack.c.l.b16 %v1687
        %v2853 = vunpack.c.h.b16 %v1687
        %v2854 = vunpack.c.l.b16 %v1688
        %v2855 = vunpack.c.h.b16 %v1688
        %v2856 = vunpack.c.l.b16 %v1689
        %v2857 = vunpack.c.h.b16 %v1689
        %v2858 = vunpack.c.l.b16 %v1690
        %v2859 = vunpack.c.h.b16 %v1690
        %v2860 = vunpack.c.l.b16 %v1691
        %v2861 = vunpack.c.h.b16 %v1691
        %v2862 = vunpack.c.l.b16 %v1692
        %v2863 = vunpack.c.h.b16 %v1692
        %v2864 = vunpack.c.l.b16 %v1693
        %v2865 = vunpack.c.h.b16 %v1693
        %v2866 = vunpack.c.l.b16 %v1694
        %v2867 = vunpack.c.h.b16 %v1694
        %v2868 = vunpack.c.l.b16 %v1695
        %v2869 = vunpack.c.h.b16 %v1695
        %v2870 = vunpack.c.l.b16 %v1696
        %v2871 = vunpack.c.h.b16 %v1696
        %v2872 = vunpack.c.l.b16 %v1697
        %v2873 = vunpack.c.h.b16 %v1697
        %v2874 = vunpack.c.l.b16 %v1698
        %v2875 = vunpack.c.h.b16 %v1698
        %v2876 = vunpack.c.l.b16 %v1699
        %v2877 = vunpack.c.h.b16 %v1699
        %v2878 = vunpack.c.l.b16 %v1700
        %v2879 = vunpack.c.h.b16 %v1700
        %v2880 = vunpack.c.l.b16 %v1701
        %v2881 = vunpack.c.h.b16 %v1701
        %v2882 = vunpack.c.l.b16 %v1702
        %v2883 = vunpack.c.h.b16 %v1702
        %v2884 = vunpack.c.l.b16 %v1703
        %v2885 = vunpack.c.h.b16 %v1703
        %v2886 = vunpack.c.l.b16 %v1704
        %v2887 = vunpack.c.h.b16 %v1704
        %v2888 = vunpack.c.l.b16 %v1705
        %v2889 = vunpack.c.h.b16 %v1705
        %v2890 = vunpack.c.l.b16 %v1706
        %v2891 = vunpack.c.h.b16 %v1706
        %v2892 = vunpack.c.l.b16 %v1707
        %v2893 = vunpack.c.h.b16 %v1707
        %v2894 = vunpack.c.l.b16 %v1708
        %v2895 = vunpack.c.h.b16 %v1708
        %v2896 = vunpack.c.l.b16 %v1709
        %v2897 = vunpack.c.h.b16 %v1709
        %v2898 = vunpack.c.l.b16 %v1710
        %v2899 = vunpack.c.h.b16 %v1710
        %v2900 = vunpack.c.l.b16 %v1711
        %v2901 = vunpack.c.h.b16 %v1711
        %v2902 = vunpack.c.l.b16 %v1712
        %v2903 = vunpack.c.h.b16 %v1712
        %v2904 = vunpack.c.l.b16 %v1713
        %v2905 = vunpack.c.h.b16 %v1713
        %v2906 = vunpack.c.l.b16 %v1714
        %v2907 = vunpack.c.h.b16 %v1714
        %v2908 = vunpack.c.l.b16 %v1715
        %v2909 = vunpack.c.h.b16 %v1715
        %v2910 = vunpack.c.l.b16 %v1716
        %v2911 = vunpack.c.h.b16 %v1716
        %v2912 = vunpack.c.l.b16 %v1717
        %v2913 = vunpack.c.h.b16 %v1717
        %v2914 = vunpack.c.l.b16 %v1718
        %v2915 = vunpack.c.h.b16 %v1718
        %v2916 = vunpack.c.l.b16 %v1719
        %v2917 = vunpack.c.h.b16 %v1719
        %v2918 = vunpack.c.l.b16 %v1720
        %v2919 = vunpack.c.h.b16 %v1720
        %v2920 = vunpack.c.l.b16 %v1721
        %v2921 = vunpack.c.h.b16 %v1721
        %v2922 = vunpack.c.l.b16 %v1722
        %v2923 = vunpack.c.h.b16 %v1722
        %v2924 = vunpack.c.l.b16 %v1723
        %v2925 = vunpack.c.h.b16 %v1723
        %v2926 = vunpack.c.l.b16 %v1724
        %v2927 = vunpack.c.h.b16 %v1724
        %v2928 = vunpack.c.l.b16 %v1725
        %v2929 = vunpack.c.h.b16 %v1725
        %v2930 = vunpack.c.l.b16 %v1726
        %v2931 = vunpack.c.h.b16 %v1726
        %v2932 = vunpack.c.l.b16 %v1727
        %v2933 = vunpack.c.h.b16 %v1727
        %v2934 = vunpack.c.l.b16 %v1728
        %v2935 = vunpack.c.h.b16 %v1728
        %v2936 = vunpack.c.l.b16 %v1729
        %v2937 = vunpack.c.h.b16 %v1729
        %v2938 = vunpack.c.l.b16 %v1730
        %v2939 = vunpack.c.h.b16 %v1730
        %v2940 = vunpack.c.l.b16 %v1731
        %v2941 = vunpack.c.h.b16 %v1731
        %v2942 = vunpack.c.l.b16 %v1732
        %v2943 = vunpack.c.h.b16 %v1732
        %v2944 = vunpack.c.l.b16 %v1733
        %v2945 = vunpack.c.h.b16 %v1733
        %v2946 = vunpack.c.l.b16 %v1734
        %v2947 = vunpack.c.h.b16 %v1734
        %v2948 = vunpack.c.l.b16 %v1735
        %v2949 = vunpack.c.h.b16 %v1735
        %v2950 = vunpack.c.l.b16 %v1736
        %v2951 = vunpack.c.h.b16 %v1736
        %v2952 = vunpack.c.l.b16 %v1737
        %v2953 = vunpack.c.h.b16 %v1737
        %v2954 = vunpack.c.l.b16 %v1738
        %v2955 = vunpack.c.h.b16 %v1738
        %v2956 = vunpack.c.l.b16 %v1739
        %v2957 = vunpack.c.h.b16 %v1739
        %v2958 = vunpack.c.l.b16 %v1740
        %v2959 = vunpack.c.h.b16 %v1740
        %v2960 = vunpack.c.l.b16 %v1741
        %v2961 = vunpack.c.h.b16 %v1741
        %v2962 = vunpack.c.l.b16 %v1742
        %v2963 = vunpack.c.h.b16 %v1742
        %v2964 = vunpack.c.l.b16 %v1743
        %v2965 = vunpack.c.h.b16 %v1743
        %v2966 = vunpack.c.l.b16 %v1744
        %v2967 = vunpack.c.h.b16 %v1744
        %v2968 = vunpack.c.l.b16 %v1745
        %v2969 = vunpack.c.h.b16 %v1745
        %v2970 = vunpack.c.l.b16 %v1746
        %v2971 = vunpack.c.h.b16 %v1746
        %v2972 = vunpack.c.l.b16 %v1747
        %v2973 = vunpack.c.h.b16 %v1747
        %v2974 = vunpack.c.l.b16 %v1748
        %v2975 = vunpack.c.h.b16 %v1748
        %v2976 = vunpack.c.l.b16 %v1749
        %v2977 = vunpack.c.h.b16 %v1749
        %v2978 = vunpack.c.l.b16 %v1750
        %v2979 = vunpack.c.h.b16 %v1750
        %v2980 = vunpack.c.l.b16 %v1751
        %v2981 = vunpack.c.h.b16 %v1751
        %v2982 = vunpack.c.l.b16 %v1752
        %v2983 = vunpack.c.h.b16 %v1752
        %v2984 = vunpack.c.l.b16 %v1753
        %v2985 = vunpack.c.h.b16 %v1753
        %v2986 = vunpack.c.l.b16 %v1754
        %v2987 = vunpack.c.h.b16 %v1754
        %v2988 = vunpack.c.l.b16 %v1755
        %v2989 = vunpack.c.h.b16 %v1755
        %v2990 = vunpack.c.l.b16 %v1756
        %v2991 = vunpack.c.h.b16 %v1756
        %v2992 = vunpack.c.l.b16 %v1757
        %v2993 = vunpack.c.h.b16 %v1757
        %v2994 = vunpack.c.l.b16 %v1758
        %v2995 = vunpack.c.h.b16 %v1758
        %v2996 = vunpack.c.l.b16 %v1759
        %v2997 = vunpack.c.h.b16 %v1759
        %v2998 = vunpack.c.l.b16 %v1760
        %v2999 = vunpack.c.h.b16 %v1760
        %v3000 = vunpack.c.l.b16 %v1761
        %v3001 = vunpack.c.h.b16 %v1761
        %v3002 = vunpack.c.l.b16 %v1762
        %v3003 = vunpack.c.h.b16 %v1762
        %v3004 = vunpack.c.l.b16 %v1763
        %v3005 = vunpack.c.h.b16 %v1763
        %v3006 = vunpack.c.l.b16 %v1764
        %v3007 = vunpack.c.h.b16 %v1764
        %v3008 = vunpack.c.l.b16 %v1765
        %v3009 = vunpack.c.h.b16 %v1765
        %v3010 = vunpack.c.l.b16 %v1766
        %v3011 = vunpack.c.h.b16 %v1766
        %v3012 = vunpack.c.l.b16 %v1767
        %v3013 = vunpack.c.h.b16 %v1767
        %v3014 = vunpack.c.l.b16 %v1768
        %v3015 = vunpack.c.h.b16 %v1768
        %v3016 = vunpack.c.l.b16 %v1769
        %v3017 = vunpack.c.h.b16 %v1769
        %v3018 = vunpack.c.l.b16 %v1770
        %v3019 = vunpack.c.h.b16 %v1770
        %v3020 = vunpack.c.l.b16 %v1771
        %v3021 = vunpack.c.h.b16 %v1771
        %v3022 = vunpack.c.l.b16 %v1772
        %v3023 = vunpack.c.h.b16 %v1772
        %v3024 = vunpack.c.l.b16 %v1773
        %v3025 = vunpack.c.h.b16 %v1773
        %v3026 = vunpack.c.l.b16 %v1774
        %v3027 = vunpack.c.h.b16 %v1774
        %v3028 = vunpack.c.l.b16 %v1775
        %v3029 = vunpack.c.h.b16 %v1775
        %v3030 = vunpack.c.l.b16 %v1776
        %v3031 = vunpack.c.h.b16 %v1776
        %v3032 = vunpack.c.l.b16 %v1777
        %v3033 = vunpack.c.h.b16 %v1777
        %v3034 = vunpack.c.l.b16 %v1778
        %v3035 = vunpack.c.h.b16 %v1778
        %v3036 = vunpack.c.l.b16 %v1779
        %v3037 = vunpack.c.h.b16 %v1779
        %v3038 = vunpack.c.l.b16 %v1780
        %v3039 = vunpack.c.h.b16 %v1780
        %v3040 = vunpack.c.l.b16 %v1781
        %v3041 = vunpack.c.h.b16 %v1781
        %v3042 = vunpack.c.l.b16 %v1782
        %v3043 = vunpack.c.h.b16 %v1782
        %v3044 = vunpack.c.l.b16 %v1783
        %v3045 = vunpack.c.h.b16 %v1783
        %v3046 = vunpack.c.l.b16 %v1784
        %v3047 = vunpack.c.h.b16 %v1784
        %v3048 = vunpack.c.l.b16 %v1785
        %v3049 = vunpack.c.h.b16 %v1785
        %v3050 = vunpack.c.l.b16 %v1786
        %v3051 = vunpack.c.h.b16 %v1786
        %v3052 = vunpack.c.l.b16 %v1787
        %v3053 = vunpack.c.h.b16 %v1787
        %v3054 = vunpack.c.l.b16 %v1788
        %v3055 = vunpack.c.h.b16 %v1788
        %v3056 = vunpack.c.l.b16 %v1789
        %v3057 = vunpack.c.h.b16 %v1789
        %v3058 = vunpack.c.l.b16 %v1790
        %v3059 = vunpack.c.h.b16 %v1790
        %v3060 = vunpack.c.l.b16 %v1791
        %v3061 = vunpack.c.h.b16 %v1791
        %v3062 = vunpack.c.l.b16 %v1792
        %v3063 = vunpack.c.h.b16 %v1792
        %v3064 = vunpack.c.l.b16 %v1793
        %v3065 = vunpack.c.h.b16 %v1793
        %v3066 = vunpack.c.l.b16 %v1794
        %v3067 = vunpack.c.h.b16 %v1794
        %v3068 = vunpack.c.l.b16 %v1795
        %v3069 = vunpack.c.h.b16 %v1795
        %v3070 = vunpack.c.l.b16 %v1796
        %v3071 = vunpack.c.h.b16 %v1796
        %v3072 = vunpack.c.l.b16 %v1797
        %v3073 = vunpack.c.h.b16 %v1797
        %v3074 = vunpack.c.l.b16 %v1798
        %v3075 = vunpack.c.h.b16 %v1798
        %v3076 = vunpack.c.l.b16 %v1799
        %v3077 = vunpack.c.h.b16 %v1799
        %v3078 = vunpack.c.l.b16 %v1800
        %v3079 = vunpack.c.h.b16 %v1800
        %v3080 = vunpack.c.l.b16 %v1801
        %v3081 = vunpack.c.h.b16 %v1801
        %v3082 = vunpack.c.l.b16 %v1802
        %v3083 = vunpack.c.h.b16 %v1802
        %v3084 = vunpack.c.l.b16 %v1803
        %v3085 = vunpack.c.h.b16 %v1803
        %v3086 = vunpack.c.l.b16 %v1804
        %v3087 = vunpack.c.h.b16 %v1804
        %v3088 = vunpack.c.l.b16 %v1805
        %v3089 = vunpack.c.h.b16 %v1805
        %v3090 = vunpack.c.l.b16 %v1806
        %v3091 = vunpack.c.h.b16 %v1806
        %v3092 = vunpack.c.l.b16 %v1807
        %v3093 = vunpack.c.h.b16 %v1807
        %v3094 = vunpack.c.l.b16 %v1808
        %v3095 = vunpack.c.h.b16 %v1808
        %v3096 = vunpack.c.l.b16 %v1809
        %v3097 = vunpack.c.h.b16 %v1809
        %v3098 = vunpack.c.l.b16 %v1810
        %v3099 = vunpack.c.h.b16 %v1810
        %v3100 = vunpack.c.l.b16 %v1811
        %v3101 = vunpack.c.h.b16 %v1811
        %v3102 = vunpack.c.l.b16 %v1812
        %v3103 = vunpack.c.h.b16 %v1812
        %v3104 = vunpack.c.l.b16 %v1813
        %v3105 = vunpack.c.h.b16 %v1813
        %v3106 = vunpack.c.l.b16 %v1814
        %v3107 = vunpack.c.h.b16 %v1814
        %v3108 = vunpack.c.l.b16 %v1815
        %v3109 = vunpack.c.h.b16 %v1815
        %v3110 = vunpack.c.l.b16 %v1816
        %v3111 = vunpack.c.h.b16 %v1816
        %v3112 = vunpack.c.l.b16 %v1817
        %v3113 = vunpack.c.h.b16 %v1817
        %v3114 = vunpack.c.l.b16 %v1818
        %v3115 = vunpack.c.h.b16 %v1818
        %v3116 = vunpack.c.l.b16 %v1819
        %v3117 = vunpack.c.h.b16 %v1819
        %v3118 = vunpack.c.l.b16 %v1820
        %v3119 = vunpack.c.h.b16 %v1820
        %v3120 = vunpack.c.l.b16 %v1821
        %v3121 = vunpack.c.h.b16 %v1821
        %v3122 = vunpack.c.l.b16 %v1822
        %v3123 = vunpack.c.h.b16 %v1822
        %v3124 = vunpack.c.l.b16 %v1823
        %v3125 = vunpack.c.h.b16 %v1823
        %v3126 = vunpack.c.l.b16 %v1824
        %v3127 = vunpack.c.h.b16 %v1824
        %v3128 = vunpack.c.l.b16 %v1825
        %v3129 = vunpack.c.h.b16 %v1825
        %v3130 = vunpack.c.l.b16 %v1826
        %v3131 = vunpack.c.h.b16 %v1826
        %v3132 = vunpack.c.l.b16 %v1827
        %v3133 = vunpack.c.h.b16 %v1827
        %v3134 = vunpack.c.l.b16 %v1828
        %v3135 = vunpack.c.h.b16 %v1828
        %v3136 = vunpack.c.l.b16 %v1829
        %v3137 = vunpack.c.h.b16 %v1829
        %v3138 = vunpack.c.l.b16 %v1830
        %v3139 = vunpack.c.h.b16 %v1830
        %v3140 = vunpack.c.l.b16 %v1831
        %v3141 = vunpack.c.h.b16 %v1831
        %v3142 = vunpack.c.l.b16 %v1832
        %v3143 = vunpack.c.h.b16 %v1832
        %v3144 = vunpack.c.l.b16 %v1833
        %v3145 = vunpack.c.h.b16 %v1833
        %v3146 = vunpack.c.l.b16 %v1834
        %v3147 = vunpack.c.h.b16 %v1834
        %v3148 = vunpack.c.l.b16 %v1835
        %v3149 = vunpack.c.h.b16 %v1835
        %v3150 = vunpack.c.l.b16 %v1836
        %v3151 = vunpack.c.h.b16 %v1836
        %v3152 = vunpack.c.l.b16 %v1837
        %v3153 = vunpack.c.h.b16 %v1837
        %v3154 = vunpack.c.l.b16 %v1838
        %v3155 = vunpack.c.h.b16 %v1838
        %v3156 = vunpack.c.l.b16 %v1839
        %v3157 = vunpack.c.h.b16 %v1839
        %v3158 = vunpack.c.l.b16 %v1840
        %v3159 = vunpack.c.h.b16 %v1840
        %v3160 = vunpack.c.l.b16 %v1841
        %v3161 = vunpack.c.h.b16 %v1841
        %v3162 = vunpack.c.l.b16 %v1842
        %v3163 = vunpack.c.h.b16 %v1842
        %v3164 = vunpack.c.l.b16 %v1843
        %v3165 = vunpack.c.h.b16 %v1843
        %v3166 = vunpack.c.l.b16 %v1844
        %v3167 = vunpack.c.h.b16 %v1844
        %v3168 = vunpack.c.l.b16 %v1845
        %v3169 = vunpack.c.h.b16 %v1845
        %v3170 = vunpack.c.l.b16 %v1846
        %v3171 = vunpack.c.h.b16 %v1846
        %v3172 = vunpack.c.l.b16 %v1847
        %v3173 = vunpack.c.h.b16 %v1847
        %v3174 = vunpack.c.l.b16 %v1848
        %v3175 = vunpack.c.h.b16 %v1848
        %v3176 = vunpack.c.l.b16 %v1849
        %v3177 = vunpack.c.h.b16 %v1849
        %v3178 = vunpack.c.l.b16 %v1850
        %v3179 = vunpack.c.h.b16 %v1850
        %v3180 = vunpack.c.l.b16 %v1851
        %v3181 = vunpack.c.h.b16 %v1851
        %v3182 = vunpack.c.l.b16 %v1852
        %v3183 = vunpack.c.h.b16 %v1852
        %v3184 = vunpack.c.l.b16 %v1853
        %v3185 = vunpack.c.h.b16 %v1853
        %v3186 = vunpack.c.l.b16 %v1854
        %v3187 = vunpack.c.h.b16 %v1854
        %v3188 = vunpack.c.l.b16 %v1855
        %v3189 = vunpack.c.h.b16 %v1855
        %v3190 = vunpack.c.l.b16 %v1856
        %v3191 = vunpack.c.h.b16 %v1856
        %v3192 = vunpack.c.l.b16 %v1857
        %v3193 = vunpack.c.h.b16 %v1857
        %v3194 = vunpack.c.l.b16 %v1858
        %v3195 = vunpack.c.h.b16 %v1858
        %v3196 = vunpack.c.l.b16 %v1859
        %v3197 = vunpack.c.h.b16 %v1859
        %v3198 = vunpack.c.l.b16 %v1860
        %v3199 = vunpack.c.h.b16 %v1860
        %v3200 = vunpack.c.l.b16 %v1861
        %v3201 = vunpack.c.h.b16 %v1861
        %v3202 = vunpack.c.l.b16 %v1862
        %v3203 = vunpack.c.h.b16 %v1862
        %v3204 = vunpack.c.l.b16 %v1863
        %v3205 = vunpack.c.h.b16 %v1863
        %v3206 = vunpack.c.l.b16 %v1864
        %v3207 = vunpack.c.h.b16 %v1864
        %v3208 = vunpack.c.l.b16 %v1865
        %v3209 = vunpack.c.h.b16 %v1865
        %v3210 = vunpack.c.l.b16 %v1866
        %v3211 = vunpack.c.h.b16 %v1866
        %v3212 = vunpack.c.l.b16 %v1867
        %v3213 = vunpack.c.h.b16 %v1867
        %v3214 = vunpack.c.l.b16 %v1868
        %v3215 = vunpack.c.h.b16 %v1868
        %v3216 = vunpack.c.l.b16 %v1869
        %v3217 = vunpack.c.h.b16 %v1869
        %v3218 = vunpack.c.l.b16 %v1870
        %v3219 = vunpack.c.h.b16 %v1870
        %v3220 = vunpack.c.l.b16 %v1871
        %v3221 = vunpack.c.h.b16 %v1871
        %v3222 = vunpack.c.l.b16 %v1872
        %v3223 = vunpack.c.h.b16 %v1872
        %v3224 = vunpack.c.l.b16 %v1873
        %v3225 = vunpack.c.h.b16 %v1873
        %v3226 = vunpack.c.l.b16 %v1874
        %v3227 = vunpack.c.h.b16 %v1874
        %v3228 = vunpack.c.l.b16 %v1875
        %v3229 = vunpack.c.h.b16 %v1875
        %v3230 = vunpack.c.l.b16 %v1876
        %v3231 = vunpack.c.h.b16 %v1876
        %v3232 = vunpack.c.l.b16 %v1877
        %v3233 = vunpack.c.h.b16 %v1877
        %v3234 = vunpack.c.l.b16 %v1878
        %v3235 = vunpack.c.h.b16 %v1878
        %v3236 = vunpack.c.l.b16 %v1879
        %v3237 = vunpack.c.h.b16 %v1879
        %v3238 = vunpack.c.l.b16 %v1880
        %v3239 = vunpack.c.h.b16 %v1880
        %v3240 = vunpack.c.l.b16 %v1881
        %v3241 = vunpack.c.h.b16 %v1881
        %v3242 = vunpack.c.l.b16 %v1882
        %v3243 = vunpack.c.h.b16 %v1882
        %v3244 = vunpack.c.l.b16 %v1883
        %v3245 = vunpack.c.h.b16 %v1883
        %v3246 = vunpack.c.l.b16 %v1884
        %v3247 = vunpack.c.h.b16 %v1884
        %v3248 = vunpack.c.l.b16 %v1885
        %v3249 = vunpack.c.h.b16 %v1885
        %v3250 = vunpack.c.l.b16 %v1886
        %v3251 = vunpack.c.h.b16 %v1886
        %v3252 = vunpack.c.l.b16 %v1887
        %v3253 = vunpack.c.h.b16 %v1887
        %v3254 = vunpack.c.l.b16 %v1888
        %v3255 = vunpack.c.h.b16 %v1888
        %v3256 = vunpack.c.l.b16 %v1889
        %v3257 = vunpack.c.h.b16 %v1889
        %v3258 = vunpack.c.l.b16 %v1890
        %v3259 = vunpack.c.h.b16 %v1890
        %v3260 = vunpack.c.l.b16 %v1891
        %v3261 = vunpack.c.h.b16 %v1891
        %v3262 = vunpack.c.l.b16 %v1892
        %v3263 = vunpack.c.h.b16 %v1892
        %v3264 = vunpack.c.l.b16 %v1893
        %v3265 = vunpack.c.h.b16 %v1893
        %v3266 = vunpack.c.l.b16 %v1894
        %v3267 = vunpack.c.h.b16 %v1894
        %v3268 = vunpack.c.l.b16 %v1895
        %v3269 = vunpack.c.h.b16 %v1895
        %v3270 = vunpack.c.l.b16 %v1896
        %v3271 = vunpack.c.h.b16 %v1896
        %v3272 = vunpack.c.l.b16 %v1897
        %v3273 = vunpack.c.h.b16 %v1897
        %v3274 = vunpack.c.l.b16 %v1898
        %v3275 = vunpack.c.h.b16 %v1898
        %v3276 = vunpack.c.l.b16 %v1899
        %v3277 = vunpack.c.h.b16 %v1899
        %v3278 = vunpack.c.l.b16 %v1900
        %v3279 = vunpack.c.h.b16 %v1900
        %v3280 = vunpack.c.l.b16 %v1901
        %v3281 = vunpack.c.h.b16 %v1901
        %v3282 = vunpack.c.l.b16 %v1902
        %v3283 = vunpack.c.h.b16 %v1902
        %v3284 = vunpack.c.l.b16 %v1903
        %v3285 = vunpack.c.h.b16 %v1903
        %v3286 = vunpack.c.l.b16 %v1904
        %v3287 = vunpack.c.h.b16 %v1904
        %v3288 = vunpack.c.l.b16 %v1905
        %v3289 = vunpack.c.h.b16 %v1905
        %v3290 = vunpack.c.l.b16 %v1906
        %v3291 = vunpack.c.h.b16 %v1906
        %v3292 = vunpack.c.l.b16 %v1907
        %v3293 = vunpack.c.h.b16 %v1907
        %v3294 = vpack.c.b16 %v2406, %v2398
        %v3295 = vpack.c.b16 %v2407, %v2399
        %v3296 = vpack.c.b16 %v2408, %v2400
        %v3297 = vpack.c.b16 %v2409, %v2401
        %v3298 = vpack.c.b16 %v2410, %v2402
        %v3299 = vpack.c.b16 %v2411, %v2403
        %v3300 = vpack.c.b16 %v2412, %v2404
        %v3301 = vpack.c.b16 %v2413, %v2405
        %v3302 = vpack.c.b16 %v2422, %v2414
        %v3303 = vpack.c.b16 %v2423, %v2415
        %v3304 = vpack.c.b16 %v2424, %v2416
        %v3305 = vpack.c.b16 %v2425, %v2417
        %v3306 = vpack.c.b16 %v2426, %v2418
        %v3307 = vpack.c.b16 %v2427, %v2419
        %v3308 = vpack.c.b16 %v2428, %v2420
        %v3309 = vpack.c.b16 %v2429, %v2421
        %v3310 = vpack.c.b16 %v2438, %v2430
        %v3311 = vpack.c.b16 %v2439, %v2431
        %v3312 = vpack.c.b16 %v2440, %v2432
        %v3313 = vpack.c.b16 %v2441, %v2433
        %v3314 = vpack.c.b16 %v2442, %v2434
        %v3315 = vpack.c.b16 %v2443, %v2435
        %v3316 = vpack.c.b16 %v2444, %v2436
        %v3317 = vpack.c.b16 %v2445, %v2437
        %v3318 = vpack.c.b16 %v2454, %v2446
        %v3319 = vpack.c.b16 %v2455, %v2447
        %v3320 = vpack.c.b16 %v2456, %v2448
        %v3321 = vpack.c.b16 %v2457, %v2449
        %v3322 = vpack.c.b16 %v2458, %v2450
        %v3323 = vpack.c.b16 %v2459, %v2451
        %v3324 = vpack.c.b16 %v2460, %v2452
        %v3325 = vpack.c.b16 %v2461, %v2453
        %v3326 = vpack.c.b16 %v2470, %v2462
        %v3327 = vpack.c.b16 %v2471, %v2463
        %v3328 = vpack.c.b16 %v2472, %v2464
        %v3329 = vpack.c.b16 %v2473, %v2465
        %v3330 = vpack.c.b16 %v2474, %v2466
        %v3331 = vpack.c.b16 %v2475, %v2467
        %v3332 = vpack.c.b16 %v2476, %v2468
        %v3333 = vpack.c.b16 %v2477, %v2469
        %v3334 = vpack.c.b16 %v2486, %v2478
        %v3335 = vpack.c.b16 %v2487, %v2479
        %v3336 = vpack.c.b16 %v2488, %v2480
        %v3337 = vpack.c.b16 %v2489, %v2481
        %v3338 = vpack.c.b16 %v2490, %v2482
        %v3339 = vpack.c.b16 %v2491, %v2483
        %v3340 = vpack.c.b16 %v2492, %v2484
        %v3341 = vpack.c.b16 %v2493, %v2485
        %v3342 = vpack.c.b16 %v2502, %v2494
        %v3343 = vpack.c.b16 %v2503, %v2495
        %v3344 = vpack.c.b16 %v2504, %v2496
        %v3345 = vpack.c.b16 %v2505, %v2497
        %v3346 = vpack.c.b16 %v2506, %v2498
        %v3347 = vpack.c.b16 %v2507, %v2499
        %v3348 = vpack.c.b16 %v2508, %v2500
        %v3349 = vpack.c.b16 %v2509, %v2501
        %v3350 = vpack.c.b16 %v2518, %v2510
        %v3351 = vpack.c.b16 %v2519, %v2511
        %v3352 = vpack.c.b16 %v2520, %v2512
        %v3353 = vpack.c.b16 %v2521, %v2513
        %v3354 = vpack.c.b16 %v2522, %v2514
        %v3355 = vpack.c.b16 %v2523, %v2515
        %v3356 = vpack.c.b16 %v2524, %v2516
        %v3357 = vpack.c.b16 %v2525, %v2517
        %v3358 = vpack.c.b16 %v2534, %v2526
        %v3359 = vpack.c.b16 %v2535, %v2527
        %v3360 = vpack.c.b16 %v2536, %v2528
        %v3361 = vpack.c.b16 %v2537, %v2529
        %v3362 = vpack.c.b16 %v2538, %v2530
        %v3363 = vpack.c.b16 %v2539, %v2531
        %v3364 = vpack.c.b16 %v2540, %v2532
        %v3365 = vpack.c.b16 %v2541, %v2533
        %v3366 = vpack.c.b16 %v2550, %v2542
        %v3367 = vpack.c.b16 %v2551, %v2543
        %v3368 = vpack.c.b16 %v2552, %v2544
        %v3369 = vpack.c.b16 %v2553, %v2545
        %v3370 = vpack.c.b16 %v2554, %v2546
        %v3371 = vpack.c.b16 %v2555, %v2547
        %v3372 = vpack.c.b16 %v2556, %v2548
        %v3373 = vpack.c.b16 %v2557, %v2549
        %v3374 = vpack.c.b16 %v2566, %v2558
        %v3375 = vpack.c.b16 %v2567, %v2559
        %v3376 = vpack.c.b16 %v2568, %v2560
        %v3377 = vpack.c.b16 %v2569, %v2561
        %v3378 = vpack.c.b16 %v2570, %v2562
        %v3379 = vpack.c.b16 %v2571, %v2563
        %v3380 = vpack.c.b16 %v2572, %v2564
        %v3381 = vpack.c.b16 %v2573, %v2565
        %v3382 = vpack.c.b16 %v2582, %v2574
        %v3383 = vpack.c.b16 %v2583, %v2575
        %v3384 = vpack.c.b16 %v2584, %v2576
        %v3385 = vpack.c.b16 %v2585, %v2577
        %v3386 = vpack.c.b16 %v2586, %v2578
        %v3387 = vpack.c.b16 %v2587, %v2579
        %v3388 = vpack.c.b16 %v2588, %v2580
        %v3389 = vpack.c.b16 %v2589, %v2581
        %v3390 = vpack.c.b16 %v2598, %v2590
        %v3391 = vpack.c.b16 %v2599, %v2591
        %v3392 = vpack.c.b16 %v2600, %v2592
        %v3393 = vpack.c.b16 %v2601, %v2593
        %v3394 = vpack.c.b16 %v2602, %v2594
        %v3395 = vpack.c.b16 %v2603, %v2595
        %v3396 = vpack.c.b16 %v2604, %v2596
        %v3397 = vpack.c.b16 %v2605, %v2597
        %v3398 = vpack.c.b16 %v2614, %v2606
        %v3399 = vpack.c.b16 %v2615, %v2607
        %v3400 = vpack.c.b16 %v2616, %v2608
        %v3401 = vpack.c.b16 %v2617, %v2609
        %v3402 = vpack.c.b16 %v2618, %v2610
        %v3403 = vpack.c.b16 %v2619, %v2611
        %v3404 = vpack.c.b16 %v2620, %v2612
        %v3405 = vpack.c.b16 %v2621, %v2613
        %v3406 = vpack.c.b16 %v2630, %v2622
        %v3407 = vpack.c.b16 %v2631, %v2623
        %v3408 = vpack.c.b16 %v2632, %v2624
        %v3409 = vpack.c.b16 %v2633, %v2625
        %v3410 = vpack.c.b16 %v2634, %v2626
        %v3411 = vpack.c.b16 %v2635, %v2627
        %v3412 = vpack.c.b16 %v2636, %v2628
        %v3413 = vpack.c.b16 %v2637, %v2629
        %v3414 = vpack.c.b16 %v2646, %v2638
        %v3415 = vpack.c.b16 %v2647, %v2639
        %v3416 = vpack.c.b16 %v2648, %v2640
        %v3417 = vpack.c.b16 %v2649, %v2641
        %v3418 = vpack.c.b16 %v2650, %v2642
        %v3419 = vpack.c.b16 %v2651, %v2643
        %v3420 = vpack.c.b16 %v2652, %v2644
        %v3421 = vpack.c.b16 %v2653, %v2645
        %v3422 = vpack.c.b16 %v2662, %v2654
        %v3423 = vpack.c.b16 %v2663, %v2655
        %v3424 = vpack.c.b16 %v2664, %v2656
        %v3425 = vpack.c.b16 %v2665, %v2657
        %v3426 = vpack.c.b16 %v2666, %v2658
        %v3427 = vpack.c.b16 %v2667, %v2659
        %v3428 = vpack.c.b16 %v2668, %v2660
        %v3429 = vpack.c.b16 %v2669, %v2661
        %v3430 = vpack.c.b16 %v2678, %v2670
        %v3431 = vpack.c.b16 %v2679, %v2671
        %v3432 = vpack.c.b16 %v2680, %v2672
        %v3433 = vpack.c.b16 %v2681, %v2673
        %v3434 = vpack.c.b16 %v2682, %v2674
        %v3435 = vpack.c.b16 %v2683, %v2675
        %v3436 = vpack.c.b16 %v2684, %v2676
        %v3437 = vpack.c.b16 %v2685, %v2677
        %v3438 = vpack.c.b16 %v2694, %v2686
        %v3439 = vpack.c.b16 %v2695, %v2687
        %v3440 = vpack.c.b16 %v2696, %v2688
        %v3441 = vpack.c.b16 %v2697, %v2689
        %v3442 = vpack.c.b16 %v2698, %v2690
        %v3443 = vpack.c.b16 %v2699, %v2691
        %v3444 = vpack.c.b16 %v2700, %v2692
        %v3445 = vpack.c.b16 %v2701, %v2693
        %v3446 = vpack.c.b16 %v2710, %v2702
        %v3447 = vpack.c.b16 %v2711, %v2703
        %v3448 = vpack.c.b16 %v2712, %v2704
        %v3449 = vpack.c.b16 %v2713, %v2705
        %v3450 = vpack.c.b16 %v2714, %v2706
        %v3451 = vpack.c.b16 %v2715, %v2707
        %v3452 = vpack.c.b16 %v2716, %v2708
        %v3453 = vpack.c.b16 %v2717, %v2709
        %v3454 = vpack.c.b16 %v2726, %v2718
        %v3455 = vpack.c.b16 %v2727, %v2719
        %v3456 = vpack.c.b16 %v2728, %v2720
        %v3457 = vpack.c.b16 %v2729, %v2721
        %v3458 = vpack.c.b16 %v2730, %v2722
        %v3459 = vpack.c.b16 %v2731, %v2723
        %v3460 = vpack.c.b16 %v2732, %v2724
        %v3461 = vpack.c.b16 %v2733, %v2725
        %v3462 = vpack.c.b16 %v2742, %v2734
        %v3463 = vpack.c.b16 %v2743, %v2735
        %v3464 = vpack.c.b16 %v2744, %v2736
        %v3465 = vpack.c.b16 %v2745, %v2737
        %v3466 = vpack.c.b16 %v2746, %v2738
        %v3467 = vpack.c.b16 %v2747, %v2739
        %v3468 = vpack.c.b16 %v2748, %v2740
        %v3469 = vpack.c.b16 %v2749, %v2741
        %v3470 = vpack.c.b16 %v2758, %v2750
        %v3471 = vpack.c.b16 %v2759, %v2751
        %v3472 = vpack.c.b16 %v2760, %v2752
        %v3473 = vpack.c.b16 %v2761, %v2753
        %v3474 = vpack.c.b16 %v2762, %v2754
        %v3475 = vpack.c.b16 %v2763, %v2755
        %v3476 = vpack.c.b16 %v2764, %v2756
        %v3477 = vpack.c.b16 %v2765, %v2757
        %v3478 = vpack.c.b16 %v2774, %v2766
        %v3479 = vpack.c.b16 %v2775, %v2767
        %v3480 = vpack.c.b16 %v2776, %v2768
        %v3481 = vpack.c.b16 %v2777, %v2769
        %v3482 = vpack.c.b16 %v2778, %v2770
        %v3483 = vpack.c.b16 %v2779, %v2771
        %v3484 = vpack.c.b16 %v2780, %v2772
        %v3485 = vpack.c.b16 %v2781, %v2773
        %v3486 = vpack.c.b16 %v2790, %v2782
        %v3487 = vpack.c.b16 %v2791, %v2783
        %v3488 = vpack.c.b16 %v2792, %v2784
        %v3489 = vpack.c.b16 %v2793, %v2785
        %v3490 = vpack.c.b16 %v2794, %v2786
        %v3491 = vpack.c.b16 %v2795, %v2787
        %v3492 = vpack.c.b16 %v2796, %v2788
        %v3493 = vpack.c.b16 %v2797, %v2789
        %v3494 = vpack.c.b16 %v2806, %v2798
        %v3495 = vpack.c.b16 %v2807, %v2799
        %v3496 = vpack.c.b16 %v2808, %v2800
        %v3497 = vpack.c.b16 %v2809, %v2801
        %v3498 = vpack.c.b16 %v2810, %v2802
        %v3499 = vpack.c.b16 %v2811, %v2803
        %v3500 = vpack.c.b16 %v2812, %v2804
        %v3501 = vpack.c.b16 %v2813, %v2805
        %v3502 = vpack.c.b16 %v2822, %v2814
        %v3503 = vpack.c.b16 %v2823, %v2815
        %v3504 = vpack.c.b16 %v2824, %v2816
        %v3505 = vpack.c.b16 %v2825, %v2817
        %v3506 = vpack.c.b16 %v2826, %v2818
        %v3507 = vpack.c.b16 %v2827, %v2819
        %v3508 = vpack.c.b16 %v2828, %v2820
        %v3509 = vpack.c.b16 %v2829, %v2821
        %v3510 = vpack.c.b16 %v2838, %v2830
        %v3511 = vpack.c.b16 %v2839, %v2831
        %v3512 = vpack.c.b16 %v2840, %v2832
        %v3513 = vpack.c.b16 %v2841, %v2833
        %v3514 = vpack.c.b16 %v2842, %v2834
        %v3515 = vpack.c.b16 %v2843, %v2835
        %v3516 = vpack.c.b16 %v2844, %v2836
        %v3517 = vpack.c.b16 %v2845, %v2837
        %v3518 = vpack.c.b16 %v2854, %v2846
        %v3519 = vpack.c.b16 %v2855, %v2847
        %v3520 = vpack.c.b16 %v2856, %v2848
        %v3521 = vpack.c.b16 %v2857, %v2849
        %v3522 = vpack.c.b16 %v2858, %v2850
        %v3523 = vpack.c.b16 %v2859, %v2851
        %v3524 = vpack.c.b16 %v2860, %v2852
        %v3525 = vpack.c.b16 %v2861, %v2853
        %v3526 = vpack.c.b16 %v2870, %v2862
        %v3527 = vpack.c.b16 %v2871, %v2863
        %v3528 = vpack.c.b16 %v2872, %v2864
        %v3529 = vpack.c.b16 %v2873, %v2865
        %v3530 = vpack.c.b16 %v2874, %v2866
        %v3531 = vpack.c.b16 %v2875, %v2867
        %v3532 = vpack.c.b16 %v2876, %v2868
        %v3533 = vpack.c.b16 %v2877, %v2869
        %v3534 = vpack.c.b16 %v2886, %v2878
        %v3535 = vpack.c.b16 %v2887, %v2879
        %v3536 = vpack.c.b16 %v2888, %v2880
        %v3537 = vpack.c.b16 %v2889, %v2881
        %v3538 = vpack.c.b16 %v2890, %v2882
        %v3539 = vpack.c.b16 %v2891, %v2883
        %v3540 = vpack.c.b16 %v2892, %v2884
        %v3541 = vpack.c.b16 %v2893, %v2885
        %v3542 = vpack.c.b16 %v2902, %v2894
        %v3543 = vpack.c.b16 %v2903, %v2895
        %v3544 = vpack.c.b16 %v2904, %v2896
        %v3545 = vpack.c.b16 %v2905, %v2897
        %v3546 = vpack.c.b16 %v2906, %v2898
        %v3547 = vpack.c.b16 %v2907, %v2899
        %v3548 = vpack.c.b16 %v2908, %v2900
        %v3549 = vpack.c.b16 %v2909, %v2901
        %v3550 = vpack.c.b16 %v2918, %v2910
        %v3551 = vpack.c.b16 %v2919, %v2911
        %v3552 = vpack.c.b16 %v2920, %v2912
        %v3553 = vpack.c.b16 %v2921, %v2913
        %v3554 = vpack.c.b16 %v2922, %v2914
        %v3555 = vpack.c.b16 %v2923, %v2915
        %v3556 = vpack.c.b16 %v2924, %v2916
        %v3557 = vpack.c.b16 %v2925, %v2917
        %v3558 = vpack.c.b16 %v2934, %v2926
        %v3559 = vpack.c.b16 %v2935, %v2927
        %v3560 = vpack.c.b16 %v2936, %v2928
        %v3561 = vpack.c.b16 %v2937, %v2929
        %v3562 = vpack.c.b16 %v2938, %v2930
        %v3563 = vpack.c.b16 %v2939, %v2931
        %v3564 = vpack.c.b16 %v2940, %v2932
        %v3565 = vpack.c.b16 %v2941, %v2933
        %v3566 = vpack.c.b16 %v2950, %v2942
        %v3567 = vpack.c.b16 %v2951, %v2943
        %v3568 = vpack.c.b16 %v2952, %v2944
        %v3569 = vpack.c.b16 %v2953, %v2945
        %v3570 = vpack.c.b16 %v2954, %v2946
        %v3571 = vpack.c.b16 %v2955, %v2947
        %v3572 = vpack.c.b16 %v2956, %v2948
        %v3573 = vpack.c.b16 %v2957, %v2949
        %v3574 = vpack.c.b16 %v2966, %v2958
        %v3575 = vpack.c.b16 %v2967, %v2959
        %v3576 = vpack.c.b16 %v2968, %v2960
        %v3577 = vpack.c.b16 %v2969, %v2961
        %v3578 = vpack.c.b16 %v2970, %v2962
        %v3579 = vpack.c.b16 %v2971, %v2963
        %v3580 = vpack.c.b16 %v2972, %v2964
        %v3581 = vpack.c.b16 %v2973, %v2965
        %v3582 = vpack.c.b16 %v2982, %v2974
        %v3583 = vpack.c.b16 %v2983, %v2975
        %v3584 = vpack.c.b16 %v2984, %v2976
        %v3585 = vpack.c.b16 %v2985, %v2977
        %v3586 = vpack.c.b16 %v2986, %v2978
        %v3587 = vpack.c.b16 %v2987, %v2979
        %v3588 = vpack.c.b16 %v2988, %v2980
        %v3589 = vpack.c.b16 %v2989, %v2981
        %v3590 = vpack.c.b16 %v2998, %v2990
        %v3591 = vpack.c.b16 %v2999, %v2991
        %v3592 = vpack.c.b16 %v3000, %v2992
        %v3593 = vpack.c.b16 %v3001, %v2993
        %v3594 = vpack.c.b16 %v3002, %v2994
        %v3595 = vpack.c.b16 %v3003, %v2995
        %v3596 = vpack.c.b16 %v3004, %v2996
        %v3597 = vpack.c.b16 %v3005, %v2997
        %v3598 = vpack.c.b16 %v3014, %v3006
        %v3599 = vpack.c.b16 %v3015, %v3007
        %v3600 = vpack.c.b16 %v3016, %v3008
        %v3601 = vpack.c.b16 %v3017, %v3009
        %v3602 = vpack.c.b16 %v3018, %v3010
        %v3603 = vpack.c.b16 %v3019, %v3011
        %v3604 = vpack.c.b16 %v3020, %v3012
        %v3605 = vpack.c.b16 %v3021, %v3013
        %v3606 = vpack.c.b16 %v3030, %v3022
        %v3607 = vpack.c.b16 %v3031, %v3023
        %v3608 = vpack.c.b16 %v3032, %v3024
        %v3609 = vpack.c.b16 %v3033, %v3025
        %v3610 = vpack.c.b16 %v3034, %v3026
        %v3611 = vpack.c.b16 %v3035, %v3027
        %v3612 = vpack.c.b16 %v3036, %v3028
        %v3613 = vpack.c.b16 %v3037, %v3029
        %v3614 = vpack.c.b16 %v3046, %v3038
        %v3615 = vpack.c.b16 %v3047, %v3039
        %v3616 = vpack.c.b16 %v3048, %v3040
        %v3617 = vpack.c.b16 %v3049, %v3041
        %v3618 = vpack.c.b16 %v3050, %v3042
        %v3619 = vpack.c.b16 %v3051, %v3043
        %v3620 = vpack.c.b16 %v3052, %v3044
        %v3621 = vpack.c.b16 %v3053, %v3045
        %v3622 = vpack.c.b16 %v3062, %v3054
        %v3623 = vpack.c.b16 %v3063, %v3055
        %v3624 = vpack.c.b16 %v3064, %v3056
        %v3625 = vpack.c.b16 %v3065, %v3057
        %v3626 = vpack.c.b16 %v3066, %v3058
        %v3627 = vpack.c.b16 %v3067, %v3059
        %v3628 = vpack.c.b16 %v3068, %v3060
        %v3629 = vpack.c.b16 %v3069, %v3061
        %v3630 = vpack.c.b16 %v3078, %v3070
        %v3631 = vpack.c.b16 %v3079, %v3071
        %v3632 = vpack.c.b16 %v3080, %v3072
        %v3633 = vpack.c.b16 %v3081, %v3073
        %v3634 = vpack.c.b16 %v3082, %v3074
        %v3635 = vpack.c.b16 %v3083, %v3075
        %v3636 = vpack.c.b16 %v3084, %v3076
        %v3637 = vpack.c.b16 %v3085, %v3077
        %v3638 = vpack.c.b16 %v3094, %v3086
        %v3639 = vpack.c.b16 %v3095, %v3087
        %v3640 = vpack.c.b16 %v3096, %v3088
        %v3641 = vpack.c.b16 %v3097, %v3089
        %v3642 = vpack.c.b16 %v3098, %v3090
        %v3643 = vpack.c.b16 %v3099, %v3091
        %v3644 = vpack.c.b16 %v3100, %v3092
        %v3645 = vpack.c.b16 %v3101, %v3093
        %v3646 = vpack.c.b16 %v3110, %v3102
        %v3647 = vpack.c.b16 %v3111, %v3103
        %v3648 = vpack.c.b16 %v3112, %v3104
        %v3649 = vpack.c.b16 %v3113, %v3105
        %v3650 = vpack.c.b16 %v3114, %v3106
        %v3651 = vpack.c.b16 %v3115, %v3107
        %v3652 = vpack.c.b16 %v3116, %v3108
        %v3653 = vpack.c.b16 %v3117, %v3109
        %v3654 = vpack.c.b16 %v3126, %v3118
        %v3655 = vpack.c.b16 %v3127, %v3119
        %v3656 = vpack.c.b16 %v3128, %v3120
        %v3657 = vpack.c.b16 %v3129, %v3121
        %v3658 = vpack.c.b16 %v3130, %v3122
        %v3659 = vpack.c.b16 %v3131, %v3123
        %v3660 = vpack.c.b16 %v3132, %v3124
        %v3661 = vpack.c.b16 %v3133, %v3125
        %v3662 = vpack.c.b16 %v3142, %v3134
        %v3663 = vpack.c.b16 %v3143, %v3135
        %v3664 = vpack.c.b16 %v3144, %v3136
        %v3665 = vpack.c.b16 %v3145, %v3137
        %v3666 = vpack.c.b16 %v3146, %v3138
        %v3667 = vpack.c.b16 %v3147, %v3139
        %v3668 = vpack.c.b16 %v3148, %v3140
        %v3669 = vpack.c.b16 %v3149, %v3141
        %v3670 = vpack.c.b16 %v3158, %v3150
        %v3671 = vpack.c.b16 %v3159, %v3151
        %v3672 = vpack.c.b16 %v3160, %v3152
        %v3673 = vpack.c.b16 %v3161, %v3153
        %v3674 = vpack.c.b16 %v3162, %v3154
        %v3675 = vpack.c.b16 %v3163, %v3155
        %v3676 = vpack.c.b16 %v3164, %v3156
        %v3677 = vpack.c.b16 %v3165, %v3157
        %v3678 = vpack.c.b16 %v3174, %v3166
        %v3679 = vpack.c.b16 %v3175, %v3167
        %v3680 = vpack.c.b16 %v3176, %v3168
        %v3681 = vpack.c.b16 %v3177, %v3169
        %v3682 = vpack.c.b16 %v3178, %v3170
        %v3683 = vpack.c.b16 %v3179, %v3171
        %v3684 = vpack.c.b16 %v3180, %v3172
        %v3685 = vpack.c.b16 %v3181, %v3173
        %v3686 = vpack.c.b16 %v3190, %v3182
        %v3687 = vpack.c.b16 %v3191, %v3183
        %v3688 = vpack.c.b16 %v3192, %v3184
        %v3689 = vpack.c.b16 %v3193, %v3185
        %v3690 = vpack.c.b16 %v3194, %v3186
        %v3691 = vpack.c.b16 %v3195, %v3187
        %v3692 = vpack.c.b16 %v3196, %v3188
        %v3693 = vpack.c.b16 %v3197, %v3189
        %v3694 = vpack.c.b16 %v3206, %v3198
        %v3695 = vpack.c.b16 %v3207, %v3199
        %v3696 = vpack.c.b16 %v3208, %v3200
        %v3697 = vpack.c.b16 %v3209, %v3201
        %v3698 = vpack.c.b16 %v3210, %v3202
        %v3699 = vpack.c.b16 %v3211, %v3203
        %v3700 = vpack.c.b16 %v3212, %v3204
        %v3701 = vpack.c.b16 %v3213, %v3205
        %v3702 = vpack.c.b16 %v3222, %v3214
        %v3703 = vpack.c.b16 %v3223, %v3215
        %v3704 = vpack.c.b16 %v3224, %v3216
        %v3705 = vpack.c.b16 %v3225, %v3217
        %v3706 = vpack.c.b16 %v3226, %v3218
        %v3707 = vpack.c.b16 %v3227, %v3219
        %v3708 = vpack.c.b16 %v3228, %v3220
        %v3709 = vpack.c.b16 %v3229, %v3221
        %v3710 = vpack.c.b16 %v3238, %v3230
        %v3711 = vpack.c.b16 %v3239, %v3231
        %v3712 = vpack.c.b16 %v3240, %v3232
        %v3713 = vpack.c.b16 %v3241, %v3233
        %v3714 = vpack.c.b16 %v3242, %v3234
        %v3715 = vpack.c.b16 %v3243, %v3235
        %v3716 = vpack.c.b16 %v3244, %v3236
        %v3717 = vpack.c.b16 %v3245, %v3237
        %v3718 = vpack.c.b16 %v3254, %v3246
        %v3719 = vpack.c.b16 %v3255, %v3247
        %v3720 = vpack.c.b16 %v3256, %v3248
        %v3721 = vpack.c.b16 %v3257, %v3249
        %v3722 = vpack.c.b16 %v3258, %v3250
        %v3723 = vpack.c.b16 %v3259, %v3251
        %v3724 = vpack.c.b16 %v3260, %v3252
        %v3725 = vpack.c.b16 %v3261, %v3253
        %v3726 = vpack.c.b16 %v3270, %v3262
        %v3727 = vpack.c.b16 %v3271, %v3263
        %v3728 = vpack.c.b16 %v3272, %v3264
        %v3729 = vpack.c.b16 %v3273, %v3265
        %v3730 = vpack.c.b16 %v3274, %v3266
        %v3731 = vpack.c.b16 %v3275, %v3267
        %v3732 = vpack.c.b16 %v3276, %v3268
        %v3733 = vpack.c.b16 %v3277, %v3269
        %v3734 = vpack.c.b16 %v3286, %v3278
        %v3735 = vpack.c.b16 %v3287, %v3279
        %v3736 = vpack.c.b16 %v3288, %v3280
        %v3737 = vpack.c.b16 %v3289, %v3281
        %v3738 = vpack.c.b16 %v3290, %v3282
        %v3739 = vpack.c.b16 %v3291, %v3283
        %v3740 = vpack.c.b16 %v3292, %v3284
        %v3741 = vpack.c.b16 %v3293, %v3285
        %4190 = vmatprep.subr.bf16.mxu0 %v3351
        %4191 = vmatpush1.bf16.msra.mxu0 %v3350
        %4192 = vmatprep.subr.bf16.mxu0 %v3343
        %4193 = vmatpush1.bf16.msra.mxu0 %v3342
        %4194 = vmatprep.subr.bf16.mxu0 %v3335
        %4195 = vmatpush1.bf16.msra.mxu0 %v3334
        %4196 = vmatprep.subr.bf16.mxu0 %v3327
        %4197 = vmatpush1.bf16.msra.mxu0 %v3326
        %4198 = vmatprep.subr.bf16.mxu0 %v3319
        %4199 = vmatpush1.bf16.msra.mxu0 %v3318
        %4200 = vmatprep.subr.bf16.mxu0 %v3311
        %4201 = vmatpush1.bf16.msra.mxu0 %v3310
        %4202 = vmatprep.subr.bf16.mxu0 %v3303
        %4203 = vmatpush1.bf16.msra.mxu0 %v3302
        %4204 = vmatprep.subr.bf16.mxu0 %v3295
        %4205 = vmatpush1.bf16.msra.mxu0 %v3294
        %4206 = vmatprep.subr.bf16.mxu0 %v3415
        %4207 = vmatpush2.bf16.msra.mxu0 %v3414
        %4208 = vmatprep.subr.bf16.mxu0 %v3407
        %4209 = vmatpush2.bf16.msra.mxu0 %v3406
        %4210 = vmatprep.subr.bf16.mxu0 %v3399
        %4211 = vmatpush2.bf16.msra.mxu0 %v3398
        %4212 = vmatprep.subr.bf16.mxu0 %v3391
        %4213 = vmatpush2.bf16.msra.mxu0 %v3390
        %4214 = vmatprep.subr.bf16.mxu0 %v3383
        %4215 = vmatpush2.bf16.msra.mxu0 %v3382
        %4216 = vmatprep.subr.bf16.mxu0 %v3375
        %4217 = vmatpush2.bf16.msra.mxu0 %v3374
        %4218 = vmatprep.subr.bf16.mxu0 %v3367
        %4219 = vmatpush2.bf16.msra.mxu0 %v3366
        %4220 = vmatprep.subr.bf16.mxu0 %v3359
        %4221 = vmatpush2.bf16.msra.mxu0 %v3358
        %4222 = vmatprep.mubr.bf16.mxu0 %v1454
        %4223 = vmatmul.mubr.bf16.gmra.mxu0 %v1453
        %v4224 = vpop.f32.mrf.mxu0
        %v4225 = vadd.f32 %v1913, %v4224
        %v4226 = vpop.f32.mrf.mxu0
        %v4227 = vadd.f32 %v1917, %v4226
        %v4228 = vpop.f32.mrf.mxu0
        %v4229 = vadd.f32 %v1913, %v4228
        %v4230 = vpop.f32.mrf.mxu0
        %v4231 = vadd.f32 %v1917, %v4230
        %4232 = vdwg.mxu0
        %4233 = vmatprep.subr.bf16.mxu0 %v3479
        %4234 = vmatpush1.bf16.msra.mxu0 %v3478
        %4235 = vmatprep.subr.bf16.mxu0 %v3471
        %4236 = vmatpush1.bf16.msra.mxu0 %v3470
        %4237 = vmatprep.subr.bf16.mxu0 %v3463
        %4238 = vmatpush1.bf16.msra.mxu0 %v3462
        %4239 = vmatprep.subr.bf16.mxu0 %v3455
        %4240 = vmatpush1.bf16.msra.mxu0 %v3454
        %4241 = vmatprep.subr.bf16.mxu0 %v3447
        %4242 = vmatpush1.bf16.msra.mxu0 %v3446
        %4243 = vmatprep.subr.bf16.mxu0 %v3439
        %4244 = vmatpush1.bf16.msra.mxu0 %v3438
        %4245 = vmatprep.subr.bf16.mxu0 %v3431
        %4246 = vmatpush1.bf16.msra.mxu0 %v3430
        %4247 = vmatprep.subr.bf16.mxu0 %v3423
        %4248 = vmatpush1.bf16.msra.mxu0 %v3422
        %4249 = vmatprep.subr.bf16.mxu0 %v3543
        %4250 = vmatpush2.bf16.msra.mxu0 %v3542
        %4251 = vmatprep.subr.bf16.mxu0 %v3535
        %4252 = vmatpush2.bf16.msra.mxu0 %v3534
        %4253 = vmatprep.subr.bf16.mxu0 %v3527
        %4254 = vmatpush2.bf16.msra.mxu0 %v3526
        %4255 = vmatprep.subr.bf16.mxu0 %v3519
        %4256 = vmatpush2.bf16.msra.mxu0 %v3518
        %4257 = vmatprep.subr.bf16.mxu0 %v3511
        %4258 = vmatpush2.bf16.msra.mxu0 %v3510
        %4259 = vmatprep.subr.bf16.mxu0 %v3503
        %4260 = vmatpush2.bf16.msra.mxu0 %v3502
        %4261 = vmatprep.subr.bf16.mxu0 %v3495
        %4262 = vmatpush2.bf16.msra.mxu0 %v3494
        %4263 = vmatprep.subr.bf16.mxu0 %v3487
        %4264 = vmatpush2.bf16.msra.mxu0 %v3486
        %4265 = vmatprep.mubr.bf16.mxu0 %v1456
        %4266 = vmatmul.mubr.bf16.gmra.mxu0 %v1455
        %v4267 = vpop.f32.mrf.mxu0
        %v4268 = vadd.f32 %v4225, %v4267
        %v4269 = vpop.f32.mrf.mxu0
        %v4270 = vadd.f32 %v4227, %v4269
        %v4271 = vpop.f32.mrf.mxu0
        %v4272 = vadd.f32 %v4229, %v4271
        %v4273 = vpop.f32.mrf.mxu0
        %v4274 = vadd.f32 %v4231, %v4273
        %4275 = vdwg.mxu0
        %4276 = vmatprep.subr.bf16.mxu0 %v3607
        %4277 = vmatpush1.bf16.msra.mxu0 %v3606
        %4278 = vmatprep.subr.bf16.mxu0 %v3599
        %4279 = vmatpush1.bf16.msra.mxu0 %v3598
        %4280 = vmatprep.subr.bf16.mxu0 %v3591
        %4281 = vmatpush1.bf16.msra.mxu0 %v3590
        %4282 = vmatprep.subr.bf16.mxu0 %v3583
        %4283 = vmatpush1.bf16.msra.mxu0 %v3582
        %4284 = vmatprep.subr.bf16.mxu0 %v3575
        %4285 = vmatpush1.bf16.msra.mxu0 %v3574
        %4286 = vmatprep.subr.bf16.mxu0 %v3567
        %4287 = vmatpush1.bf16.msra.mxu0 %v3566
        %4288 = vmatprep.subr.bf16.mxu0 %v3559
        %4289 = vmatpush1.bf16.msra.mxu0 %v3558
        %4290 = vmatprep.subr.bf16.mxu0 %v3551
        %4291 = vmatpush1.bf16.msra.mxu0 %v3550
        %4292 = vmatprep.subr.bf16.mxu0 %v3671
        %4293 = vmatpush2.bf16.msra.mxu0 %v3670
        %4294 = vmatprep.subr.bf16.mxu0 %v3663
        %4295 = vmatpush2.bf16.msra.mxu0 %v3662
        %4296 = vmatprep.subr.bf16.mxu0 %v3655
        %4297 = vmatpush2.bf16.msra.mxu0 %v3654
        %4298 = vmatprep.subr.bf16.mxu0 %v3647
        %4299 = vmatpush2.bf16.msra.mxu0 %v3646
        %4300 = vmatprep.subr.bf16.mxu0 %v3639
        %4301 = vmatpush2.bf16.msra.mxu0 %v3638
        %4302 = vmatprep.subr.bf16.mxu0 %v3631
        %4303 = vmatpush2.bf16.msra.mxu0 %v3630
        %4304 = vmatprep.subr.bf16.mxu0 %v3623
        %4305 = vmatpush2.bf16.msra.mxu0 %v3622
        %4306 = vmatprep.subr.bf16.mxu0 %v3615
        %4307 = vmatpush2.bf16.msra.mxu0 %v3614
        %4308 = vmatprep.mubr.bf16.mxu0 %v1458
        %4309 = vmatmul.mubr.bf16.gmra.mxu0 %v1457
        %v4310 = vpop.f32.mrf.mxu0
        %v4311 = vadd.f32 %v4268, %v4310
        %v4312 = vpop.f32.mrf.mxu0
        %v4313 = vadd.f32 %v4270, %v4312
        %v4314 = vpop.f32.mrf.mxu0
        %v4315 = vadd.f32 %v4272, %v4314
        %v4316 = vpop.f32.mrf.mxu0
        %v4317 = vadd.f32 %v4274, %v4316
        %4318 = vdwg.mxu0
        %4319 = vmatprep.subr.bf16.mxu0 %v3735
        %4320 = vmatpush1.bf16.msra.mxu0 %v3734
        %4321 = vmatprep.subr.bf16.mxu0 %v3727
        %4322 = vmatpush1.bf16.msra.mxu0 %v3726
        %4323 = vmatprep.subr.bf16.mxu0 %v3719
        %4324 = vmatpush1.bf16.msra.mxu0 %v3718
        %4325 = vmatprep.subr.bf16.mxu0 %v3711
        %4326 = vmatpush1.bf16.msra.mxu0 %v3710
        %4327 = vmatprep.subr.bf16.mxu0 %v3703
        %4328 = vmatpush1.bf16.msra.mxu0 %v3702
        %4329 = vmatprep.subr.bf16.mxu0 %v3695
        %4330 = vmatpush1.bf16.msra.mxu0 %v3694
        %4331 = vmatprep.subr.bf16.mxu0 %v3687
        %4332 = vmatpush1.bf16.msra.mxu0 %v3686
        %4333 = vmatprep.subr.bf16.mxu0 %v3679
        %4334 = vmatpush1.bf16.msra.mxu0 %v3678
        %4335 = vmatprep.subr.bf16.mxu0 0
        %4336 = vmatpush2.bf16.msra.mxu0 0
        %4337 = vmatprep.subr.bf16.mxu0 0
        %4338 = vmatpush2.bf16.msra.mxu0 0
        %4339 = vmatprep.subr.bf16.mxu0 0
        %4340 = vmatpush2.bf16.msra.mxu0 0
        %4341 = vmatprep.subr.bf16.mxu0 0
        %4342 = vmatpush2.bf16.msra.mxu0 0
        %4343 = vmatprep.subr.bf16.mxu0 0
        %4344 = vmatpush2.bf16.msra.mxu0 0
        %4345 = vmatprep.subr.bf16.mxu0 0
        %4346 = vmatpush2.bf16.msra.mxu0 0
        %4347 = vmatprep.subr.bf16.mxu0 0
        %4348 = vmatpush2.bf16.msra.mxu0 0
        %4349 = vmatprep.subr.bf16.mxu0 0
        %4350 = vmatpush2.bf16.msra.mxu0 0
        %4351 = vmatprep.mubr.bf16.mxu0 0
        %4352 = vmatmul.mubr.bf16.gmra.mxu0 %v1459
        %v4353 = vpop.f32.mrf.mxu0
        %v4354 = vadd.f32 %v4311, %v4353
        %v4355 = vpop.f32.mrf.mxu0
        %v4356 = vadd.f32 %v4313, %v4355
        %v4357 = vpop.f32.mrf.mxu0
        %v4358 = vadd.f32 %v4315, %v4357
        %v4359 = vpop.f32.mrf.mxu0
        %v4360 = vadd.f32 %v4317, %v4359
        %4361 = vdwg.mxu0
        %4362 = vmatprep.subr.bf16.mxu0 %v3353
        %4363 = vmatpush1.bf16.msra.mxu0 %v3352
        %4364 = vmatprep.subr.bf16.mxu0 %v3345
        %4365 = vmatpush1.bf16.msra.mxu0 %v3344
        %4366 = vmatprep.subr.bf16.mxu0 %v3337
        %4367 = vmatpush1.bf16.msra.mxu0 %v3336
        %4368 = vmatprep.subr.bf16.mxu0 %v3329
        %4369 = vmatpush1.bf16.msra.mxu0 %v3328
        %4370 = vmatprep.subr.bf16.mxu0 %v3321
        %4371 = vmatpush1.bf16.msra.mxu0 %v3320
        %4372 = vmatprep.subr.bf16.mxu0 %v3313
        %4373 = vmatpush1.bf16.msra.mxu0 %v3312
        %4374 = vmatprep.subr.bf16.mxu0 %v3305
        %4375 = vmatpush1.bf16.msra.mxu0 %v3304
        %4376 = vmatprep.subr.bf16.mxu0 %v3297
        %4377 = vmatpush1.bf16.msra.mxu0 %v3296
        %4378 = vmatprep.subr.bf16.mxu0 %v3417
        %4379 = vmatpush2.bf16.msra.mxu0 %v3416
        %4380 = vmatprep.subr.bf16.mxu0 %v3409
        %4381 = vmatpush2.bf16.msra.mxu0 %v3408
        %4382 = vmatprep.subr.bf16.mxu0 %v3401
        %4383 = vmatpush2.bf16.msra.mxu0 %v3400
        %4384 = vmatprep.subr.bf16.mxu0 %v3393
        %4385 = vmatpush2.bf16.msra.mxu0 %v3392
        %4386 = vmatprep.subr.bf16.mxu0 %v3385
        %4387 = vmatpush2.bf16.msra.mxu0 %v3384
        %4388 = vmatprep.subr.bf16.mxu0 %v3377
        %4389 = vmatpush2.bf16.msra.mxu0 %v3376
        %4390 = vmatprep.subr.bf16.mxu0 %v3369
        %4391 = vmatpush2.bf16.msra.mxu0 %v3368
        %4392 = vmatprep.subr.bf16.mxu0 %v3361
        %4393 = vmatpush2.bf16.msra.mxu0 %v3360
        %4394 = vmatprep.mubr.bf16.mxu0 %v1454
        %4395 = vmatmul.mubr.bf16.gmra.mxu0 %v1453
        %v4396 = vpop.f32.mrf.mxu0
        %v4397 = vadd.f32 %v1921, %v4396
        %v4398 = vpop.f32.mrf.mxu0
        %v4399 = vadd.f32 %v1925, %v4398
        %v4400 = vpop.f32.mrf.mxu0
        %v4401 = vadd.f32 %v1921, %v4400
        %v4402 = vpop.f32.mrf.mxu0
        %v4403 = vadd.f32 %v1925, %v4402
        %4404 = vdwg.mxu0
        %4405 = vmatprep.subr.bf16.mxu0 %v3481
        %4406 = vmatpush1.bf16.msra.mxu0 %v3480
        %4407 = vmatprep.subr.bf16.mxu0 %v3473
        %4408 = vmatpush1.bf16.msra.mxu0 %v3472
        %4409 = vmatprep.subr.bf16.mxu0 %v3465
        %4410 = vmatpush1.bf16.msra.mxu0 %v3464
        %4411 = vmatprep.subr.bf16.mxu0 %v3457
        %4412 = vmatpush1.bf16.msra.mxu0 %v3456
        %4413 = vmatprep.subr.bf16.mxu0 %v3449
        %4414 = vmatpush1.bf16.msra.mxu0 %v3448
        %4415 = vmatprep.subr.bf16.mxu0 %v3441
        %4416 = vmatpush1.bf16.msra.mxu0 %v3440
        %4417 = vmatprep.subr.bf16.mxu0 %v3433
        %4418 = vmatpush1.bf16.msra.mxu0 %v3432
        %4419 = vmatprep.subr.bf16.mxu0 %v3425
        %4420 = vmatpush1.bf16.msra.mxu0 %v3424
        %4421 = vmatprep.subr.bf16.mxu0 %v3545
        %4422 = vmatpush2.bf16.msra.mxu0 %v3544
        %4423 = vmatprep.subr.bf16.mxu0 %v3537
        %4424 = vmatpush2.bf16.msra.mxu0 %v3536
        %4425 = vmatprep.subr.bf16.mxu0 %v3529
        %4426 = vmatpush2.bf16.msra.mxu0 %v3528
        %4427 = vmatprep.subr.bf16.mxu0 %v3521
        %4428 = vmatpush2.bf16.msra.mxu0 %v3520
        %4429 = vmatprep.subr.bf16.mxu0 %v3513
        %4430 = vmatpush2.bf16.msra.mxu0 %v3512
        %4431 = vmatprep.subr.bf16.mxu0 %v3505
        %4432 = vmatpush2.bf16.msra.mxu0 %v3504
        %4433 = vmatprep.subr.bf16.mxu0 %v3497
        %4434 = vmatpush2.bf16.msra.mxu0 %v3496
        %4435 = vmatprep.subr.bf16.mxu0 %v3489
        %4436 = vmatpush2.bf16.msra.mxu0 %v3488
        %4437 = vmatprep.mubr.bf16.mxu0 %v1456
        %4438 = vmatmul.mubr.bf16.gmra.mxu0 %v1455
        %v4439 = vpop.f32.mrf.mxu0
        %v4440 = vadd.f32 %v4397, %v4439
        %v4441 = vpop.f32.mrf.mxu0
        %v4442 = vadd.f32 %v4399, %v4441
        %v4443 = vpop.f32.mrf.mxu0
        %v4444 = vadd.f32 %v4401, %v4443
        %v4445 = vpop.f32.mrf.mxu0
        %v4446 = vadd.f32 %v4403, %v4445
        %4447 = vdwg.mxu0
        %4448 = vmatprep.subr.bf16.mxu0 %v3609
        %4449 = vmatpush1.bf16.msra.mxu0 %v3608
        %4450 = vmatprep.subr.bf16.mxu0 %v3601
        %4451 = vmatpush1.bf16.msra.mxu0 %v3600
        %4452 = vmatprep.subr.bf16.mxu0 %v3593
        %4453 = vmatpush1.bf16.msra.mxu0 %v3592
        %4454 = vmatprep.subr.bf16.mxu0 %v3585
        %4455 = vmatpush1.bf16.msra.mxu0 %v3584
        %4456 = vmatprep.subr.bf16.mxu0 %v3577
        %4457 = vmatpush1.bf16.msra.mxu0 %v3576
        %4458 = vmatprep.subr.bf16.mxu0 %v3569
        %4459 = vmatpush1.bf16.msra.mxu0 %v3568
        %4460 = vmatprep.subr.bf16.mxu0 %v3561
        %4461 = vmatpush1.bf16.msra.mxu0 %v3560
        %4462 = vmatprep.subr.bf16.mxu0 %v3553
        %4463 = vmatpush1.bf16.msra.mxu0 %v3552
        %4464 = vmatprep.subr.bf16.mxu0 %v3673
        %4465 = vmatpush2.bf16.msra.mxu0 %v3672
        %4466 = vmatprep.subr.bf16.mxu0 %v3665
        %4467 = vmatpush2.bf16.msra.mxu0 %v3664
        %4468 = vmatprep.subr.bf16.mxu0 %v3657
        %4469 = vmatpush2.bf16.msra.mxu0 %v3656
        %4470 = vmatprep.subr.bf16.mxu0 %v3649
        %4471 = vmatpush2.bf16.msra.mxu0 %v3648
        %4472 = vmatprep.subr.bf16.mxu0 %v3641
        %4473 = vmatpush2.bf16.msra.mxu0 %v3640
        %4474 = vmatprep.subr.bf16.mxu0 %v3633
        %4475 = vmatpush2.bf16.msra.mxu0 %v3632
        %4476 = vmatprep.subr.bf16.mxu0 %v3625
        %4477 = vmatpush2.bf16.msra.mxu0 %v3624
        %4478 = vmatprep.subr.bf16.mxu0 %v3617
        %4479 = vmatpush2.bf16.msra.mxu0 %v3616
        %4480 = vmatprep.mubr.bf16.mxu0 %v1458
        %4481 = vmatmul.mubr.bf16.gmra.mxu0 %v1457
        %v4482 = vpop.f32.mrf.mxu0
        %v4483 = vadd.f32 %v4440, %v4482
        %v4484 = vpop.f32.mrf.mxu0
        %v4485 = vadd.f32 %v4442, %v4484
        %v4486 = vpop.f32.mrf.mxu0
        %v4487 = vadd.f32 %v4444, %v4486
        %v4488 = vpop.f32.mrf.mxu0
        %v4489 = vadd.f32 %v4446, %v4488
        %4490 = vdwg.mxu0
        %4491 = vmatprep.subr.bf16.mxu0 %v3737
        %4492 = vmatpush1.bf16.msra.mxu0 %v3736
        %4493 = vmatprep.subr.bf16.mxu0 %v3729
        %4494 = vmatpush1.bf16.msra.mxu0 %v3728
        %4495 = vmatprep.subr.bf16.mxu0 %v3721
        %4496 = vmatpush1.bf16.msra.mxu0 %v3720
        %4497 = vmatprep.subr.bf16.mxu0 %v3713
        %4498 = vmatpush1.bf16.msra.mxu0 %v3712
        %4499 = vmatprep.subr.bf16.mxu0 %v3705
        %4500 = vmatpush1.bf16.msra.mxu0 %v3704
        %4501 = vmatprep.subr.bf16.mxu0 %v3697
        %4502 = vmatpush1.bf16.msra.mxu0 %v3696
        %4503 = vmatprep.subr.bf16.mxu0 %v3689
        %4504 = vmatpush1.bf16.msra.mxu0 %v3688
        %4505 = vmatprep.subr.bf16.mxu0 %v3681
        %4506 = vmatpush1.bf16.msra.mxu0 %v3680
        %4507 = vmatprep.subr.bf16.mxu0 0
        %4508 = vmatpush2.bf16.msra.mxu0 0
        %4509 = vmatprep.subr.bf16.mxu0 0
        %4510 = vmatpush2.bf16.msra.mxu0 0
        %4511 = vmatprep.subr.bf16.mxu0 0
        %4512 = vmatpush2.bf16.msra.mxu0 0
        %4513 = vmatprep.subr.bf16.mxu0 0
        %4514 = vmatpush2.bf16.msra.mxu0 0
        %4515 = vmatprep.subr.bf16.mxu0 0
        %4516 = vmatpush2.bf16.msra.mxu0 0
        %4517 = vmatprep.subr.bf16.mxu0 0
        %4518 = vmatpush2.bf16.msra.mxu0 0
        %4519 = vmatprep.subr.bf16.mxu0 0
        %4520 = vmatpush2.bf16.msra.mxu0 0
        %4521 = vmatprep.subr.bf16.mxu0 0
        %4522 = vmatpush2.bf16.msra.mxu0 0
        %4523 = vmatprep.mubr.bf16.mxu0 0
        %4524 = vmatmul.mubr.bf16.gmra.mxu0 %v1459
        %v4525 = vpop.f32.mrf.mxu0
        %v4526 = vadd.f32 %v4483, %v4525
        %v4527 = vpop.f32.mrf.mxu0
        %v4528 = vadd.f32 %v4485, %v4527
        %v4529 = vpop.f32.mrf.mxu0
        %v4530 = vadd.f32 %v4487, %v4529
        %v4531 = vpop.f32.mrf.mxu0
        %v4532 = vadd.f32 %v4489, %v4531
        %4533 = vdwg.mxu0
        %4534 = vmatprep.subr.bf16.mxu0 %v3355
        %4535 = vmatpush1.bf16.msra.mxu0 %v3354
        %4536 = vmatprep.subr.bf16.mxu0 %v3347
        %4537 = vmatpush1.bf16.msra.mxu0 %v3346
        %4538 = vmatprep.subr.bf16.mxu0 %v3339
        %4539 = vmatpush1.bf16.msra.mxu0 %v3338
        %4540 = vmatprep.subr.bf16.mxu0 %v3331
        %4541 = vmatpush1.bf16.msra.mxu0 %v3330
        %4542 = vmatprep.subr.bf16.mxu0 %v3323
        %4543 = vmatpush1.bf16.msra.mxu0 %v3322
        %4544 = vmatprep.subr.bf16.mxu0 %v3315
        %4545 = vmatpush1.bf16.msra.mxu0 %v3314
        %4546 = vmatprep.subr.bf16.mxu0 %v3307
        %4547 = vmatpush1.bf16.msra.mxu0 %v3306
        %4548 = vmatprep.subr.bf16.mxu0 %v3299
        %4549 = vmatpush1.bf16.msra.mxu0 %v3298
        %4550 = vmatprep.subr.bf16.mxu0 %v3419
        %4551 = vmatpush2.bf16.msra.mxu0 %v3418
        %4552 = vmatprep.subr.bf16.mxu0 %v3411
        %4553 = vmatpush2.bf16.msra.mxu0 %v3410
        %4554 = vmatprep.subr.bf16.mxu0 %v3403
        %4555 = vmatpush2.bf16.msra.mxu0 %v3402
        %4556 = vmatprep.subr.bf16.mxu0 %v3395
        %4557 = vmatpush2.bf16.msra.mxu0 %v3394
        %4558 = vmatprep.subr.bf16.mxu0 %v3387
        %4559 = vmatpush2.bf16.msra.mxu0 %v3386
        %4560 = vmatprep.subr.bf16.mxu0 %v3379
        %4561 = vmatpush2.bf16.msra.mxu0 %v3378
        %4562 = vmatprep.subr.bf16.mxu0 %v3371
        %4563 = vmatpush2.bf16.msra.mxu0 %v3370
        %4564 = vmatprep.subr.bf16.mxu0 %v3363
        %4565 = vmatpush2.bf16.msra.mxu0 %v3362
        %4566 = vmatprep.mubr.bf16.mxu0 %v1454
        %4567 = vmatmul.mubr.bf16.gmra.mxu0 %v1453
        %v4568 = vpop.f32.mrf.mxu0
        %v4569 = vadd.f32 %v1929, %v4568
        %v4570 = vpop.f32.mrf.mxu0
        %v4571 = vadd.f32 %v1933, %v4570
        %v4572 = vpop.f32.mrf.mxu0
        %v4573 = vadd.f32 %v1929, %v4572
        %v4574 = vpop.f32.mrf.mxu0
        %v4575 = vadd.f32 %v1933, %v4574
        %4576 = vdwg.mxu0
        %4577 = vmatprep.subr.bf16.mxu0 %v3483
        %4578 = vmatpush1.bf16.msra.mxu0 %v3482
        %4579 = vmatprep.subr.bf16.mxu0 %v3475
        %4580 = vmatpush1.bf16.msra.mxu0 %v3474
        %4581 = vmatprep.subr.bf16.mxu0 %v3467
        %4582 = vmatpush1.bf16.msra.mxu0 %v3466
        %4583 = vmatprep.subr.bf16.mxu0 %v3459
        %4584 = vmatpush1.bf16.msra.mxu0 %v3458
        %4585 = vmatprep.subr.bf16.mxu0 %v3451
        %4586 = vmatpush1.bf16.msra.mxu0 %v3450
        %4587 = vmatprep.subr.bf16.mxu0 %v3443
        %4588 = vmatpush1.bf16.msra.mxu0 %v3442
        %4589 = vmatprep.subr.bf16.mxu0 %v3435
        %4590 = vmatpush1.bf16.msra.mxu0 %v3434
        %4591 = vmatprep.subr.bf16.mxu0 %v3427
        %4592 = vmatpush1.bf16.msra.mxu0 %v3426
        %4593 = vmatprep.subr.bf16.mxu0 %v3547
        %4594 = vmatpush2.bf16.msra.mxu0 %v3546
        %4595 = vmatprep.subr.bf16.mxu0 %v3539
        %4596 = vmatpush2.bf16.msra.mxu0 %v3538
        %4597 = vmatprep.subr.bf16.mxu0 %v3531
        %4598 = vmatpush2.bf16.msra.mxu0 %v3530
        %4599 = vmatprep.subr.bf16.mxu0 %v3523
        %4600 = vmatpush2.bf16.msra.mxu0 %v3522
        %4601 = vmatprep.subr.bf16.mxu0 %v3515
        %4602 = vmatpush2.bf16.msra.mxu0 %v3514
        %4603 = vmatprep.subr.bf16.mxu0 %v3507
        %4604 = vmatpush2.bf16.msra.mxu0 %v3506
        %4605 = vmatprep.subr.bf16.mxu0 %v3499
        %4606 = vmatpush2.bf16.msra.mxu0 %v3498
        %4607 = vmatprep.subr.bf16.mxu0 %v3491
        %4608 = vmatpush2.bf16.msra.mxu0 %v3490
        %4609 = vmatprep.mubr.bf16.mxu0 %v1456
        %4610 = vmatmul.mubr.bf16.gmra.mxu0 %v1455
        %v4611 = vpop.f32.mrf.mxu0
        %v4612 = vadd.f32 %v4569, %v4611
        %v4613 = vpop.f32.mrf.mxu0
        %v4614 = vadd.f32 %v4571, %v4613
        %v4615 = vpop.f32.mrf.mxu0
        %v4616 = vadd.f32 %v4573, %v4615
        %v4617 = vpop.f32.mrf.mxu0
        %v4618 = vadd.f32 %v4575, %v4617
        %4619 = vdwg.mxu0
        %4620 = vmatprep.subr.bf16.mxu0 %v3611
        %4621 = vmatpush1.bf16.msra.mxu0 %v3610
        %4622 = vmatprep.subr.bf16.mxu0 %v3603
        %4623 = vmatpush1.bf16.msra.mxu0 %v3602
        %4624 = vmatprep.subr.bf16.mxu0 %v3595
        %4625 = vmatpush1.bf16.msra.mxu0 %v3594
        %4626 = vmatprep.subr.bf16.mxu0 %v3587
        %4627 = vmatpush1.bf16.msra.mxu0 %v3586
        %4628 = vmatprep.subr.bf16.mxu0 %v3579
        %4629 = vmatpush1.bf16.msra.mxu0 %v3578
        %4630 = vmatprep.subr.bf16.mxu0 %v3571
        %4631 = vmatpush1.bf16.msra.mxu0 %v3570
        %4632 = vmatprep.subr.bf16.mxu0 %v3563
        %4633 = vmatpush1.bf16.msra.mxu0 %v3562
        %4634 = vmatprep.subr.bf16.mxu0 %v3555
        %4635 = vmatpush1.bf16.msra.mxu0 %v3554
        %4636 = vmatprep.subr.bf16.mxu0 %v3675
        %4637 = vmatpush2.bf16.msra.mxu0 %v3674
        %4638 = vmatprep.subr.bf16.mxu0 %v3667
        %4639 = vmatpush2.bf16.msra.mxu0 %v3666
        %4640 = vmatprep.subr.bf16.mxu0 %v3659
        %4641 = vmatpush2.bf16.msra.mxu0 %v3658
        %4642 = vmatprep.subr.bf16.mxu0 %v3651
        %4643 = vmatpush2.bf16.msra.mxu0 %v3650
        %4644 = vmatprep.subr.bf16.mxu0 %v3643
        %4645 = vmatpush2.bf16.msra.mxu0 %v3642
        %4646 = vmatprep.subr.bf16.mxu0 %v3635
        %4647 = vmatpush2.bf16.msra.mxu0 %v3634
        %4648 = vmatprep.subr.bf16.mxu0 %v3627
        %4649 = vmatpush2.bf16.msra.mxu0 %v3626
        %4650 = vmatprep.subr.bf16.mxu0 %v3619
        %4651 = vmatpush2.bf16.msra.mxu0 %v3618
        %4652 = vmatprep.mubr.bf16.mxu0 %v1458
        %4653 = vmatmul.mubr.bf16.gmra.mxu0 %v1457
        %v4654 = vpop.f32.mrf.mxu0
        %v4655 = vadd.f32 %v4612, %v4654
        %v4656 = vpop.f32.mrf.mxu0
        %v4657 = vadd.f32 %v4614, %v4656
        %v4658 = vpop.f32.mrf.mxu0
        %v4659 = vadd.f32 %v4616, %v4658
        %v4660 = vpop.f32.mrf.mxu0
        %v4661 = vadd.f32 %v4618, %v4660
        %4662 = vdwg.mxu0
        %4663 = vmatprep.subr.bf16.mxu0 %v3739
        %4664 = vmatpush1.bf16.msra.mxu0 %v3738
        %4665 = vmatprep.subr.bf16.mxu0 %v3731
        %4666 = vmatpush1.bf16.msra.mxu0 %v3730
        %4667 = vmatprep.subr.bf16.mxu0 %v3723
        %4668 = vmatpush1.bf16.msra.mxu0 %v3722
        %4669 = vmatprep.subr.bf16.mxu0 %v3715
        %4670 = vmatpush1.bf16.msra.mxu0 %v3714
        %4671 = vmatprep.subr.bf16.mxu0 %v3707
        %4672 = vmatpush1.bf16.msra.mxu0 %v3706
        %4673 = vmatprep.subr.bf16.mxu0 %v3699
        %4674 = vmatpush1.bf16.msra.mxu0 %v3698
        %4675 = vmatprep.subr.bf16.mxu0 %v3691
        %4676 = vmatpush1.bf16.msra.mxu0 %v3690
        %4677 = vmatprep.subr.bf16.mxu0 %v3683
        %4678 = vmatpush1.bf16.msra.mxu0 %v3682
        %4679 = vmatprep.subr.bf16.mxu0 0
        %4680 = vmatpush2.bf16.msra.mxu0 0
        %4681 = vmatprep.subr.bf16.mxu0 0
        %4682 = vmatpush2.bf16.msra.mxu0 0
        %4683 = vmatprep.subr.bf16.mxu0 0
        %4684 = vmatpush2.bf16.msra.mxu0 0
        %4685 = vmatprep.subr.bf16.mxu0 0
        %4686 = vmatpush2.bf16.msra.mxu0 0
        %4687 = vmatprep.subr.bf16.mxu0 0
        %4688 = vmatpush2.bf16.msra.mxu0 0
        %4689 = vmatprep.subr.bf16.mxu0 0
        %4690 = vmatpush2.bf16.msra.mxu0 0
        %4691 = vmatprep.subr.bf16.mxu0 0
        %4692 = vmatpush2.bf16.msra.mxu0 0
        %4693 = vmatprep.subr.bf16.mxu0 0
        %4694 = vmatpush2.bf16.msra.mxu0 0
        %4695 = vmatprep.mubr.bf16.mxu0 0
        %4696 = vmatmul.mubr.bf16.gmra.mxu0 %v1459
        %v4697 = vpop.f32.mrf.mxu0
        %v4698 = vadd.f32 %v4655, %v4697
        %v4699 = vpop.f32.mrf.mxu0
        %v4700 = vadd.f32 %v4657, %v4699
        %v4701 = vpop.f32.mrf.mxu0
        %v4702 = vadd.f32 %v4659, %v4701
        %v4703 = vpop.f32.mrf.mxu0
        %v4704 = vadd.f32 %v4661, %v4703
        %4705 = vdwg.mxu0
        %4706 = vmatprep.subr.bf16.mxu0 %v3357
        %4707 = vmatpush1.bf16.msra.mxu0 %v3356
        %4708 = vmatprep.subr.bf16.mxu0 %v3349
        %4709 = vmatpush1.bf16.msra.mxu0 %v3348
        %4710 = vmatprep.subr.bf16.mxu0 %v3341
        %4711 = vmatpush1.bf16.msra.mxu0 %v3340
        %4712 = vmatprep.subr.bf16.mxu0 %v3333
        %4713 = vmatpush1.bf16.msra.mxu0 %v3332
        %4714 = vmatprep.subr.bf16.mxu0 %v3325
        %4715 = vmatpush1.bf16.msra.mxu0 %v3324
        %4716 = vmatprep.subr.bf16.mxu0 %v3317
        %4717 = vmatpush1.bf16.msra.mxu0 %v3316
        %4718 = vmatprep.subr.bf16.mxu0 %v3309
        %4719 = vmatpush1.bf16.msra.mxu0 %v3308
        %4720 = vmatprep.subr.bf16.mxu0 %v3301
        %4721 = vmatpush1.bf16.msra.mxu0 %v3300
        %4722 = vmatprep.subr.bf16.mxu0 %v3421
        %4723 = vmatpush2.bf16.msra.mxu0 %v3420
        %4724 = vmatprep.subr.bf16.mxu0 %v3413
        %4725 = vmatpush2.bf16.msra.mxu0 %v3412
        %4726 = vmatprep.subr.bf16.mxu0 %v3405
        %4727 = vmatpush2.bf16.msra.mxu0 %v3404
        %4728 = vmatprep.subr.bf16.mxu0 %v3397
        %4729 = vmatpush2.bf16.msra.mxu0 %v3396
        %4730 = vmatprep.subr.bf16.mxu0 %v3389
        %4731 = vmatpush2.bf16.msra.mxu0 %v3388
        %4732 = vmatprep.subr.bf16.mxu0 %v3381
        %4733 = vmatpush2.bf16.msra.mxu0 %v3380
        %4734 = vmatprep.subr.bf16.mxu0 %v3373
        %4735 = vmatpush2.bf16.msra.mxu0 %v3372
        %4736 = vmatprep.subr.bf16.mxu0 %v3365
        %4737 = vmatpush2.bf16.msra.mxu0 %v3364
        %4738 = vmatprep.mubr.bf16.mxu0 %v1454
        %4739 = vmatmul.mubr.bf16.gmra.mxu0 %v1453
        %v4740 = vpop.f32.mrf.mxu0
        %v4741 = vadd.f32 %v1937, %v4740
        %v4742 = vpop.f32.mrf.mxu0
        %v4743 = vadd.f32 %v1941, %v4742
        %v4744 = vpop.f32.mrf.mxu0
        %v4745 = vadd.f32 %v1937, %v4744
        %v4746 = vpop.f32.mrf.mxu0
        %v4747 = vadd.f32 %v1941, %v4746
        %4748 = vdwg.mxu0
        %4749 = vmatprep.subr.bf16.mxu0 %v3485
        %4750 = vmatpush1.bf16.msra.mxu0 %v3484
        %4751 = vmatprep.subr.bf16.mxu0 %v3477
        %4752 = vmatpush1.bf16.msra.mxu0 %v3476
        %4753 = vmatprep.subr.bf16.mxu0 %v3469
        %4754 = vmatpush1.bf16.msra.mxu0 %v3468
        %4755 = vmatprep.subr.bf16.mxu0 %v3461
        %4756 = vmatpush1.bf16.msra.mxu0 %v3460
        %4757 = vmatprep.subr.bf16.mxu0 %v3453
        %4758 = vmatpush1.bf16.msra.mxu0 %v3452
        %4759 = vmatprep.subr.bf16.mxu0 %v3445
        %4760 = vmatpush1.bf16.msra.mxu0 %v3444
        %4761 = vmatprep.subr.bf16.mxu0 %v3437
        %4762 = vmatpush1.bf16.msra.mxu0 %v3436
        %4763 = vmatprep.subr.bf16.mxu0 %v3429
        %4764 = vmatpush1.bf16.msra.mxu0 %v3428
        %4765 = vmatprep.subr.bf16.mxu0 %v3549
        %4766 = vmatpush2.bf16.msra.mxu0 %v3548
        %4767 = vmatprep.subr.bf16.mxu0 %v3541
        %4768 = vmatpush2.bf16.msra.mxu0 %v3540
        %4769 = vmatprep.subr.bf16.mxu0 %v3533
        %4770 = vmatpush2.bf16.msra.mxu0 %v3532
        %4771 = vmatprep.subr.bf16.mxu0 %v3525
        %4772 = vmatpush2.bf16.msra.mxu0 %v3524
        %4773 = vmatprep.subr.bf16.mxu0 %v3517
        %4774 = vmatpush2.bf16.msra.mxu0 %v3516
        %4775 = vmatprep.subr.bf16.mxu0 %v3509
        %4776 = vmatpush2.bf16.msra.mxu0 %v3508
        %4777 = vmatprep.subr.bf16.mxu0 %v3501
        %4778 = vmatpush2.bf16.msra.mxu0 %v3500
        %4779 = vmatprep.subr.bf16.mxu0 %v3493
        %4780 = vmatpush2.bf16.msra.mxu0 %v3492
        %4781 = vmatprep.mubr.bf16.mxu0 %v1456
        %4782 = vmatmul.mubr.bf16.gmra.mxu0 %v1455
        %v4783 = vpop.f32.mrf.mxu0
        %v4784 = vadd.f32 %v4741, %v4783
        %v4785 = vpop.f32.mrf.mxu0
        %v4786 = vadd.f32 %v4743, %v4785
        %v4787 = vpop.f32.mrf.mxu0
        %v4788 = vadd.f32 %v4745, %v4787
        %v4789 = vpop.f32.mrf.mxu0
        %v4790 = vadd.f32 %v4747, %v4789
        %4791 = vdwg.mxu0
        %4792 = vmatprep.subr.bf16.mxu0 %v3613
        %4793 = vmatpush1.bf16.msra.mxu0 %v3612
        %4794 = vmatprep.subr.bf16.mxu0 %v3605
        %4795 = vmatpush1.bf16.msra.mxu0 %v3604
        %4796 = vmatprep.subr.bf16.mxu0 %v3597
        %4797 = vmatpush1.bf16.msra.mxu0 %v3596
        %4798 = vmatprep.subr.bf16.mxu0 %v3589
        %4799 = vmatpush1.bf16.msra.mxu0 %v3588
        %4800 = vmatprep.subr.bf16.mxu0 %v3581
        %4801 = vmatpush1.bf16.msra.mxu0 %v3580
        %4802 = vmatprep.subr.bf16.mxu0 %v3573
        %4803 = vmatpush1.bf16.msra.mxu0 %v3572
        %4804 = vmatprep.subr.bf16.mxu0 %v3565
        %4805 = vmatpush1.bf16.msra.mxu0 %v3564
        %4806 = vmatprep.subr.bf16.mxu0 %v3557
        %4807 = vmatpush1.bf16.msra.mxu0 %v3556
        %4808 = vmatprep.subr.bf16.mxu0 %v3677
        %4809 = vmatpush2.bf16.msra.mxu0 %v3676
        %4810 = vmatprep.subr.bf16.mxu0 %v3669
        %4811 = vmatpush2.bf16.msra.mxu0 %v3668
        %4812 = vmatprep.subr.bf16.mxu0 %v3661
        %4813 = vmatpush2.bf16.msra.mxu0 %v3660
        %4814 = vmatprep.subr.bf16.mxu0 %v3653
        %4815 = vmatpush2.bf16.msra.mxu0 %v3652
        %4816 = vmatprep.subr.bf16.mxu0 %v3645
        %4817 = vmatpush2.bf16.msra.mxu0 %v3644
        %4818 = vmatprep.subr.bf16.mxu0 %v3637
        %4819 = vmatpush2.bf16.msra.mxu0 %v3636
        %4820 = vmatprep.subr.bf16.mxu0 %v3629
        %4821 = vmatpush2.bf16.msra.mxu0 %v3628
        %4822 = vmatprep.subr.bf16.mxu0 %v3621
        %4823 = vmatpush2.bf16.msra.mxu0 %v3620
        %4824 = vmatprep.mubr.bf16.mxu0 %v1458
        %4825 = vmatmul.mubr.bf16.gmra.mxu0 %v1457
        %v4826 = vpop.f32.mrf.mxu0
        %v4827 = vadd.f32 %v4784, %v4826
        %v4828 = vpop.f32.mrf.mxu0
        %v4829 = vadd.f32 %v4786, %v4828
        %v4830 = vpop.f32.mrf.mxu0
        %v4831 = vadd.f32 %v4788, %v4830
        %v4832 = vpop.f32.mrf.mxu0
        %v4833 = vadd.f32 %v4790, %v4832
        %4834 = vdwg.mxu0
        %4835 = vmatprep.subr.bf16.mxu0 %v3741
        %4836 = vmatpush1.bf16.msra.mxu0 %v3740
        %4837 = vmatprep.subr.bf16.mxu0 %v3733
        %4838 = vmatpush1.bf16.msra.mxu0 %v3732
        %4839 = vmatprep.subr.bf16.mxu0 %v3725
        %4840 = vmatpush1.bf16.msra.mxu0 %v3724
        %4841 = vmatprep.subr.bf16.mxu0 %v3717
        %4842 = vmatpush1.bf16.msra.mxu0 %v3716
        %4843 = vmatprep.subr.bf16.mxu0 %v3709
        %4844 = vmatpush1.bf16.msra.mxu0 %v3708
        %4845 = vmatprep.subr.bf16.mxu0 %v3701
        %4846 = vmatpush1.bf16.msra.mxu0 %v3700
        %4847 = vmatprep.subr.bf16.mxu0 %v3693
        %4848 = vmatpush1.bf16.msra.mxu0 %v3692
        %4849 = vmatprep.subr.bf16.mxu0 %v3685
        %4850 = vmatpush1.bf16.msra.mxu0 %v3684
        %4851 = vmatprep.subr.bf16.mxu0 0
        %4852 = vmatpush2.bf16.msra.mxu0 0
        %4853 = vmatprep.subr.bf16.mxu0 0
        %4854 = vmatpush2.bf16.msra.mxu0 0
        %4855 = vmatprep.subr.bf16.mxu0 0
        %4856 = vmatpush2.bf16.msra.mxu0 0
        %4857 = vmatprep.subr.bf16.mxu0 0
        %4858 = vmatpush2.bf16.msra.mxu0 0
        %4859 = vmatprep.subr.bf16.mxu0 0
        %4860 = vmatpush2.bf16.msra.mxu0 0
        %4861 = vmatprep.subr.bf16.mxu0 0
        %4862 = vmatpush2.bf16.msra.mxu0 0
        %4863 = vmatprep.subr.bf16.mxu0 0
        %4864 = vmatpush2.bf16.msra.mxu0 0
        %4865 = vmatprep.subr.bf16.mxu0 0
        %4866 = vmatpush2.bf16.msra.mxu0 0
        %4867 = vmatprep.mubr.bf16.mxu0 0
        %4868 = vmatmul.mubr.bf16.gmra.mxu0 %v1459
        %v4869 = vpop.f32.mrf.mxu0
        %v4870 = vadd.f32 %v4827, %v4869
        %v4871 = vpop.f32.mrf.mxu0
        %v4872 = vadd.f32 %v4829, %v4871
        %v4873 = vpop.f32.mrf.mxu0
        %v4874 = vadd.f32 %v4831, %v4873
        %v4875 = vpop.f32.mrf.mxu0
        %v4876 = vadd.f32 %v4833, %v4875
        %4877 = vdwg.mxu0
        %v4878 = vmax.f32 %v4354, 0.0
        %v4879 = vmax.f32 %v4356, 0.0
        %v4880 = vmax.f32 %v4526, 0.0
        %v4881 = vmax.f32 %v4528, 0.0
        %v4882 = vmax.f32 %v4698, 0.0
        %v4883 = vmax.f32 %v4700, 0.0
        %v4884 = vmax.f32 %v4870, 0.0
        %v4885 = vmax.f32 %v4872, 0.0
        %v4886 = vmax.f32 %v4358, 0.0
        %v4887 = vmax.f32 %v4360, 0.0
        %v4888 = vmax.f32 %v4530, 0.0
        %v4889 = vmax.f32 %v4532, 0.0
        %v4890 = vmax.f32 %v4702, 0.0
        %v4891 = vmax.f32 %v4704, 0.0
        %v4892 = vmax.f32 %v4874, 0.0
        %v4893 = vmax.f32 %v4876, 0.0
        %v4894 = vpack.c.bf16 %v4886, %v4878
        %v4895 = vpack.c.bf16 %v4887, %v4879
        %v4896 = vpack.c.bf16 %v4888, %v4880
        %v4897 = vpack.c.bf16 %v4889, %v4881
        %v4898 = vpack.c.bf16 %v4890, %v4882
        %v4899 = vpack.c.bf16 %v4891, %v4883
        %v4900 = vpack.c.bf16 %v4892, %v4884
        %v4901 = vpack.c.bf16 %v4893, %v4885
        %v4902 = vld [vmem:[#allocation10] sm:$0xff]
        %v4903 = vld [vmem:[#allocation10 + $0x8] sm:$0xff]
        %v4904 = vld [vmem:[#allocation10 + $0x10] sm:$0xff]
        %v4905 = vld [vmem:[#allocation10 + $0x18] sm:$0xff]
        %v4906 = vld [vmem:[#allocation10 + $0x20] sm:$0xff]
        %v4907 = vld [vmem:[#allocation10 + $0x28] sm:$0xff]
        %v4908 = vld [vmem:[#allocation10 + $0x30] sm:$0xff]
        %v4909 = vld [vmem:[#allocation10 + $0x38] sm:$0xff]
        %v4910 = vld [vmem:[#allocation10 + $0x40] sm:$0xff]
        %v4911 = vld [vmem:[#allocation10 + $0x48] sm:$0xff]
        %v4912 = vld [vmem:[#allocation10 + $0x50] sm:$0xff]
        %v4913 = vld [vmem:[#allocation10 + $0x58] sm:$0xff]
        %v4914 = vld [vmem:[#allocation10 + $0x60] sm:$0xff]
        %v4915 = vld [vmem:[#allocation10 + $0x68] sm:$0xff]
        %v4916 = vld [vmem:[#allocation10 + $0x70] sm:$0xff]
        %v4917 = vld [vmem:[#allocation10 + $0x78] sm:$0xff]
        %v4918 = vld [vmem:[#allocation10 + $0x80] sm:$0xff]
        %v4919 = vld [vmem:[#allocation10 + $0x88] sm:$0xff]
        %v4920 = vld [vmem:[#allocation10 + $0x90] sm:$0xff]
        %v4921 = vld [vmem:[#allocation10 + $0x98] sm:$0xff]
        %v4922 = vld [vmem:[#allocation10 + $0xa0] sm:$0xff]
        %v4923 = vld [vmem:[#allocation10 + $0xa8] sm:$0xff]
        %v4924 = vld [vmem:[#allocation10 + $0xb0] sm:$0xff]
        %v4925 = vld [vmem:[#allocation10 + $0xb8] sm:$0xff]
        %v4926 = vld [vmem:[#allocation10 + $0xc0] sm:$0xff]
        %v4927 = vld [vmem:[#allocation10 + $0xc8] sm:$0xff]
        %v4928 = vld [vmem:[#allocation10 + $0xd0] sm:$0xff]
        %v4929 = vld [vmem:[#allocation10 + $0xd8] sm:$0xff]
        %v4930 = vld [vmem:[#allocation10 + $0xe0] sm:$0xff]
        %v4931 = vld [vmem:[#allocation10 + $0xe8] sm:$0xff]
        %v4932 = vld [vmem:[#allocation10 + $0xf0] sm:$0xff]
        %v4933 = vld [vmem:[#allocation10 + $0xf8] sm:$0xff]
        %v4934 = vld [vmem:[#allocation10 + $0x100] sm:$0xff]
        %v4935 = vld [vmem:[#allocation10 + $0x108] sm:$0xff]
        %v4936 = vld [vmem:[#allocation10 + $0x110] sm:$0xff]
        %v4937 = vld [vmem:[#allocation10 + $0x118] sm:$0xff]
        %v4938 = vld [vmem:[#allocation10 + $0x120] sm:$0xff]
        %v4939 = vld [vmem:[#allocation10 + $0x128] sm:$0xff]
        %v4940 = vld [vmem:[#allocation10 + $0x130] sm:$0xff]
        %v4941 = vld [vmem:[#allocation10 + $0x138] sm:$0xff]
        %v4942 = vld [vmem:[#allocation10 + $0x140] sm:$0xff]
        %v4943 = vld [vmem:[#allocation10 + $0x148] sm:$0xff]
        %v4944 = vld [vmem:[#allocation10 + $0x150] sm:$0xff]
        %v4945 = vld [vmem:[#allocation10 + $0x158] sm:$0xff]
        %v4946 = vld [vmem:[#allocation10 + $0x160] sm:$0xff]
        %v4947 = vld [vmem:[#allocation10 + $0x168] sm:$0xff]
        %v4948 = vld [vmem:[#allocation10 + $0x170] sm:$0xff]
        %v4949 = vld [vmem:[#allocation10 + $0x178] sm:$0xff]
        %v4950 = vld [vmem:[#allocation10 + $0x180] sm:$0xff]
        %v4951 = vld [vmem:[#allocation10 + $0x188] sm:$0xff]
        %v4952 = vld [vmem:[#allocation10 + $0x190] sm:$0xff]
        %v4953 = vld [vmem:[#allocation10 + $0x198] sm:$0xff]
        %v4954 = vld [vmem:[#allocation10 + $0x1a0] sm:$0xff]
        %v4955 = vld [vmem:[#allocation10 + $0x1a8] sm:$0xff]
        %v4956 = vld [vmem:[#allocation10 + $0x1b0] sm:$0xff]
        %v4957 = vld [vmem:[#allocation10 + $0x1b8] sm:$0xff]
        %v4958 = vld [vmem:[#allocation10 + $0x1c0] sm:$0xff]
        %v4959 = vld [vmem:[#allocation10 + $0x1c8] sm:$0xff]
        %v4960 = vld [vmem:[#allocation10 + $0x1d0] sm:$0xff]
        %v4961 = vld [vmem:[#allocation10 + $0x1d8] sm:$0xff]
        %v4962 = vld [vmem:[#allocation10 + $0x1e0] sm:$0xff]
        %v4963 = vld [vmem:[#allocation10 + $0x1e8] sm:$0xff]
        %v4964 = vld [vmem:[#allocation10 + $0x1f0] sm:$0xff]
        %v4965 = vld [vmem:[#allocation10 + $0x1f8] sm:$0xff]
        %v4966 = vld [vmem:[#allocation10 + $0x200] sm:$0xff]
        %v4967 = vld [vmem:[#allocation10 + $0x208] sm:$0xff]
        %v4968 = vld [vmem:[#allocation10 + $0x210] sm:$0xff]
        %v4969 = vld [vmem:[#allocation10 + $0x218] sm:$0xff]
        %v4970 = vld [vmem:[#allocation10 + $0x220] sm:$0xff]
        %v4971 = vld [vmem:[#allocation10 + $0x228] sm:$0xff]
        %v4972 = vld [vmem:[#allocation10 + $0x230] sm:$0xff]
        %v4973 = vld [vmem:[#allocation10 + $0x238] sm:$0xff]
        %v4974 = vld [vmem:[#allocation10 + $0x240] sm:$0xff]
        %v4975 = vld [vmem:[#allocation10 + $0x248] sm:$0xff]
        %v4976 = vld [vmem:[#allocation10 + $0x250] sm:$0xff]
        %v4977 = vld [vmem:[#allocation10 + $0x258] sm:$0xff]
        %v4978 = vld [vmem:[#allocation10 + $0x260] sm:$0xff]
        %v4979 = vld [vmem:[#allocation10 + $0x268] sm:$0xff]
        %v4980 = vld [vmem:[#allocation10 + $0x270] sm:$0xff]
        %v4981 = vld [vmem:[#allocation10 + $0x278] sm:$0xff]
        %v4982 = vld [vmem:[#allocation10 + $0x280] sm:$0xff]
        %v4983 = vld [vmem:[#allocation10 + $0x288] sm:$0xff]
        %v4984 = vld [vmem:[#allocation10 + $0x290] sm:$0xff]
        %v4985 = vld [vmem:[#allocation10 + $0x298] sm:$0xff]
        %v4986 = vld [vmem:[#allocation10 + $0x2a0] sm:$0xff]
        %v4987 = vld [vmem:[#allocation10 + $0x2a8] sm:$0xff]
        %v4988 = vld [vmem:[#allocation10 + $0x2b0] sm:$0xff]
        %v4989 = vld [vmem:[#allocation10 + $0x2b8] sm:$0xff]
        %v4990 = vld [vmem:[#allocation10 + $0x2c0] sm:$0xff]
        %v4991 = vld [vmem:[#allocation10 + $0x2c8] sm:$0xff]
        %v4992 = vld [vmem:[#allocation10 + $0x2d0] sm:$0xff]
        %v4993 = vld [vmem:[#allocation10 + $0x2d8] sm:$0xff]
        %v4994 = vld [vmem:[#allocation10 + $0x2e0] sm:$0xff]
        %v4995 = vld [vmem:[#allocation10 + $0x2e8] sm:$0xff]
        %v4996 = vld [vmem:[#allocation10 + $0x2f0] sm:$0xff]
        %v4997 = vld [vmem:[#allocation10 + $0x2f8] sm:$0xff]
        %v4998 = vld [vmem:[#allocation10 + $0x300] sm:$0xff]
        %v4999 = vld [vmem:[#allocation10 + $0x308] sm:$0xff]
        %v5000 = vld [vmem:[#allocation10 + $0x310] sm:$0xff]
        %v5001 = vld [vmem:[#allocation10 + $0x318] sm:$0xff]
        %v5002 = vld [vmem:[#allocation10 + $0x320] sm:$0xff]
        %v5003 = vld [vmem:[#allocation10 + $0x328] sm:$0xff]
        %v5004 = vld [vmem:[#allocation10 + $0x330] sm:$0xff]
        %v5005 = vld [vmem:[#allocation10 + $0x338] sm:$0xff]
        %v5006 = vld [vmem:[#allocation10 + $0x340] sm:$0xff]
        %v5007 = vld [vmem:[#allocation10 + $0x348] sm:$0xff]
        %v5008 = vld [vmem:[#allocation10 + $0x350] sm:$0xff]
        %v5009 = vld [vmem:[#allocation10 + $0x358] sm:$0xff]
        %v5010 = vld [vmem:[#allocation10 + $0x360] sm:$0xff]
        %v5011 = vld [vmem:[#allocation10 + $0x368] sm:$0xff]
        %v5012 = vld [vmem:[#allocation10 + $0x370] sm:$0xff]
        %v5013 = vld [vmem:[#allocation10 + $0x378] sm:$0xff]
        %v5014 = vld [vmem:[#allocation10 + $0x380] sm:$0xff]
        %v5015 = vld [vmem:[#allocation10 + $0x388] sm:$0xff]
        %v5016 = vld [vmem:[#allocation10 + $0x390] sm:$0xff]
        %v5017 = vld [vmem:[#allocation10 + $0x398] sm:$0xff]
        %v5018 = vld [vmem:[#allocation10 + $0x3a0] sm:$0xff]
        %v5019 = vld [vmem:[#allocation10 + $0x3a8] sm:$0xff]
        %v5020 = vld [vmem:[#allocation10 + $0x3b0] sm:$0xff]
        %v5021 = vld [vmem:[#allocation10 + $0x3b8] sm:$0xff]
        %v5022 = vld [vmem:[#allocation10 + $0x3c0] sm:$0xff]
        %v5023 = vld [vmem:[#allocation10 + $0x3c8] sm:$0xff]
        %v5024 = vld [vmem:[#allocation10 + $0x3d0] sm:$0xff]
        %v5025 = vld [vmem:[#allocation10 + $0x3d8] sm:$0xff]
        %v5026 = vld [vmem:[#allocation10 + $0x3e0] sm:$0xff]
        %v5027 = vld [vmem:[#allocation10 + $0x3e8] sm:$0xff]
        %v5028 = vld [vmem:[#allocation10 + $0x3f0] sm:$0xff]
        %v5029 = vld [vmem:[#allocation10 + $0x3f8] sm:$0xff]
        %v5030 = vld [vmem:[#allocation10 + $0x400] sm:$0xff]
        %v5031 = vld [vmem:[#allocation10 + $0x408] sm:$0xff]
        %v5032 = vld [vmem:[#allocation10 + $0x410] sm:$0xff]
        %v5033 = vld [vmem:[#allocation10 + $0x418] sm:$0xff]
        %v5034 = vld [vmem:[#allocation10 + $0x420] sm:$0xff]
        %v5035 = vld [vmem:[#allocation10 + $0x428] sm:$0xff]
        %v5036 = vld [vmem:[#allocation10 + $0x430] sm:$0xff]
        %v5037 = vld [vmem:[#allocation10 + $0x438] sm:$0xff]
        %v5038 = vld [vmem:[#allocation10 + $0x440] sm:$0xff]
        %v5039 = vld [vmem:[#allocation10 + $0x448] sm:$0xff]
        %v5040 = vld [vmem:[#allocation10 + $0x450] sm:$0xff]
        %v5041 = vld [vmem:[#allocation10 + $0x458] sm:$0xff]
        %v5042 = vld [vmem:[#allocation10 + $0x460] sm:$0xff]
        %v5043 = vld [vmem:[#allocation10 + $0x468] sm:$0xff]
        %v5044 = vld [vmem:[#allocation10 + $0x470] sm:$0xff]
        %v5045 = vld [vmem:[#allocation10 + $0x478] sm:$0xff]
        %v5046 = vld [vmem:[#allocation10 + $0x480] sm:$0xff]
        %v5047 = vld [vmem:[#allocation10 + $0x488] sm:$0xff]
        %v5048 = vld [vmem:[#allocation10 + $0x490] sm:$0xff]
        %v5049 = vld [vmem:[#allocation10 + $0x498] sm:$0xff]
        %v5050 = vld [vmem:[#allocation10 + $0x4a0] sm:$0xff]
        %v5051 = vld [vmem:[#allocation10 + $0x4a8] sm:$0xff]
        %v5052 = vld [vmem:[#allocation10 + $0x4b0] sm:$0xff]
        %v5053 = vld [vmem:[#allocation10 + $0x4b8] sm:$0xff]
        %v5054 = vld [vmem:[#allocation10 + $0x4c0] sm:$0xff]
        %v5055 = vld [vmem:[#allocation10 + $0x4c8] sm:$0xff]
        %v5056 = vld [vmem:[#allocation10 + $0x4d0] sm:$0xff]
        %v5057 = vld [vmem:[#allocation10 + $0x4d8] sm:$0xff]
        %v5058 = vld [vmem:[#allocation10 + $0x4e0] sm:$0xff]
        %v5059 = vld [vmem:[#allocation10 + $0x4e8] sm:$0xff]
        %v5060 = vld [vmem:[#allocation10 + $0x4f0] sm:$0xff]
        %v5061 = vld [vmem:[#allocation10 + $0x4f8] sm:$0xff]
        %v5062 = vld [vmem:[#allocation10 + $0x500] sm:$0xff]
        %v5063 = vld [vmem:[#allocation10 + $0x508] sm:$0xff]
        %v5064 = vld [vmem:[#allocation10 + $0x510] sm:$0xff]
        %v5065 = vld [vmem:[#allocation10 + $0x518] sm:$0xff]
        %v5066 = vld [vmem:[#allocation10 + $0x520] sm:$0xff]
        %v5067 = vld [vmem:[#allocation10 + $0x528] sm:$0xff]
        %v5068 = vld [vmem:[#allocation10 + $0x530] sm:$0xff]
        %v5069 = vld [vmem:[#allocation10 + $0x538] sm:$0xff]
        %v5070 = vld [vmem:[#allocation10 + $0x540] sm:$0xff]
        %v5071 = vld [vmem:[#allocation10 + $0x548] sm:$0xff]
        %v5072 = vld [vmem:[#allocation10 + $0x550] sm:$0xff]
        %v5073 = vld [vmem:[#allocation10 + $0x558] sm:$0xff]
        %v5074 = vld [vmem:[#allocation10 + $0x560] sm:$0xff]
        %v5075 = vld [vmem:[#allocation10 + $0x568] sm:$0xff]
        %v5076 = vld [vmem:[#allocation10 + $0x570] sm:$0xff]
        %v5077 = vld [vmem:[#allocation10 + $0x578] sm:$0xff]
        %v5078 = vld [vmem:[#allocation10 + $0x580] sm:$0xff]
        %v5079 = vld [vmem:[#allocation10 + $0x588] sm:$0xff]
        %v5080 = vld [vmem:[#allocation10 + $0x590] sm:$0xff]
        %v5081 = vld [vmem:[#allocation10 + $0x598] sm:$0xff]
        %v5082 = vld [vmem:[#allocation10 + $0x5a0] sm:$0xff]
        %v5083 = vld [vmem:[#allocation10 + $0x5a8] sm:$0xff]
        %v5084 = vld [vmem:[#allocation10 + $0x5b0] sm:$0xff]
        %v5085 = vld [vmem:[#allocation10 + $0x5b8] sm:$0xff]
        %v5086 = vld [vmem:[#allocation10 + $0x5c0] sm:$0xff]
        %v5087 = vld [vmem:[#allocation10 + $0x5c8] sm:$0xff]
        %v5088 = vld [vmem:[#allocation10 + $0x5d0] sm:$0xff]
        %v5089 = vld [vmem:[#allocation10 + $0x5d8] sm:$0xff]
        %v5090 = vld [vmem:[#allocation10 + $0x5e0] sm:$0xff]
        %v5091 = vld [vmem:[#allocation10 + $0x5e8] sm:$0xff]
        %v5092 = vld [vmem:[#allocation10 + $0x5f0] sm:$0xff]
        %v5093 = vld [vmem:[#allocation10 + $0x5f8] sm:$0xff]
        %v5094 = vld [vmem:[#allocation10 + $0x600] sm:$0xff]
        %v5095 = vld [vmem:[#allocation10 + $0x608] sm:$0xff]
        %v5096 = vld [vmem:[#allocation10 + $0x610] sm:$0xff]
        %v5097 = vld [vmem:[#allocation10 + $0x618] sm:$0xff]
        %v5098 = vld [vmem:[#allocation10 + $0x620] sm:$0xff]
        %v5099 = vld [vmem:[#allocation10 + $0x628] sm:$0xff]
        %v5100 = vld [vmem:[#allocation10 + $0x630] sm:$0xff]
        %v5101 = vld [vmem:[#allocation10 + $0x638] sm:$0xff]
        %v5102 = vld [vmem:[#allocation10 + $0x640] sm:$0xff]
        %v5103 = vld [vmem:[#allocation10 + $0x648] sm:$0xff]
        %v5104 = vld [vmem:[#allocation10 + $0x650] sm:$0xff]
        %v5105 = vld [vmem:[#allocation10 + $0x658] sm:$0xff]
        %v5106 = vld [vmem:[#allocation10 + $0x660] sm:$0xff]
        %v5107 = vld [vmem:[#allocation10 + $0x668] sm:$0xff]
        %v5108 = vld [vmem:[#allocation10 + $0x670] sm:$0xff]
        %v5109 = vld [vmem:[#allocation10 + $0x678] sm:$0xff]
        %v5110 = vld [vmem:[#allocation10 + $0x680] sm:$0xff]
        %v5111 = vld [vmem:[#allocation10 + $0x688] sm:$0xff]
        %v5112 = vld [vmem:[#allocation10 + $0x690] sm:$0xff]
        %v5113 = vld [vmem:[#allocation10 + $0x698] sm:$0xff]
        %v5114 = vld [vmem:[#allocation10 + $0x6a0] sm:$0xff]
        %v5115 = vld [vmem:[#allocation10 + $0x6a8] sm:$0xff]
        %v5116 = vld [vmem:[#allocation10 + $0x6b0] sm:$0xff]
        %v5117 = vld [vmem:[#allocation10 + $0x6b8] sm:$0xff]
        %v5118 = vld [vmem:[#allocation10 + $0x6c0] sm:$0xff]
        %v5119 = vld [vmem:[#allocation10 + $0x6c8] sm:$0xff]
        %v5120 = vld [vmem:[#allocation10 + $0x6d0] sm:$0xff]
        %v5121 = vld [vmem:[#allocation10 + $0x6d8] sm:$0xff]
        %v5122 = vld [vmem:[#allocation10 + $0x6e0] sm:$0xff]
        %v5123 = vld [vmem:[#allocation10 + $0x6e8] sm:$0xff]
        %v5124 = vld [vmem:[#allocation10 + $0x6f0] sm:$0xff]
        %v5125 = vld [vmem:[#allocation10 + $0x6f8] sm:$0xff]
        %v5126 = vld [vmem:[#allocation10 + $0x700] sm:$0xff]
        %v5127 = vld [vmem:[#allocation10 + $0x708] sm:$0xff]
        %v5128 = vld [vmem:[#allocation10 + $0x710] sm:$0xff]
        %v5129 = vld [vmem:[#allocation10 + $0x718] sm:$0xff]
        %v5130 = vld [vmem:[#allocation10 + $0x720] sm:$0xff]
        %v5131 = vld [vmem:[#allocation10 + $0x728] sm:$0xff]
        %v5132 = vld [vmem:[#allocation10 + $0x730] sm:$0xff]
        %v5133 = vld [vmem:[#allocation10 + $0x738] sm:$0xff]
        %v5134 = vld [vmem:[#allocation10 + $0x740] sm:$0xff]
        %v5135 = vld [vmem:[#allocation10 + $0x748] sm:$0xff]
        %v5136 = vld [vmem:[#allocation10 + $0x750] sm:$0xff]
        %v5137 = vld [vmem:[#allocation10 + $0x758] sm:$0xff]
        %v5138 = vld [vmem:[#allocation10 + $0x760] sm:$0xff]
        %v5139 = vld [vmem:[#allocation10 + $0x768] sm:$0xff]
        %v5140 = vld [vmem:[#allocation10 + $0x770] sm:$0xff]
        %v5141 = vld [vmem:[#allocation10 + $0x778] sm:$0xff]
        %v5142 = vld [vmem:[#allocation10 + $0x780] sm:$0xff]
        %v5143 = vld [vmem:[#allocation10 + $0x788] sm:$0xff]
        %v5144 = vld [vmem:[#allocation10 + $0x790] sm:$0xff]
        %v5145 = vld [vmem:[#allocation10 + $0x798] sm:$0xff]
        %v5146 = vld [vmem:[#allocation10 + $0x7a0] sm:$0xff]
        %v5147 = vld [vmem:[#allocation10 + $0x7a8] sm:$0xff]
        %v5148 = vld [vmem:[#allocation10 + $0x7b0] sm:$0xff]
        %v5149 = vld [vmem:[#allocation10 + $0x7b8] sm:$0xff]
        %v5150 = vld [vmem:[#allocation10 + $0x7c0] sm:$0xff]
        %v5151 = vld [vmem:[#allocation10 + $0x7c8] sm:$0xff]
        %v5152 = vld [vmem:[#allocation10 + $0x7d0] sm:$0xff]
        %v5153 = vld [vmem:[#allocation10 + $0x7d8] sm:$0xff]
        %v5154 = vld [vmem:[#allocation10 + $0x7e0] sm:$0xff]
        %v5155 = vld [vmem:[#allocation10 + $0x7e8] sm:$0xff]
        %v5156 = vld [vmem:[#allocation10 + $0x7f0] sm:$0xff]
        %v5157 = vld [vmem:[#allocation10 + $0x7f8] sm:$0xff]
        %v5158 = vld [vmem:[#allocation11] sm:$0xf]
        %v5160 = vlaneseq
        %v5161 = vshrl.u32 %v5160, 7
        %v5162 = vsub.s32 0, %v5161
        %v5163 = vrot.slane %v5158, %v5162
        %v5164 = vlaneseq
        %v5165 = vshrl.u32 %v5164, 7
        %v5166 = vsub.s32 1, %v5165
        %v5167 = vrot.slane %v5158, %v5166
        %v5168 = vlaneseq
        %v5169 = vshrl.u32 %v5168, 7
        %v5170 = vsub.s32 2, %v5169
        %v5171 = vrot.slane %v5158, %v5170
        %v5172 = vlaneseq
        %v5173 = vshrl.u32 %v5172, 7
        %v5174 = vsub.s32 3, %v5173
        %v5175 = vrot.slane %v5158, %v5174
        %v5436 = vunpack.c.l.b16 %v4902
        %v5437 = vunpack.c.h.b16 %v4902
        %v5438 = vunpack.c.l.b16 %v4903
        %v5439 = vunpack.c.h.b16 %v4903
        %v5440 = vunpack.c.l.b16 %v4904
        %v5441 = vunpack.c.h.b16 %v4904
        %v5442 = vunpack.c.l.b16 %v4905
        %v5443 = vunpack.c.h.b16 %v4905
        %v5444 = vunpack.c.l.b16 %v4906
        %v5445 = vunpack.c.h.b16 %v4906
        %v5446 = vunpack.c.l.b16 %v4907
        %v5447 = vunpack.c.h.b16 %v4907
        %v5448 = vunpack.c.l.b16 %v4908
        %v5449 = vunpack.c.h.b16 %v4908
        %v5450 = vunpack.c.l.b16 %v4909
        %v5451 = vunpack.c.h.b16 %v4909
        %v5452 = vunpack.c.l.b16 %v4910
        %v5453 = vunpack.c.h.b16 %v4910
        %v5454 = vunpack.c.l.b16 %v4911
        %v5455 = vunpack.c.h.b16 %v4911
        %v5456 = vunpack.c.l.b16 %v4912
        %v5457 = vunpack.c.h.b16 %v4912
        %v5458 = vunpack.c.l.b16 %v4913
        %v5459 = vunpack.c.h.b16 %v4913
        %v5460 = vunpack.c.l.b16 %v4914
        %v5461 = vunpack.c.h.b16 %v4914
        %v5462 = vunpack.c.l.b16 %v4915
        %v5463 = vunpack.c.h.b16 %v4915
        %v5464 = vunpack.c.l.b16 %v4916
        %v5465 = vunpack.c.h.b16 %v4916
        %v5466 = vunpack.c.l.b16 %v4917
        %v5467 = vunpack.c.h.b16 %v4917
        %v5468 = vunpack.c.l.b16 %v4918
        %v5469 = vunpack.c.h.b16 %v4918
        %v5470 = vunpack.c.l.b16 %v4919
        %v5471 = vunpack.c.h.b16 %v4919
        %v5472 = vunpack.c.l.b16 %v4920
        %v5473 = vunpack.c.h.b16 %v4920
        %v5474 = vunpack.c.l.b16 %v4921
        %v5475 = vunpack.c.h.b16 %v4921
        %v5476 = vunpack.c.l.b16 %v4922
        %v5477 = vunpack.c.h.b16 %v4922
        %v5478 = vunpack.c.l.b16 %v4923
        %v5479 = vunpack.c.h.b16 %v4923
        %v5480 = vunpack.c.l.b16 %v4924
        %v5481 = vunpack.c.h.b16 %v4924
        %v5482 = vunpack.c.l.b16 %v4925
        %v5483 = vunpack.c.h.b16 %v4925
        %v5484 = vunpack.c.l.b16 %v4926
        %v5485 = vunpack.c.h.b16 %v4926
        %v5486 = vunpack.c.l.b16 %v4927
        %v5487 = vunpack.c.h.b16 %v4927
        %v5488 = vunpack.c.l.b16 %v4928
        %v5489 = vunpack.c.h.b16 %v4928
        %v5490 = vunpack.c.l.b16 %v4929
        %v5491 = vunpack.c.h.b16 %v4929
        %v5492 = vunpack.c.l.b16 %v4930
        %v5493 = vunpack.c.h.b16 %v4930
        %v5494 = vunpack.c.l.b16 %v4931
        %v5495 = vunpack.c.h.b16 %v4931
        %v5496 = vunpack.c.l.b16 %v4932
        %v5497 = vunpack.c.h.b16 %v4932
        %v5498 = vunpack.c.l.b16 %v4933
        %v5499 = vunpack.c.h.b16 %v4933
        %v5500 = vunpack.c.l.b16 %v4934
        %v5501 = vunpack.c.h.b16 %v4934
        %v5502 = vunpack.c.l.b16 %v4935
        %v5503 = vunpack.c.h.b16 %v4935
        %v5504 = vunpack.c.l.b16 %v4936
        %v5505 = vunpack.c.h.b16 %v4936
        %v5506 = vunpack.c.l.b16 %v4937
        %v5507 = vunpack.c.h.b16 %v4937
        %v5508 = vunpack.c.l.b16 %v4938
        %v5509 = vunpack.c.h.b16 %v4938
        %v5510 = vunpack.c.l.b16 %v4939
        %v5511 = vunpack.c.h.b16 %v4939
        %v5512 = vunpack.c.l.b16 %v4940
        %v5513 = vunpack.c.h.b16 %v4940
        %v5514 = vunpack.c.l.b16 %v4941
        %v5515 = vunpack.c.h.b16 %v4941
        %v5516 = vunpack.c.l.b16 %v4942
        %v5517 = vunpack.c.h.b16 %v4942
        %v5518 = vunpack.c.l.b16 %v4943
        %v5519 = vunpack.c.h.b16 %v4943
        %v5520 = vunpack.c.l.b16 %v4944
        %v5521 = vunpack.c.h.b16 %v4944
        %v5522 = vunpack.c.l.b16 %v4945
        %v5523 = vunpack.c.h.b16 %v4945
        %v5524 = vunpack.c.l.b16 %v4946
        %v5525 = vunpack.c.h.b16 %v4946
        %v5526 = vunpack.c.l.b16 %v4947
        %v5527 = vunpack.c.h.b16 %v4947
        %v5528 = vunpack.c.l.b16 %v4948
        %v5529 = vunpack.c.h.b16 %v4948
        %v5530 = vunpack.c.l.b16 %v4949
        %v5531 = vunpack.c.h.b16 %v4949
        %v5532 = vunpack.c.l.b16 %v4950
        %v5533 = vunpack.c.h.b16 %v4950
        %v5534 = vunpack.c.l.b16 %v4951
        %v5535 = vunpack.c.h.b16 %v4951
        %v5536 = vunpack.c.l.b16 %v4952
        %v5537 = vunpack.c.h.b16 %v4952
        %v5538 = vunpack.c.l.b16 %v4953
        %v5539 = vunpack.c.h.b16 %v4953
        %v5540 = vunpack.c.l.b16 %v4954
        %v5541 = vunpack.c.h.b16 %v4954
        %v5542 = vunpack.c.l.b16 %v4955
        %v5543 = vunpack.c.h.b16 %v4955
        %v5544 = vunpack.c.l.b16 %v4956
        %v5545 = vunpack.c.h.b16 %v4956
        %v5546 = vunpack.c.l.b16 %v4957
        %v5547 = vunpack.c.h.b16 %v4957
        %v5548 = vunpack.c.l.b16 %v4958
        %v5549 = vunpack.c.h.b16 %v4958
        %v5550 = vunpack.c.l.b16 %v4959
        %v5551 = vunpack.c.h.b16 %v4959
        %v5552 = vunpack.c.l.b16 %v4960
        %v5553 = vunpack.c.h.b16 %v4960
        %v5554 = vunpack.c.l.b16 %v4961
        %v5555 = vunpack.c.h.b16 %v4961
        %v5556 = vunpack.c.l.b16 %v4962
        %v5557 = vunpack.c.h.b16 %v4962
        %v5558 = vunpack.c.l.b16 %v4963
        %v5559 = vunpack.c.h.b16 %v4963
        %v5560 = vunpack.c.l.b16 %v4964
        %v5561 = vunpack.c.h.b16 %v4964
        %v5562 = vunpack.c.l.b16 %v4965
        %v5563 = vunpack.c.h.b16 %v4965
        %v5564 = vunpack.c.l.b16 %v4966
        %v5565 = vunpack.c.h.b16 %v4966
        %v5566 = vunpack.c.l.b16 %v4967
        %v5567 = vunpack.c.h.b16 %v4967
        %v5568 = vunpack.c.l.b16 %v4968
        %v5569 = vunpack.c.h.b16 %v4968
        %v5570 = vunpack.c.l.b16 %v4969
        %v5571 = vunpack.c.h.b16 %v4969
        %v5572 = vunpack.c.l.b16 %v4970
        %v5573 = vunpack.c.h.b16 %v4970
        %v5574 = vunpack.c.l.b16 %v4971
        %v5575 = vunpack.c.h.b16 %v4971
        %v5576 = vunpack.c.l.b16 %v4972
        %v5577 = vunpack.c.h.b16 %v4972
        %v5578 = vunpack.c.l.b16 %v4973
        %v5579 = vunpack.c.h.b16 %v4973
        %v5580 = vunpack.c.l.b16 %v4974
        %v5581 = vunpack.c.h.b16 %v4974
        %v5582 = vunpack.c.l.b16 %v4975
        %v5583 = vunpack.c.h.b16 %v4975
        %v5584 = vunpack.c.l.b16 %v4976
        %v5585 = vunpack.c.h.b16 %v4976
        %v5586 = vunpack.c.l.b16 %v4977
        %v5587 = vunpack.c.h.b16 %v4977
        %v5588 = vunpack.c.l.b16 %v4978
        %v5589 = vunpack.c.h.b16 %v4978
        %v5590 = vunpack.c.l.b16 %v4979
        %v5591 = vunpack.c.h.b16 %v4979
        %v5592 = vunpack.c.l.b16 %v4980
        %v5593 = vunpack.c.h.b16 %v4980
        %v5594 = vunpack.c.l.b16 %v4981
        %v5595 = vunpack.c.h.b16 %v4981
        %v5596 = vunpack.c.l.b16 %v4982
        %v5597 = vunpack.c.h.b16 %v4982
        %v5598 = vunpack.c.l.b16 %v4983
        %v5599 = vunpack.c.h.b16 %v4983
        %v5600 = vunpack.c.l.b16 %v4984
        %v5601 = vunpack.c.h.b16 %v4984
        %v5602 = vunpack.c.l.b16 %v4985
        %v5603 = vunpack.c.h.b16 %v4985
        %v5604 = vunpack.c.l.b16 %v4986
        %v5605 = vunpack.c.h.b16 %v4986
        %v5606 = vunpack.c.l.b16 %v4987
        %v5607 = vunpack.c.h.b16 %v4987
        %v5608 = vunpack.c.l.b16 %v4988
        %v5609 = vunpack.c.h.b16 %v4988
        %v5610 = vunpack.c.l.b16 %v4989
        %v5611 = vunpack.c.h.b16 %v4989
        %v5612 = vunpack.c.l.b16 %v4990
        %v5613 = vunpack.c.h.b16 %v4990
        %v5614 = vunpack.c.l.b16 %v4991
        %v5615 = vunpack.c.h.b16 %v4991
        %v5616 = vunpack.c.l.b16 %v4992
        %v5617 = vunpack.c.h.b16 %v4992
        %v5618 = vunpack.c.l.b16 %v4993
        %v5619 = vunpack.c.h.b16 %v4993
        %v5620 = vunpack.c.l.b16 %v4994
        %v5621 = vunpack.c.h.b16 %v4994
        %v5622 = vunpack.c.l.b16 %v4995
        %v5623 = vunpack.c.h.b16 %v4995
        %v5624 = vunpack.c.l.b16 %v4996
        %v5625 = vunpack.c.h.b16 %v4996
        %v5626 = vunpack.c.l.b16 %v4997
        %v5627 = vunpack.c.h.b16 %v4997
        %v5628 = vunpack.c.l.b16 %v4998
        %v5629 = vunpack.c.h.b16 %v4998
        %v5630 = vunpack.c.l.b16 %v4999
        %v5631 = vunpack.c.h.b16 %v4999
        %v5632 = vunpack.c.l.b16 %v5000
        %v5633 = vunpack.c.h.b16 %v5000
        %v5634 = vunpack.c.l.b16 %v5001
        %v5635 = vunpack.c.h.b16 %v5001
        %v5636 = vunpack.c.l.b16 %v5002
        %v5637 = vunpack.c.h.b16 %v5002
        %v5638 = vunpack.c.l.b16 %v5003
        %v5639 = vunpack.c.h.b16 %v5003
        %v5640 = vunpack.c.l.b16 %v5004
        %v5641 = vunpack.c.h.b16 %v5004
        %v5642 = vunpack.c.l.b16 %v5005
        %v5643 = vunpack.c.h.b16 %v5005
        %v5644 = vunpack.c.l.b16 %v5006
        %v5645 = vunpack.c.h.b16 %v5006
        %v5646 = vunpack.c.l.b16 %v5007
        %v5647 = vunpack.c.h.b16 %v5007
        %v5648 = vunpack.c.l.b16 %v5008
        %v5649 = vunpack.c.h.b16 %v5008
        %v5650 = vunpack.c.l.b16 %v5009
        %v5651 = vunpack.c.h.b16 %v5009
        %v5652 = vunpack.c.l.b16 %v5010
        %v5653 = vunpack.c.h.b16 %v5010
        %v5654 = vunpack.c.l.b16 %v5011
        %v5655 = vunpack.c.h.b16 %v5011
        %v5656 = vunpack.c.l.b16 %v5012
        %v5657 = vunpack.c.h.b16 %v5012
        %v5658 = vunpack.c.l.b16 %v5013
        %v5659 = vunpack.c.h.b16 %v5013
        %v5660 = vunpack.c.l.b16 %v5014
        %v5661 = vunpack.c.h.b16 %v5014
        %v5662 = vunpack.c.l.b16 %v5015
        %v5663 = vunpack.c.h.b16 %v5015
        %v5664 = vunpack.c.l.b16 %v5016
        %v5665 = vunpack.c.h.b16 %v5016
        %v5666 = vunpack.c.l.b16 %v5017
        %v5667 = vunpack.c.h.b16 %v5017
        %v5668 = vunpack.c.l.b16 %v5018
        %v5669 = vunpack.c.h.b16 %v5018
        %v5670 = vunpack.c.l.b16 %v5019
        %v5671 = vunpack.c.h.b16 %v5019
        %v5672 = vunpack.c.l.b16 %v5020
        %v5673 = vunpack.c.h.b16 %v5020
        %v5674 = vunpack.c.l.b16 %v5021
        %v5675 = vunpack.c.h.b16 %v5021
        %v5676 = vunpack.c.l.b16 %v5022
        %v5677 = vunpack.c.h.b16 %v5022
        %v5678 = vunpack.c.l.b16 %v5023
        %v5679 = vunpack.c.h.b16 %v5023
        %v5680 = vunpack.c.l.b16 %v5024
        %v5681 = vunpack.c.h.b16 %v5024
        %v5682 = vunpack.c.l.b16 %v5025
        %v5683 = vunpack.c.h.b16 %v5025
        %v5684 = vunpack.c.l.b16 %v5026
        %v5685 = vunpack.c.h.b16 %v5026
        %v5686 = vunpack.c.l.b16 %v5027
        %v5687 = vunpack.c.h.b16 %v5027
        %v5688 = vunpack.c.l.b16 %v5028
        %v5689 = vunpack.c.h.b16 %v5028
        %v5690 = vunpack.c.l.b16 %v5029
        %v5691 = vunpack.c.h.b16 %v5029
        %v5692 = vunpack.c.l.b16 %v5030
        %v5693 = vunpack.c.h.b16 %v5030
        %v5694 = vunpack.c.l.b16 %v5031
        %v5695 = vunpack.c.h.b16 %v5031
        %v5696 = vunpack.c.l.b16 %v5032
        %v5697 = vunpack.c.h.b16 %v5032
        %v5698 = vunpack.c.l.b16 %v5033
        %v5699 = vunpack.c.h.b16 %v5033
        %v5700 = vunpack.c.l.b16 %v5034
        %v5701 = vunpack.c.h.b16 %v5034
        %v5702 = vunpack.c.l.b16 %v5035
        %v5703 = vunpack.c.h.b16 %v5035
        %v5704 = vunpack.c.l.b16 %v5036
        %v5705 = vunpack.c.h.b16 %v5036
        %v5706 = vunpack.c.l.b16 %v5037
        %v5707 = vunpack.c.h.b16 %v5037
        %v5708 = vunpack.c.l.b16 %v5038
        %v5709 = vunpack.c.h.b16 %v5038
        %v5710 = vunpack.c.l.b16 %v5039
        %v5711 = vunpack.c.h.b16 %v5039
        %v5712 = vunpack.c.l.b16 %v5040
        %v5713 = vunpack.c.h.b16 %v5040
        %v5714 = vunpack.c.l.b16 %v5041
        %v5715 = vunpack.c.h.b16 %v5041
        %v5716 = vunpack.c.l.b16 %v5042
        %v5717 = vunpack.c.h.b16 %v5042
        %v5718 = vunpack.c.l.b16 %v5043
        %v5719 = vunpack.c.h.b16 %v5043
        %v5720 = vunpack.c.l.b16 %v5044
        %v5721 = vunpack.c.h.b16 %v5044
        %v5722 = vunpack.c.l.b16 %v5045
        %v5723 = vunpack.c.h.b16 %v5045
        %v5724 = vunpack.c.l.b16 %v5046
        %v5725 = vunpack.c.h.b16 %v5046
        %v5726 = vunpack.c.l.b16 %v5047
        %v5727 = vunpack.c.h.b16 %v5047
        %v5728 = vunpack.c.l.b16 %v5048
        %v5729 = vunpack.c.h.b16 %v5048
        %v5730 = vunpack.c.l.b16 %v5049
        %v5731 = vunpack.c.h.b16 %v5049
        %v5732 = vunpack.c.l.b16 %v5050
        %v5733 = vunpack.c.h.b16 %v5050
        %v5734 = vunpack.c.l.b16 %v5051
        %v5735 = vunpack.c.h.b16 %v5051
        %v5736 = vunpack.c.l.b16 %v5052
        %v5737 = vunpack.c.h.b16 %v5052
        %v5738 = vunpack.c.l.b16 %v5053
        %v5739 = vunpack.c.h.b16 %v5053
        %v5740 = vunpack.c.l.b16 %v5054
        %v5741 = vunpack.c.h.b16 %v5054
        %v5742 = vunpack.c.l.b16 %v5055
        %v5743 = vunpack.c.h.b16 %v5055
        %v5744 = vunpack.c.l.b16 %v5056
        %v5745 = vunpack.c.h.b16 %v5056
        %v5746 = vunpack.c.l.b16 %v5057
        %v5747 = vunpack.c.h.b16 %v5057
        %v5748 = vunpack.c.l.b16 %v5058
        %v5749 = vunpack.c.h.b16 %v5058
        %v5750 = vunpack.c.l.b16 %v5059
        %v5751 = vunpack.c.h.b16 %v5059
        %v5752 = vunpack.c.l.b16 %v5060
        %v5753 = vunpack.c.h.b16 %v5060
        %v5754 = vunpack.c.l.b16 %v5061
        %v5755 = vunpack.c.h.b16 %v5061
        %v5756 = vunpack.c.l.b16 %v5062
        %v5757 = vunpack.c.h.b16 %v5062
        %v5758 = vunpack.c.l.b16 %v5063
        %v5759 = vunpack.c.h.b16 %v5063
        %v5760 = vunpack.c.l.b16 %v5064
        %v5761 = vunpack.c.h.b16 %v5064
        %v5762 = vunpack.c.l.b16 %v5065
        %v5763 = vunpack.c.h.b16 %v5065
        %v5764 = vunpack.c.l.b16 %v5066
        %v5765 = vunpack.c.h.b16 %v5066
        %v5766 = vunpack.c.l.b16 %v5067
        %v5767 = vunpack.c.h.b16 %v5067
        %v5768 = vunpack.c.l.b16 %v5068
        %v5769 = vunpack.c.h.b16 %v5068
        %v5770 = vunpack.c.l.b16 %v5069
        %v5771 = vunpack.c.h.b16 %v5069
        %v5772 = vunpack.c.l.b16 %v5070
        %v5773 = vunpack.c.h.b16 %v5070
        %v5774 = vunpack.c.l.b16 %v5071
        %v5775 = vunpack.c.h.b16 %v5071
        %v5776 = vunpack.c.l.b16 %v5072
        %v5777 = vunpack.c.h.b16 %v5072
        %v5778 = vunpack.c.l.b16 %v5073
        %v5779 = vunpack.c.h.b16 %v5073
        %v5780 = vunpack.c.l.b16 %v5074
        %v5781 = vunpack.c.h.b16 %v5074
        %v5782 = vunpack.c.l.b16 %v5075
        %v5783 = vunpack.c.h.b16 %v5075
        %v5784 = vunpack.c.l.b16 %v5076
        %v5785 = vunpack.c.h.b16 %v5076
        %v5786 = vunpack.c.l.b16 %v5077
        %v5787 = vunpack.c.h.b16 %v5077
        %v5788 = vunpack.c.l.b16 %v5078
        %v5789 = vunpack.c.h.b16 %v5078
        %v5790 = vunpack.c.l.b16 %v5079
        %v5791 = vunpack.c.h.b16 %v5079
        %v5792 = vunpack.c.l.b16 %v5080
        %v5793 = vunpack.c.h.b16 %v5080
        %v5794 = vunpack.c.l.b16 %v5081
        %v5795 = vunpack.c.h.b16 %v5081
        %v5796 = vunpack.c.l.b16 %v5082
        %v5797 = vunpack.c.h.b16 %v5082
        %v5798 = vunpack.c.l.b16 %v5083
        %v5799 = vunpack.c.h.b16 %v5083
        %v5800 = vunpack.c.l.b16 %v5084
        %v5801 = vunpack.c.h.b16 %v5084
        %v5802 = vunpack.c.l.b16 %v5085
        %v5803 = vunpack.c.h.b16 %v5085
        %v5804 = vunpack.c.l.b16 %v5086
        %v5805 = vunpack.c.h.b16 %v5086
        %v5806 = vunpack.c.l.b16 %v5087
        %v5807 = vunpack.c.h.b16 %v5087
        %v5808 = vunpack.c.l.b16 %v5088
        %v5809 = vunpack.c.h.b16 %v5088
        %v5810 = vunpack.c.l.b16 %v5089
        %v5811 = vunpack.c.h.b16 %v5089
        %v5812 = vunpack.c.l.b16 %v5090
        %v5813 = vunpack.c.h.b16 %v5090
        %v5814 = vunpack.c.l.b16 %v5091
        %v5815 = vunpack.c.h.b16 %v5091
        %v5816 = vunpack.c.l.b16 %v5092
        %v5817 = vunpack.c.h.b16 %v5092
        %v5818 = vunpack.c.l.b16 %v5093
        %v5819 = vunpack.c.h.b16 %v5093
        %v5820 = vunpack.c.l.b16 %v5094
        %v5821 = vunpack.c.h.b16 %v5094
        %v5822 = vunpack.c.l.b16 %v5095
        %v5823 = vunpack.c.h.b16 %v5095
        %v5824 = vunpack.c.l.b16 %v5096
        %v5825 = vunpack.c.h.b16 %v5096
        %v5826 = vunpack.c.l.b16 %v5097
        %v5827 = vunpack.c.h.b16 %v5097
        %v5828 = vunpack.c.l.b16 %v5098
        %v5829 = vunpack.c.h.b16 %v5098
        %v5830 = vunpack.c.l.b16 %v5099
        %v5831 = vunpack.c.h.b16 %v5099
        %v5832 = vunpack.c.l.b16 %v5100
        %v5833 = vunpack.c.h.b16 %v5100
        %v5834 = vunpack.c.l.b16 %v5101
        %v5835 = vunpack.c.h.b16 %v5101
        %v5836 = vunpack.c.l.b16 %v5102
        %v5837 = vunpack.c.h.b16 %v5102
        %v5838 = vunpack.c.l.b16 %v5103
        %v5839 = vunpack.c.h.b16 %v5103
        %v5840 = vunpack.c.l.b16 %v5104
        %v5841 = vunpack.c.h.b16 %v5104
        %v5842 = vunpack.c.l.b16 %v5105
        %v5843 = vunpack.c.h.b16 %v5105
        %v5844 = vunpack.c.l.b16 %v5106
        %v5845 = vunpack.c.h.b16 %v5106
        %v5846 = vunpack.c.l.b16 %v5107
        %v5847 = vunpack.c.h.b16 %v5107
        %v5848 = vunpack.c.l.b16 %v5108
        %v5849 = vunpack.c.h.b16 %v5108
        %v5850 = vunpack.c.l.b16 %v5109
        %v5851 = vunpack.c.h.b16 %v5109
        %v5852 = vunpack.c.l.b16 %v5110
        %v5853 = vunpack.c.h.b16 %v5110
        %v5854 = vunpack.c.l.b16 %v5111
        %v5855 = vunpack.c.h.b16 %v5111
        %v5856 = vunpack.c.l.b16 %v5112
        %v5857 = vunpack.c.h.b16 %v5112
        %v5858 = vunpack.c.l.b16 %v5113
        %v5859 = vunpack.c.h.b16 %v5113
        %v5860 = vunpack.c.l.b16 %v5114
        %v5861 = vunpack.c.h.b16 %v5114
        %v5862 = vunpack.c.l.b16 %v5115
        %v5863 = vunpack.c.h.b16 %v5115
        %v5864 = vunpack.c.l.b16 %v5116
        %v5865 = vunpack.c.h.b16 %v5116
        %v5866 = vunpack.c.l.b16 %v5117
        %v5867 = vunpack.c.h.b16 %v5117
        %v5868 = vunpack.c.l.b16 %v5118
        %v5869 = vunpack.c.h.b16 %v5118
        %v5870 = vunpack.c.l.b16 %v5119
        %v5871 = vunpack.c.h.b16 %v5119
        %v5872 = vunpack.c.l.b16 %v5120
        %v5873 = vunpack.c.h.b16 %v5120
        %v5874 = vunpack.c.l.b16 %v5121
        %v5875 = vunpack.c.h.b16 %v5121
        %v5876 = vunpack.c.l.b16 %v5122
        %v5877 = vunpack.c.h.b16 %v5122
        %v5878 = vunpack.c.l.b16 %v5123
        %v5879 = vunpack.c.h.b16 %v5123
        %v5880 = vunpack.c.l.b16 %v5124
        %v5881 = vunpack.c.h.b16 %v5124
        %v5882 = vunpack.c.l.b16 %v5125
        %v5883 = vunpack.c.h.b16 %v5125
        %v5884 = vunpack.c.l.b16 %v5126
        %v5885 = vunpack.c.h.b16 %v5126
        %v5886 = vunpack.c.l.b16 %v5127
        %v5887 = vunpack.c.h.b16 %v5127
        %v5888 = vunpack.c.l.b16 %v5128
        %v5889 = vunpack.c.h.b16 %v5128
        %v5890 = vunpack.c.l.b16 %v5129
        %v5891 = vunpack.c.h.b16 %v5129
        %v5892 = vunpack.c.l.b16 %v5130
        %v5893 = vunpack.c.h.b16 %v5130
        %v5894 = vunpack.c.l.b16 %v5131
        %v5895 = vunpack.c.h.b16 %v5131
        %v5896 = vunpack.c.l.b16 %v5132
        %v5897 = vunpack.c.h.b16 %v5132
        %v5898 = vunpack.c.l.b16 %v5133
        %v5899 = vunpack.c.h.b16 %v5133
        %v5900 = vunpack.c.l.b16 %v5134
        %v5901 = vunpack.c.h.b16 %v5134
        %v5902 = vunpack.c.l.b16 %v5135
        %v5903 = vunpack.c.h.b16 %v5135
        %v5904 = vunpack.c.l.b16 %v5136
        %v5905 = vunpack.c.h.b16 %v5136
        %v5906 = vunpack.c.l.b16 %v5137
        %v5907 = vunpack.c.h.b16 %v5137
        %v5908 = vunpack.c.l.b16 %v5138
        %v5909 = vunpack.c.h.b16 %v5138
        %v5910 = vunpack.c.l.b16 %v5139
        %v5911 = vunpack.c.h.b16 %v5139
        %v5912 = vunpack.c.l.b16 %v5140
        %v5913 = vunpack.c.h.b16 %v5140
        %v5914 = vunpack.c.l.b16 %v5141
        %v5915 = vunpack.c.h.b16 %v5141
        %v5916 = vunpack.c.l.b16 %v5142
        %v5917 = vunpack.c.h.b16 %v5142
        %v5918 = vunpack.c.l.b16 %v5143
        %v5919 = vunpack.c.h.b16 %v5143
        %v5920 = vunpack.c.l.b16 %v5144
        %v5921 = vunpack.c.h.b16 %v5144
        %v5922 = vunpack.c.l.b16 %v5145
        %v5923 = vunpack.c.h.b16 %v5145
        %v5924 = vunpack.c.l.b16 %v5146
        %v5925 = vunpack.c.h.b16 %v5146
        %v5926 = vunpack.c.l.b16 %v5147
        %v5927 = vunpack.c.h.b16 %v5147
        %v5928 = vunpack.c.l.b16 %v5148
        %v5929 = vunpack.c.h.b16 %v5148
        %v5930 = vunpack.c.l.b16 %v5149
        %v5931 = vunpack.c.h.b16 %v5149
        %v5932 = vunpack.c.l.b16 %v5150
        %v5933 = vunpack.c.h.b16 %v5150
        %v5934 = vunpack.c.l.b16 %v5151
        %v5935 = vunpack.c.h.b16 %v5151
        %v5936 = vunpack.c.l.b16 %v5152
        %v5937 = vunpack.c.h.b16 %v5152
        %v5938 = vunpack.c.l.b16 %v5153
        %v5939 = vunpack.c.h.b16 %v5153
        %v5940 = vunpack.c.l.b16 %v5154
        %v5941 = vunpack.c.h.b16 %v5154
        %v5942 = vunpack.c.l.b16 %v5155
        %v5943 = vunpack.c.h.b16 %v5155
        %v5944 = vunpack.c.l.b16 %v5156
        %v5945 = vunpack.c.h.b16 %v5156
        %v5946 = vunpack.c.l.b16 %v5157
        %v5947 = vunpack.c.h.b16 %v5157
        %v5948 = vpack.c.b16 %v5440, %v5436
        %v5949 = vpack.c.b16 %v5441, %v5437
        %v5950 = vpack.c.b16 %v5442, %v5438
        %v5951 = vpack.c.b16 %v5443, %v5439
        %v5952 = vpack.c.b16 %v5448, %v5444
        %v5953 = vpack.c.b16 %v5449, %v5445
        %v5954 = vpack.c.b16 %v5450, %v5446
        %v5955 = vpack.c.b16 %v5451, %v5447
        %v5956 = vpack.c.b16 %v5456, %v5452
        %v5957 = vpack.c.b16 %v5457, %v5453
        %v5958 = vpack.c.b16 %v5458, %v5454
        %v5959 = vpack.c.b16 %v5459, %v5455
        %v5960 = vpack.c.b16 %v5464, %v5460
        %v5961 = vpack.c.b16 %v5465, %v5461
        %v5962 = vpack.c.b16 %v5466, %v5462
        %v5963 = vpack.c.b16 %v5467, %v5463
        %v5964 = vpack.c.b16 %v5472, %v5468
        %v5965 = vpack.c.b16 %v5473, %v5469
        %v5966 = vpack.c.b16 %v5474, %v5470
        %v5967 = vpack.c.b16 %v5475, %v5471
        %v5968 = vpack.c.b16 %v5480, %v5476
        %v5969 = vpack.c.b16 %v5481, %v5477
        %v5970 = vpack.c.b16 %v5482, %v5478
        %v5971 = vpack.c.b16 %v5483, %v5479
        %v5972 = vpack.c.b16 %v5488, %v5484
        %v5973 = vpack.c.b16 %v5489, %v5485
        %v5974 = vpack.c.b16 %v5490, %v5486
        %v5975 = vpack.c.b16 %v5491, %v5487
        %v5976 = vpack.c.b16 %v5496, %v5492
        %v5977 = vpack.c.b16 %v5497, %v5493
        %v5978 = vpack.c.b16 %v5498, %v5494
        %v5979 = vpack.c.b16 %v5499, %v5495
        %v5980 = vpack.c.b16 %v5504, %v5500
        %v5981 = vpack.c.b16 %v5505, %v5501
        %v5982 = vpack.c.b16 %v5506, %v5502
        %v5983 = vpack.c.b16 %v5507, %v5503
        %v5984 = vpack.c.b16 %v5512, %v5508
        %v5985 = vpack.c.b16 %v5513, %v5509
        %v5986 = vpack.c.b16 %v5514, %v5510
        %v5987 = vpack.c.b16 %v5515, %v5511
        %v5988 = vpack.c.b16 %v5520, %v5516
        %v5989 = vpack.c.b16 %v5521, %v5517
        %v5990 = vpack.c.b16 %v5522, %v5518
        %v5991 = vpack.c.b16 %v5523, %v5519
        %v5992 = vpack.c.b16 %v5528, %v5524
        %v5993 = vpack.c.b16 %v5529, %v5525
        %v5994 = vpack.c.b16 %v5530, %v5526
        %v5995 = vpack.c.b16 %v5531, %v5527
        %v5996 = vpack.c.b16 %v5536, %v5532
        %v5997 = vpack.c.b16 %v5537, %v5533
        %v5998 = vpack.c.b16 %v5538, %v5534
        %v5999 = vpack.c.b16 %v5539, %v5535
        %v6000 = vpack.c.b16 %v5544, %v5540
        %v6001 = vpack.c.b16 %v5545, %v5541
        %v6002 = vpack.c.b16 %v5546, %v5542
        %v6003 = vpack.c.b16 %v5547, %v5543
        %v6004 = vpack.c.b16 %v5552, %v5548
        %v6005 = vpack.c.b16 %v5553, %v5549
        %v6006 = vpack.c.b16 %v5554, %v5550
        %v6007 = vpack.c.b16 %v5555, %v5551
        %v6008 = vpack.c.b16 %v5560, %v5556
        %v6009 = vpack.c.b16 %v5561, %v5557
        %v6010 = vpack.c.b16 %v5562, %v5558
        %v6011 = vpack.c.b16 %v5563, %v5559
        %v6012 = vpack.c.b16 %v5568, %v5564
        %v6013 = vpack.c.b16 %v5569, %v5565
        %v6014 = vpack.c.b16 %v5570, %v5566
        %v6015 = vpack.c.b16 %v5571, %v5567
        %v6016 = vpack.c.b16 %v5576, %v5572
        %v6017 = vpack.c.b16 %v5577, %v5573
        %v6018 = vpack.c.b16 %v5578, %v5574
        %v6019 = vpack.c.b16 %v5579, %v5575
        %v6020 = vpack.c.b16 %v5584, %v5580
        %v6021 = vpack.c.b16 %v5585, %v5581
        %v6022 = vpack.c.b16 %v5586, %v5582
        %v6023 = vpack.c.b16 %v5587, %v5583
        %v6024 = vpack.c.b16 %v5592, %v5588
        %v6025 = vpack.c.b16 %v5593, %v5589
        %v6026 = vpack.c.b16 %v5594, %v5590
        %v6027 = vpack.c.b16 %v5595, %v5591
        %v6028 = vpack.c.b16 %v5600, %v5596
        %v6029 = vpack.c.b16 %v5601, %v5597
        %v6030 = vpack.c.b16 %v5602, %v5598
        %v6031 = vpack.c.b16 %v5603, %v5599
        %v6032 = vpack.c.b16 %v5608, %v5604
        %v6033 = vpack.c.b16 %v5609, %v5605
        %v6034 = vpack.c.b16 %v5610, %v5606
        %v6035 = vpack.c.b16 %v5611, %v5607
        %v6036 = vpack.c.b16 %v5616, %v5612
        %v6037 = vpack.c.b16 %v5617, %v5613
        %v6038 = vpack.c.b16 %v5618, %v5614
        %v6039 = vpack.c.b16 %v5619, %v5615
        %v6040 = vpack.c.b16 %v5624, %v5620
        %v6041 = vpack.c.b16 %v5625, %v5621
        %v6042 = vpack.c.b16 %v5626, %v5622
        %v6043 = vpack.c.b16 %v5627, %v5623
        %v6044 = vpack.c.b16 %v5632, %v5628
        %v6045 = vpack.c.b16 %v5633, %v5629
        %v6046 = vpack.c.b16 %v5634, %v5630
        %v6047 = vpack.c.b16 %v5635, %v5631
        %v6048 = vpack.c.b16 %v5640, %v5636
        %v6049 = vpack.c.b16 %v5641, %v5637
        %v6050 = vpack.c.b16 %v5642, %v5638
        %v6051 = vpack.c.b16 %v5643, %v5639
        %v6052 = vpack.c.b16 %v5648, %v5644
        %v6053 = vpack.c.b16 %v5649, %v5645
        %v6054 = vpack.c.b16 %v5650, %v5646
        %v6055 = vpack.c.b16 %v5651, %v5647
        %v6056 = vpack.c.b16 %v5656, %v5652
        %v6057 = vpack.c.b16 %v5657, %v5653
        %v6058 = vpack.c.b16 %v5658, %v5654
        %v6059 = vpack.c.b16 %v5659, %v5655
        %v6060 = vpack.c.b16 %v5664, %v5660
        %v6061 = vpack.c.b16 %v5665, %v5661
        %v6062 = vpack.c.b16 %v5666, %v5662
        %v6063 = vpack.c.b16 %v5667, %v5663
        %v6064 = vpack.c.b16 %v5672, %v5668
        %v6065 = vpack.c.b16 %v5673, %v5669
        %v6066 = vpack.c.b16 %v5674, %v5670
        %v6067 = vpack.c.b16 %v5675, %v5671
        %v6068 = vpack.c.b16 %v5680, %v5676
        %v6069 = vpack.c.b16 %v5681, %v5677
        %v6070 = vpack.c.b16 %v5682, %v5678
        %v6071 = vpack.c.b16 %v5683, %v5679
        %v6072 = vpack.c.b16 %v5688, %v5684
        %v6073 = vpack.c.b16 %v5689, %v5685
        %v6074 = vpack.c.b16 %v5690, %v5686
        %v6075 = vpack.c.b16 %v5691, %v5687
        %v6076 = vpack.c.b16 %v5696, %v5692
        %v6077 = vpack.c.b16 %v5697, %v5693
        %v6078 = vpack.c.b16 %v5698, %v5694
        %v6079 = vpack.c.b16 %v5699, %v5695
        %v6080 = vpack.c.b16 %v5704, %v5700
        %v6081 = vpack.c.b16 %v5705, %v5701
        %v6082 = vpack.c.b16 %v5706, %v5702
        %v6083 = vpack.c.b16 %v5707, %v5703
        %v6084 = vpack.c.b16 %v5712, %v5708
        %v6085 = vpack.c.b16 %v5713, %v5709
        %v6086 = vpack.c.b16 %v5714, %v5710
        %v6087 = vpack.c.b16 %v5715, %v5711
        %v6088 = vpack.c.b16 %v5720, %v5716
        %v6089 = vpack.c.b16 %v5721, %v5717
        %v6090 = vpack.c.b16 %v5722, %v5718
        %v6091 = vpack.c.b16 %v5723, %v5719
        %v6092 = vpack.c.b16 %v5728, %v5724
        %v6093 = vpack.c.b16 %v5729, %v5725
        %v6094 = vpack.c.b16 %v5730, %v5726
        %v6095 = vpack.c.b16 %v5731, %v5727
        %v6096 = vpack.c.b16 %v5736, %v5732
        %v6097 = vpack.c.b16 %v5737, %v5733
        %v6098 = vpack.c.b16 %v5738, %v5734
        %v6099 = vpack.c.b16 %v5739, %v5735
        %v6100 = vpack.c.b16 %v5744, %v5740
        %v6101 = vpack.c.b16 %v5745, %v5741
        %v6102 = vpack.c.b16 %v5746, %v5742
        %v6103 = vpack.c.b16 %v5747, %v5743
        %v6104 = vpack.c.b16 %v5752, %v5748
        %v6105 = vpack.c.b16 %v5753, %v5749
        %v6106 = vpack.c.b16 %v5754, %v5750
        %v6107 = vpack.c.b16 %v5755, %v5751
        %v6108 = vpack.c.b16 %v5760, %v5756
        %v6109 = vpack.c.b16 %v5761, %v5757
        %v6110 = vpack.c.b16 %v5762, %v5758
        %v6111 = vpack.c.b16 %v5763, %v5759
        %v6112 = vpack.c.b16 %v5768, %v5764
        %v6113 = vpack.c.b16 %v5769, %v5765
        %v6114 = vpack.c.b16 %v5770, %v5766
        %v6115 = vpack.c.b16 %v5771, %v5767
        %v6116 = vpack.c.b16 %v5776, %v5772
        %v6117 = vpack.c.b16 %v5777, %v5773
        %v6118 = vpack.c.b16 %v5778, %v5774
        %v6119 = vpack.c.b16 %v5779, %v5775
        %v6120 = vpack.c.b16 %v5784, %v5780
        %v6121 = vpack.c.b16 %v5785, %v5781
        %v6122 = vpack.c.b16 %v5786, %v5782
        %v6123 = vpack.c.b16 %v5787, %v5783
        %v6124 = vpack.c.b16 %v5792, %v5788
        %v6125 = vpack.c.b16 %v5793, %v5789
        %v6126 = vpack.c.b16 %v5794, %v5790
        %v6127 = vpack.c.b16 %v5795, %v5791
        %v6128 = vpack.c.b16 %v5800, %v5796
        %v6129 = vpack.c.b16 %v5801, %v5797
        %v6130 = vpack.c.b16 %v5802, %v5798
        %v6131 = vpack.c.b16 %v5803, %v5799
        %v6132 = vpack.c.b16 %v5808, %v5804
        %v6133 = vpack.c.b16 %v5809, %v5805
        %v6134 = vpack.c.b16 %v5810, %v5806
        %v6135 = vpack.c.b16 %v5811, %v5807
        %v6136 = vpack.c.b16 %v5816, %v5812
        %v6137 = vpack.c.b16 %v5817, %v5813
        %v6138 = vpack.c.b16 %v5818, %v5814
        %v6139 = vpack.c.b16 %v5819, %v5815
        %v6140 = vpack.c.b16 %v5824, %v5820
        %v6141 = vpack.c.b16 %v5825, %v5821
        %v6142 = vpack.c.b16 %v5826, %v5822
        %v6143 = vpack.c.b16 %v5827, %v5823
        %v6144 = vpack.c.b16 %v5832, %v5828
        %v6145 = vpack.c.b16 %v5833, %v5829
        %v6146 = vpack.c.b16 %v5834, %v5830
        %v6147 = vpack.c.b16 %v5835, %v5831
        %v6148 = vpack.c.b16 %v5840, %v5836
        %v6149 = vpack.c.b16 %v5841, %v5837
        %v6150 = vpack.c.b16 %v5842, %v5838
        %v6151 = vpack.c.b16 %v5843, %v5839
        %v6152 = vpack.c.b16 %v5848, %v5844
        %v6153 = vpack.c.b16 %v5849, %v5845
        %v6154 = vpack.c.b16 %v5850, %v5846
        %v6155 = vpack.c.b16 %v5851, %v5847
        %v6156 = vpack.c.b16 %v5856, %v5852
        %v6157 = vpack.c.b16 %v5857, %v5853
        %v6158 = vpack.c.b16 %v5858, %v5854
        %v6159 = vpack.c.b16 %v5859, %v5855
        %v6160 = vpack.c.b16 %v5864, %v5860
        %v6161 = vpack.c.b16 %v5865, %v5861
        %v6162 = vpack.c.b16 %v5866, %v5862
        %v6163 = vpack.c.b16 %v5867, %v5863
        %v6164 = vpack.c.b16 %v5872, %v5868
        %v6165 = vpack.c.b16 %v5873, %v5869
        %v6166 = vpack.c.b16 %v5874, %v5870
        %v6167 = vpack.c.b16 %v5875, %v5871
        %v6168 = vpack.c.b16 %v5880, %v5876
        %v6169 = vpack.c.b16 %v5881, %v5877
        %v6170 = vpack.c.b16 %v5882, %v5878
        %v6171 = vpack.c.b16 %v5883, %v5879
        %v6172 = vpack.c.b16 %v5888, %v5884
        %v6173 = vpack.c.b16 %v5889, %v5885
        %v6174 = vpack.c.b16 %v5890, %v5886
        %v6175 = vpack.c.b16 %v5891, %v5887
        %v6176 = vpack.c.b16 %v5896, %v5892
        %v6177 = vpack.c.b16 %v5897, %v5893
        %v6178 = vpack.c.b16 %v5898, %v5894
        %v6179 = vpack.c.b16 %v5899, %v5895
        %v6180 = vpack.c.b16 %v5904, %v5900
        %v6181 = vpack.c.b16 %v5905, %v5901
        %v6182 = vpack.c.b16 %v5906, %v5902
        %v6183 = vpack.c.b16 %v5907, %v5903
        %v6184 = vpack.c.b16 %v5912, %v5908
        %v6185 = vpack.c.b16 %v5913, %v5909
        %v6186 = vpack.c.b16 %v5914, %v5910
        %v6187 = vpack.c.b16 %v5915, %v5911
        %v6188 = vpack.c.b16 %v5920, %v5916
        %v6189 = vpack.c.b16 %v5921, %v5917
        %v6190 = vpack.c.b16 %v5922, %v5918
        %v6191 = vpack.c.b16 %v5923, %v5919
        %v6192 = vpack.c.b16 %v5928, %v5924
        %v6193 = vpack.c.b16 %v5929, %v5925
        %v6194 = vpack.c.b16 %v5930, %v5926
        %v6195 = vpack.c.b16 %v5931, %v5927
        %v6196 = vpack.c.b16 %v5936, %v5932
        %v6197 = vpack.c.b16 %v5937, %v5933
        %v6198 = vpack.c.b16 %v5938, %v5934
        %v6199 = vpack.c.b16 %v5939, %v5935
        %v6200 = vpack.c.b16 %v5944, %v5940
        %v6201 = vpack.c.b16 %v5945, %v5941
        %v6202 = vpack.c.b16 %v5946, %v5942
        %v6203 = vpack.c.b16 %v5947, %v5943
        %6460 = vmatprep.subr.bf16.mxu0 %v5977
        %6461 = vmatpush1.bf16.msra.mxu0 %v5976
        %6462 = vmatprep.subr.bf16.mxu0 %v5973
        %6463 = vmatpush1.bf16.msra.mxu0 %v5972
        %6464 = vmatprep.subr.bf16.mxu0 %v5969
        %6465 = vmatpush1.bf16.msra.mxu0 %v5968
        %6466 = vmatprep.subr.bf16.mxu0 %v5965
        %6467 = vmatpush1.bf16.msra.mxu0 %v5964
        %6468 = vmatprep.subr.bf16.mxu0 %v5961
        %6469 = vmatpush1.bf16.msra.mxu0 %v5960
        %6470 = vmatprep.subr.bf16.mxu0 %v5957
        %6471 = vmatpush1.bf16.msra.mxu0 %v5956
        %6472 = vmatprep.subr.bf16.mxu0 %v5953
        %6473 = vmatpush1.bf16.msra.mxu0 %v5952
        %6474 = vmatprep.subr.bf16.mxu0 %v5949
        %6475 = vmatpush1.bf16.msra.mxu0 %v5948
        %6476 = vmatprep.subr.bf16.mxu0 %v6009
        %6477 = vmatpush2.bf16.msra.mxu0 %v6008
        %6478 = vmatprep.subr.bf16.mxu0 %v6005
        %6479 = vmatpush2.bf16.msra.mxu0 %v6004
        %6480 = vmatprep.subr.bf16.mxu0 %v6001
        %6481 = vmatpush2.bf16.msra.mxu0 %v6000
        %6482 = vmatprep.subr.bf16.mxu0 %v5997
        %6483 = vmatpush2.bf16.msra.mxu0 %v5996
        %6484 = vmatprep.subr.bf16.mxu0 %v5993
        %6485 = vmatpush2.bf16.msra.mxu0 %v5992
        %6486 = vmatprep.subr.bf16.mxu0 %v5989
        %6487 = vmatpush2.bf16.msra.mxu0 %v5988
        %6488 = vmatprep.subr.bf16.mxu0 %v5985
        %6489 = vmatpush2.bf16.msra.mxu0 %v5984
        %6490 = vmatprep.subr.bf16.mxu0 %v5981
        %6491 = vmatpush2.bf16.msra.mxu0 %v5980
        %6492 = vmatprep.mubr.bf16.mxu0 %v4895
        %6493 = vmatmul.mubr.bf16.gmra.mxu0 %v4894
        %v6494 = vpop.f32.mrf.mxu0
        %v6495 = vadd.f32 %v5163, %v6494
        %v6496 = vpop.f32.mrf.mxu0
        %v6497 = vadd.f32 %v5167, %v6496
        %v6498 = vpop.f32.mrf.mxu0
        %v6499 = vadd.f32 %v5163, %v6498
        %v6500 = vpop.f32.mrf.mxu0
        %v6501 = vadd.f32 %v5167, %v6500
        %6502 = vdwg.mxu0
        %6503 = vmatprep.subr.bf16.mxu0 %v6041
        %6504 = vmatpush1.bf16.msra.mxu0 %v6040
        %6505 = vmatprep.subr.bf16.mxu0 %v6037
        %6506 = vmatpush1.bf16.msra.mxu0 %v6036
        %6507 = vmatprep.subr.bf16.mxu0 %v6033
        %6508 = vmatpush1.bf16.msra.mxu0 %v6032
        %6509 = vmatprep.subr.bf16.mxu0 %v6029
        %6510 = vmatpush1.bf16.msra.mxu0 %v6028
        %6511 = vmatprep.subr.bf16.mxu0 %v6025
        %6512 = vmatpush1.bf16.msra.mxu0 %v6024
        %6513 = vmatprep.subr.bf16.mxu0 %v6021
        %6514 = vmatpush1.bf16.msra.mxu0 %v6020
        %6515 = vmatprep.subr.bf16.mxu0 %v6017
        %6516 = vmatpush1.bf16.msra.mxu0 %v6016
        %6517 = vmatprep.subr.bf16.mxu0 %v6013
        %6518 = vmatpush1.bf16.msra.mxu0 %v6012
        %6519 = vmatprep.subr.bf16.mxu0 %v6073
        %6520 = vmatpush2.bf16.msra.mxu0 %v6072
        %6521 = vmatprep.subr.bf16.mxu0 %v6069
        %6522 = vmatpush2.bf16.msra.mxu0 %v6068
        %6523 = vmatprep.subr.bf16.mxu0 %v6065
        %6524 = vmatpush2.bf16.msra.mxu0 %v6064
        %6525 = vmatprep.subr.bf16.mxu0 %v6061
        %6526 = vmatpush2.bf16.msra.mxu0 %v6060
        %6527 = vmatprep.subr.bf16.mxu0 %v6057
        %6528 = vmatpush2.bf16.msra.mxu0 %v6056
        %6529 = vmatprep.subr.bf16.mxu0 %v6053
        %6530 = vmatpush2.bf16.msra.mxu0 %v6052
        %6531 = vmatprep.subr.bf16.mxu0 %v6049
        %6532 = vmatpush2.bf16.msra.mxu0 %v6048
        %6533 = vmatprep.subr.bf16.mxu0 %v6045
        %6534 = vmatpush2.bf16.msra.mxu0 %v6044
        %6535 = vmatprep.mubr.bf16.mxu0 %v4897
        %6536 = vmatmul.mubr.bf16.gmra.mxu0 %v4896
        %v6537 = vpop.f32.mrf.mxu0
        %v6538 = vadd.f32 %v6495, %v6537
        %v6539 = vpop.f32.mrf.mxu0
        %v6540 = vadd.f32 %v6497, %v6539
        %v6541 = vpop.f32.mrf.mxu0
        %v6542 = vadd.f32 %v6499, %v6541
        %v6543 = vpop.f32.mrf.mxu0
        %v6544 = vadd.f32 %v6501, %v6543
        %6545 = vdwg.mxu0
        %6546 = vmatprep.subr.bf16.mxu0 %v6105
        %6547 = vmatpush1.bf16.msra.mxu0 %v6104
        %6548 = vmatprep.subr.bf16.mxu0 %v6101
        %6549 = vmatpush1.bf16.msra.mxu0 %v6100
        %6550 = vmatprep.subr.bf16.mxu0 %v6097
        %6551 = vmatpush1.bf16.msra.mxu0 %v6096
        %6552 = vmatprep.subr.bf16.mxu0 %v6093
        %6553 = vmatpush1.bf16.msra.mxu0 %v6092
        %6554 = vmatprep.subr.bf16.mxu0 %v6089
        %6555 = vmatpush1.bf16.msra.mxu0 %v6088
        %6556 = vmatprep.subr.bf16.mxu0 %v6085
        %6557 = vmatpush1.bf16.msra.mxu0 %v6084
        %6558 = vmatprep.subr.bf16.mxu0 %v6081
        %6559 = vmatpush1.bf16.msra.mxu0 %v6080
        %6560 = vmatprep.subr.bf16.mxu0 %v6077
        %6561 = vmatpush1.bf16.msra.mxu0 %v6076
        %6562 = vmatprep.subr.bf16.mxu0 %v6137
        %6563 = vmatpush2.bf16.msra.mxu0 %v6136
        %6564 = vmatprep.subr.bf16.mxu0 %v6133
        %6565 = vmatpush2.bf16.msra.mxu0 %v6132
        %6566 = vmatprep.subr.bf16.mxu0 %v6129
        %6567 = vmatpush2.bf16.msra.mxu0 %v6128
        %6568 = vmatprep.subr.bf16.mxu0 %v6125
        %6569 = vmatpush2.bf16.msra.mxu0 %v6124
        %6570 = vmatprep.subr.bf16.mxu0 %v6121
        %6571 = vmatpush2.bf16.msra.mxu0 %v6120
        %6572 = vmatprep.subr.bf16.mxu0 %v6117
        %6573 = vmatpush2.bf16.msra.mxu0 %v6116
        %6574 = vmatprep.subr.bf16.mxu0 %v6113
        %6575 = vmatpush2.bf16.msra.mxu0 %v6112
        %6576 = vmatprep.subr.bf16.mxu0 %v6109
        %6577 = vmatpush2.bf16.msra.mxu0 %v6108
        %6578 = vmatprep.mubr.bf16.mxu0 %v4899
        %6579 = vmatmul.mubr.bf16.gmra.mxu0 %v4898
        %v6580 = vpop.f32.mrf.mxu0
        %v6581 = vadd.f32 %v6538, %v6580
        %v6582 = vpop.f32.mrf.mxu0
        %v6583 = vadd.f32 %v6540, %v6582
        %v6584 = vpop.f32.mrf.mxu0
        %v6585 = vadd.f32 %v6542, %v6584
        %v6586 = vpop.f32.mrf.mxu0
        %v6587 = vadd.f32 %v6544, %v6586
        %6588 = vdwg.mxu0
        %6589 = vmatprep.subr.bf16.mxu0 %v6169
        %6590 = vmatpush1.bf16.msra.mxu0 %v6168
        %6591 = vmatprep.subr.bf16.mxu0 %v6165
        %6592 = vmatpush1.bf16.msra.mxu0 %v6164
        %6593 = vmatprep.subr.bf16.mxu0 %v6161
        %6594 = vmatpush1.bf16.msra.mxu0 %v6160
        %6595 = vmatprep.subr.bf16.mxu0 %v6157
        %6596 = vmatpush1.bf16.msra.mxu0 %v6156
        %6597 = vmatprep.subr.bf16.mxu0 %v6153
        %6598 = vmatpush1.bf16.msra.mxu0 %v6152
        %6599 = vmatprep.subr.bf16.mxu0 %v6149
        %6600 = vmatpush1.bf16.msra.mxu0 %v6148
        %6601 = vmatprep.subr.bf16.mxu0 %v6145
        %6602 = vmatpush1.bf16.msra.mxu0 %v6144
        %6603 = vmatprep.subr.bf16.mxu0 %v6141
        %6604 = vmatpush1.bf16.msra.mxu0 %v6140
        %6605 = vmatprep.subr.bf16.mxu0 %v6201
        %6606 = vmatpush2.bf16.msra.mxu0 %v6200
        %6607 = vmatprep.subr.bf16.mxu0 %v6197
        %6608 = vmatpush2.bf16.msra.mxu0 %v6196
        %6609 = vmatprep.subr.bf16.mxu0 %v6193
        %6610 = vmatpush2.bf16.msra.mxu0 %v6192
        %6611 = vmatprep.subr.bf16.mxu0 %v6189
        %6612 = vmatpush2.bf16.msra.mxu0 %v6188
        %6613 = vmatprep.subr.bf16.mxu0 %v6185
        %6614 = vmatpush2.bf16.msra.mxu0 %v6184
        %6615 = vmatprep.subr.bf16.mxu0 %v6181
        %6616 = vmatpush2.bf16.msra.mxu0 %v6180
        %6617 = vmatprep.subr.bf16.mxu0 %v6177
        %6618 = vmatpush2.bf16.msra.mxu0 %v6176
        %6619 = vmatprep.subr.bf16.mxu0 %v6173
        %6620 = vmatpush2.bf16.msra.mxu0 %v6172
        %6621 = vmatprep.mubr.bf16.mxu0 %v4901
        %6622 = vmatmul.mubr.bf16.gmra.mxu0 %v4900
        %v6623 = vpop.f32.mrf.mxu0
        %v6624 = vadd.f32 %v6581, %v6623
        %v6625 = vpop.f32.mrf.mxu0
        %v6626 = vadd.f32 %v6583, %v6625
        %v6627 = vpop.f32.mrf.mxu0
        %v6628 = vadd.f32 %v6585, %v6627
        %v6629 = vpop.f32.mrf.mxu0
        %v6630 = vadd.f32 %v6587, %v6629
        %6631 = vdwg.mxu0
        %6632 = vmatprep.subr.bf16.mxu0 %v5979
        %6633 = vmatpush1.bf16.msra.mxu0 %v5978
        %6634 = vmatprep.subr.bf16.mxu0 %v5975
        %6635 = vmatpush1.bf16.msra.mxu0 %v5974
        %6636 = vmatprep.subr.bf16.mxu0 %v5971
        %6637 = vmatpush1.bf16.msra.mxu0 %v5970
        %6638 = vmatprep.subr.bf16.mxu0 %v5967
        %6639 = vmatpush1.bf16.msra.mxu0 %v5966
        %6640 = vmatprep.subr.bf16.mxu0 %v5963
        %6641 = vmatpush1.bf16.msra.mxu0 %v5962
        %6642 = vmatprep.subr.bf16.mxu0 %v5959
        %6643 = vmatpush1.bf16.msra.mxu0 %v5958
        %6644 = vmatprep.subr.bf16.mxu0 %v5955
        %6645 = vmatpush1.bf16.msra.mxu0 %v5954
        %6646 = vmatprep.subr.bf16.mxu0 %v5951
        %6647 = vmatpush1.bf16.msra.mxu0 %v5950
        %6648 = vmatprep.subr.bf16.mxu0 %v6011
        %6649 = vmatpush2.bf16.msra.mxu0 %v6010
        %6650 = vmatprep.subr.bf16.mxu0 %v6007
        %6651 = vmatpush2.bf16.msra.mxu0 %v6006
        %6652 = vmatprep.subr.bf16.mxu0 %v6003
        %6653 = vmatpush2.bf16.msra.mxu0 %v6002
        %6654 = vmatprep.subr.bf16.mxu0 %v5999
        %6655 = vmatpush2.bf16.msra.mxu0 %v5998
        %6656 = vmatprep.subr.bf16.mxu0 %v5995
        %6657 = vmatpush2.bf16.msra.mxu0 %v5994
        %6658 = vmatprep.subr.bf16.mxu0 %v5991
        %6659 = vmatpush2.bf16.msra.mxu0 %v5990
        %6660 = vmatprep.subr.bf16.mxu0 %v5987
        %6661 = vmatpush2.bf16.msra.mxu0 %v5986
        %6662 = vmatprep.subr.bf16.mxu0 %v5983
        %6663 = vmatpush2.bf16.msra.mxu0 %v5982
        %6664 = vmatprep.mubr.bf16.mxu0 %v4895
        %6665 = vmatmul.mubr.bf16.gmra.mxu0 %v4894
        %v6666 = vpop.f32.mrf.mxu0
        %v6667 = vadd.f32 %v5171, %v6666
        %v6668 = vpop.f32.mrf.mxu0
        %v6669 = vadd.f32 %v5175, %v6668
        %v6670 = vpop.f32.mrf.mxu0
        %v6671 = vadd.f32 %v5171, %v6670
        %v6672 = vpop.f32.mrf.mxu0
        %v6673 = vadd.f32 %v5175, %v6672
        %6674 = vdwg.mxu0
        %6675 = vmatprep.subr.bf16.mxu0 %v6043
        %6676 = vmatpush1.bf16.msra.mxu0 %v6042
        %6677 = vmatprep.subr.bf16.mxu0 %v6039
        %6678 = vmatpush1.bf16.msra.mxu0 %v6038
        %6679 = vmatprep.subr.bf16.mxu0 %v6035
        %6680 = vmatpush1.bf16.msra.mxu0 %v6034
        %6681 = vmatprep.subr.bf16.mxu0 %v6031
        %6682 = vmatpush1.bf16.msra.mxu0 %v6030
        %6683 = vmatprep.subr.bf16.mxu0 %v6027
        %6684 = vmatpush1.bf16.msra.mxu0 %v6026
        %6685 = vmatprep.subr.bf16.mxu0 %v6023
        %6686 = vmatpush1.bf16.msra.mxu0 %v6022
        %6687 = vmatprep.subr.bf16.mxu0 %v6019
        %6688 = vmatpush1.bf16.msra.mxu0 %v6018
        %6689 = vmatprep.subr.bf16.mxu0 %v6015
        %6690 = vmatpush1.bf16.msra.mxu0 %v6014
        %6691 = vmatprep.subr.bf16.mxu0 %v6075
        %6692 = vmatpush2.bf16.msra.mxu0 %v6074
        %6693 = vmatprep.subr.bf16.mxu0 %v6071
        %6694 = vmatpush2.bf16.msra.mxu0 %v6070
        %6695 = vmatprep.subr.bf16.mxu0 %v6067
        %6696 = vmatpush2.bf16.msra.mxu0 %v6066
        %6697 = vmatprep.subr.bf16.mxu0 %v6063
        %6698 = vmatpush2.bf16.msra.mxu0 %v6062
        %6699 = vmatprep.subr.bf16.mxu0 %v6059
        %6700 = vmatpush2.bf16.msra.mxu0 %v6058
        %6701 = vmatprep.subr.bf16.mxu0 %v6055
        %6702 = vmatpush2.bf16.msra.mxu0 %v6054
        %6703 = vmatprep.subr.bf16.mxu0 %v6051
        %6704 = vmatpush2.bf16.msra.mxu0 %v6050
        %6705 = vmatprep.subr.bf16.mxu0 %v6047
        %6706 = vmatpush2.bf16.msra.mxu0 %v6046
        %6707 = vmatprep.mubr.bf16.mxu0 %v4897
        %6708 = vmatmul.mubr.bf16.gmra.mxu0 %v4896
        %v6709 = vpop.f32.mrf.mxu0
        %v6710 = vadd.f32 %v6667, %v6709
        %v6711 = vpop.f32.mrf.mxu0
        %v6712 = vadd.f32 %v6669, %v6711
        %v6713 = vpop.f32.mrf.mxu0
        %v6714 = vadd.f32 %v6671, %v6713
        %v6715 = vpop.f32.mrf.mxu0
        %v6716 = vadd.f32 %v6673, %v6715
        %6717 = vdwg.mxu0
        %6718 = vmatprep.subr.bf16.mxu0 %v6107
        %6719 = vmatpush1.bf16.msra.mxu0 %v6106
        %6720 = vmatprep.subr.bf16.mxu0 %v6103
        %6721 = vmatpush1.bf16.msra.mxu0 %v6102
        %6722 = vmatprep.subr.bf16.mxu0 %v6099
        %6723 = vmatpush1.bf16.msra.mxu0 %v6098
        %6724 = vmatprep.subr.bf16.mxu0 %v6095
        %6725 = vmatpush1.bf16.msra.mxu0 %v6094
        %6726 = vmatprep.subr.bf16.mxu0 %v6091
        %6727 = vmatpush1.bf16.msra.mxu0 %v6090
        %6728 = vmatprep.subr.bf16.mxu0 %v6087
        %6729 = vmatpush1.bf16.msra.mxu0 %v6086
        %6730 = vmatprep.subr.bf16.mxu0 %v6083
        %6731 = vmatpush1.bf16.msra.mxu0 %v6082
        %6732 = vmatprep.subr.bf16.mxu0 %v6079
        %6733 = vmatpush1.bf16.msra.mxu0 %v6078
        %6734 = vmatprep.subr.bf16.mxu0 %v6139
        %6735 = vmatpush2.bf16.msra.mxu0 %v6138
        %6736 = vmatprep.subr.bf16.mxu0 %v6135
        %6737 = vmatpush2.bf16.msra.mxu0 %v6134
        %6738 = vmatprep.subr.bf16.mxu0 %v6131
        %6739 = vmatpush2.bf16.msra.mxu0 %v6130
        %6740 = vmatprep.subr.bf16.mxu0 %v6127
        %6741 = vmatpush2.bf16.msra.mxu0 %v6126
        %6742 = vmatprep.subr.bf16.mxu0 %v6123
        %6743 = vmatpush2.bf16.msra.mxu0 %v6122
        %6744 = vmatprep.subr.bf16.mxu0 %v6119
        %6745 = vmatpush2.bf16.msra.mxu0 %v6118
        %6746 = vmatprep.subr.bf16.mxu0 %v6115
        %6747 = vmatpush2.bf16.msra.mxu0 %v6114
        %6748 = vmatprep.subr.bf16.mxu0 %v6111
        %6749 = vmatpush2.bf16.msra.mxu0 %v6110
        %6750 = vmatprep.mubr.bf16.mxu0 %v4899
        %6751 = vmatmul.mubr.bf16.gmra.mxu0 %v4898
        %v6752 = vpop.f32.mrf.mxu0
        %v6753 = vadd.f32 %v6710, %v6752
        %v6754 = vpop.f32.mrf.mxu0
        %v6755 = vadd.f32 %v6712, %v6754
        %v6756 = vpop.f32.mrf.mxu0
        %v6757 = vadd.f32 %v6714, %v6756
        %v6758 = vpop.f32.mrf.mxu0
        %v6759 = vadd.f32 %v6716, %v6758
        %6760 = vdwg.mxu0
        %6761 = vmatprep.subr.bf16.mxu0 %v6171
        %6762 = vmatpush1.bf16.msra.mxu0 %v6170
        %6763 = vmatprep.subr.bf16.mxu0 %v6167
        %6764 = vmatpush1.bf16.msra.mxu0 %v6166
        %6765 = vmatprep.subr.bf16.mxu0 %v6163
        %6766 = vmatpush1.bf16.msra.mxu0 %v6162
        %6767 = vmatprep.subr.bf16.mxu0 %v6159
        %6768 = vmatpush1.bf16.msra.mxu0 %v6158
        %6769 = vmatprep.subr.bf16.mxu0 %v6155
        %6770 = vmatpush1.bf16.msra.mxu0 %v6154
        %6771 = vmatprep.subr.bf16.mxu0 %v6151
        %6772 = vmatpush1.bf16.msra.mxu0 %v6150
        %6773 = vmatprep.subr.bf16.mxu0 %v6147
        %6774 = vmatpush1.bf16.msra.mxu0 %v6146
        %6775 = vmatprep.subr.bf16.mxu0 %v6143
        %6776 = vmatpush1.bf16.msra.mxu0 %v6142
        %6777 = vmatprep.subr.bf16.mxu0 %v6203
        %6778 = vmatpush2.bf16.msra.mxu0 %v6202
        %6779 = vmatprep.subr.bf16.mxu0 %v6199
        %6780 = vmatpush2.bf16.msra.mxu0 %v6198
        %6781 = vmatprep.subr.bf16.mxu0 %v6195
        %6782 = vmatpush2.bf16.msra.mxu0 %v6194
        %6783 = vmatprep.subr.bf16.mxu0 %v6191
        %6784 = vmatpush2.bf16.msra.mxu0 %v6190
        %6785 = vmatprep.subr.bf16.mxu0 %v6187
        %6786 = vmatpush2.bf16.msra.mxu0 %v6186
        %6787 = vmatprep.subr.bf16.mxu0 %v6183
        %6788 = vmatpush2.bf16.msra.mxu0 %v6182
        %6789 = vmatprep.subr.bf16.mxu0 %v6179
        %6790 = vmatpush2.bf16.msra.mxu0 %v6178
        %6791 = vmatprep.subr.bf16.mxu0 %v6175
        %6792 = vmatpush2.bf16.msra.mxu0 %v6174
        %6793 = vmatprep.mubr.bf16.mxu0 %v4901
        %6794 = vmatmul.mubr.bf16.gmra.mxu0 %v4900
        %v6795 = vpop.f32.mrf.mxu0
        %v6796 = vadd.f32 %v6753, %v6795
        %v6797 = vpop.f32.mrf.mxu0
        %v6798 = vadd.f32 %v6755, %v6797
        %v6799 = vpop.f32.mrf.mxu0
        %v6800 = vadd.f32 %v6757, %v6799
        %v6801 = vpop.f32.mrf.mxu0
        %v6802 = vadd.f32 %v6759, %v6801
        %6803 = vdwg.mxu0
        %v6804 = vmax.f32 %v6624, 0.0
        %v6805 = vmax.f32 %v6626, 0.0
        %v6806 = vmax.f32 %v6796, 0.0
        %v6807 = vmax.f32 %v6798, 0.0
        %v6808 = vmax.f32 %v6628, 0.0
        %v6809 = vmax.f32 %v6630, 0.0
        %v6810 = vmax.f32 %v6800, 0.0
        %v6811 = vmax.f32 %v6802, 0.0
        %v6812 = vpack.c.bf16 %v6808, %v6804
        %v6813 = vpack.c.bf16 %v6809, %v6805
        %v6814 = vpack.c.bf16 %v6810, %v6806
        %v6815 = vpack.c.bf16 %v6811, %v6807
        %v6816 = vld [vmem:[#allocation13] sm:$0xf]
        %v6817 = vld [vmem:[#allocation13 + $0x4] sm:$0xf]
        %v6818 = vld [vmem:[#allocation13 + $0x8] sm:$0xf]
        %v6819 = vld [vmem:[#allocation13 + $0xc] sm:$0xf]
        %v6820 = vld [vmem:[#allocation13 + $0x10] sm:$0xf]
        %v6821 = vld [vmem:[#allocation13 + $0x14] sm:$0xf]
        %v6822 = vld [vmem:[#allocation13 + $0x18] sm:$0xf]
        %v6823 = vld [vmem:[#allocation13 + $0x1c] sm:$0xf]
        %v6824 = vld [vmem:[#allocation13 + $0x20] sm:$0xf]
        %v6825 = vld [vmem:[#allocation13 + $0x24] sm:$0xf]
        %v6826 = vld [vmem:[#allocation13 + $0x28] sm:$0xf]
        %v6827 = vld [vmem:[#allocation13 + $0x2c] sm:$0xf]
        %v6828 = vld [vmem:[#allocation13 + $0x30] sm:$0xf]
        %v6829 = vld [vmem:[#allocation13 + $0x34] sm:$0xf]
        %v6830 = vld [vmem:[#allocation13 + $0x38] sm:$0xf]
        %v6831 = vld [vmem:[#allocation13 + $0x3c] sm:$0xf]
        %v6832 = vld [vmem:[#allocation13 + $0x40] sm:$0xf]
        %v6833 = vld [vmem:[#allocation13 + $0x44] sm:$0xf]
        %v6834 = vld [vmem:[#allocation13 + $0x48] sm:$0xf]
        %v6835 = vld [vmem:[#allocation13 + $0x4c] sm:$0xf]
        %v6836 = vld [vmem:[#allocation13 + $0x50] sm:$0xf]
        %v6837 = vld [vmem:[#allocation13 + $0x54] sm:$0xf]
        %v6838 = vld [vmem:[#allocation13 + $0x58] sm:$0xf]
        %v6839 = vld [vmem:[#allocation13 + $0x5c] sm:$0xf]
        %v6840 = vld [vmem:[#allocation13 + $0x60] sm:$0xf]
        %v6841 = vld [vmem:[#allocation13 + $0x64] sm:$0xf]
        %v6842 = vld [vmem:[#allocation13 + $0x68] sm:$0xf]
        %v6843 = vld [vmem:[#allocation13 + $0x6c] sm:$0xf]
        %v6844 = vld [vmem:[#allocation13 + $0x70] sm:$0xf]
        %v6845 = vld [vmem:[#allocation13 + $0x74] sm:$0xf]
        %v6846 = vld [vmem:[#allocation13 + $0x78] sm:$0xf]
        %v6847 = vld [vmem:[#allocation13 + $0x7c] sm:$0xf]
        %v6848 = vld [vmem:[#allocation13 + $0x80] sm:$0xf]
        %v6849 = vld [vmem:[#allocation13 + $0x84] sm:$0xf]
        %v6850 = vld [vmem:[#allocation13 + $0x88] sm:$0xf]
        %v6851 = vld [vmem:[#allocation13 + $0x8c] sm:$0xf]
        %v6852 = vld [vmem:[#allocation13 + $0x90] sm:$0xf]
        %v6853 = vld [vmem:[#allocation13 + $0x94] sm:$0xf]
        %v6854 = vld [vmem:[#allocation13 + $0x98] sm:$0xf]
        %v6855 = vld [vmem:[#allocation13 + $0x9c] sm:$0xf]
        %v6856 = vld [vmem:[#allocation13 + $0xa0] sm:$0xf]
        %v6857 = vld [vmem:[#allocation13 + $0xa4] sm:$0xf]
        %v6858 = vld [vmem:[#allocation13 + $0xa8] sm:$0xf]
        %v6859 = vld [vmem:[#allocation13 + $0xac] sm:$0xf]
        %v6860 = vld [vmem:[#allocation13 + $0xb0] sm:$0xf]
        %v6861 = vld [vmem:[#allocation13 + $0xb4] sm:$0xf]
        %v6862 = vld [vmem:[#allocation13 + $0xb8] sm:$0xf]
        %v6863 = vld [vmem:[#allocation13 + $0xbc] sm:$0xf]
        %v6864 = vld [vmem:[#allocation13 + $0xc0] sm:$0xf]
        %v6865 = vld [vmem:[#allocation13 + $0xc4] sm:$0xf]
        %v6866 = vld [vmem:[#allocation13 + $0xc8] sm:$0xf]
        %v6867 = vld [vmem:[#allocation13 + $0xcc] sm:$0xf]
        %v6868 = vld [vmem:[#allocation13 + $0xd0] sm:$0xf]
        %v6869 = vld [vmem:[#allocation13 + $0xd4] sm:$0xf]
        %v6870 = vld [vmem:[#allocation13 + $0xd8] sm:$0xf]
        %v6871 = vld [vmem:[#allocation13 + $0xdc] sm:$0xf]
        %v6872 = vld [vmem:[#allocation13 + $0xe0] sm:$0xf]
        %v6873 = vld [vmem:[#allocation13 + $0xe4] sm:$0xf]
        %v6874 = vld [vmem:[#allocation13 + $0xe8] sm:$0xf]
        %v6875 = vld [vmem:[#allocation13 + $0xec] sm:$0xf]
        %v6876 = vld [vmem:[#allocation13 + $0xf0] sm:$0xf]
        %v6877 = vld [vmem:[#allocation13 + $0xf4] sm:$0xf]
        %v6878 = vld [vmem:[#allocation13 + $0xf8] sm:$0xf]
        %v6879 = vld [vmem:[#allocation13 + $0xfc] sm:$0xf]
        %v6880 = vld [vmem:[#allocation14] sm:$0x1]
        %v6882 = vlaneseq
        %v6883 = vshrl.u32 %v6882, 7
        %v6884 = vsub.s32 0, %v6883
        %v6885 = vrot.slane %v6880, %v6884
        %v6951 = vunpack.c.l.b16 %v6816
        %v6952 = vunpack.c.l.b16 %v6817
        %v6953 = vunpack.c.l.b16 %v6818
        %v6954 = vunpack.c.l.b16 %v6819
        %v6955 = vunpack.c.l.b16 %v6820
        %v6956 = vunpack.c.l.b16 %v6821
        %v6957 = vunpack.c.l.b16 %v6822
        %v6958 = vunpack.c.l.b16 %v6823
        %v6959 = vunpack.c.l.b16 %v6824
        %v6960 = vunpack.c.l.b16 %v6825
        %v6961 = vunpack.c.l.b16 %v6826
        %v6962 = vunpack.c.l.b16 %v6827
        %v6963 = vunpack.c.l.b16 %v6828
        %v6964 = vunpack.c.l.b16 %v6829
        %v6965 = vunpack.c.l.b16 %v6830
        %v6966 = vunpack.c.l.b16 %v6831
        %v6967 = vunpack.c.l.b16 %v6832
        %v6968 = vunpack.c.l.b16 %v6833
        %v6969 = vunpack.c.l.b16 %v6834
        %v6970 = vunpack.c.l.b16 %v6835
        %v6971 = vunpack.c.l.b16 %v6836
        %v6972 = vunpack.c.l.b16 %v6837
        %v6973 = vunpack.c.l.b16 %v6838
        %v6974 = vunpack.c.l.b16 %v6839
        %v6975 = vunpack.c.l.b16 %v6840
        %v6976 = vunpack.c.l.b16 %v6841
        %v6977 = vunpack.c.l.b16 %v6842
        %v6978 = vunpack.c.l.b16 %v6843
        %v6979 = vunpack.c.l.b16 %v6844
        %v6980 = vunpack.c.l.b16 %v6845
        %v6981 = vunpack.c.l.b16 %v6846
        %v6982 = vunpack.c.l.b16 %v6847
        %v6983 = vunpack.c.l.b16 %v6848
        %v6984 = vunpack.c.l.b16 %v6849
        %v6985 = vunpack.c.l.b16 %v6850
        %v6986 = vunpack.c.l.b16 %v6851
        %v6987 = vunpack.c.l.b16 %v6852
        %v6988 = vunpack.c.l.b16 %v6853
        %v6989 = vunpack.c.l.b16 %v6854
        %v6990 = vunpack.c.l.b16 %v6855
        %v6991 = vunpack.c.l.b16 %v6856
        %v6992 = vunpack.c.l.b16 %v6857
        %v6993 = vunpack.c.l.b16 %v6858
        %v6994 = vunpack.c.l.b16 %v6859
        %v6995 = vunpack.c.l.b16 %v6860
        %v6996 = vunpack.c.l.b16 %v6861
        %v6997 = vunpack.c.l.b16 %v6862
        %v6998 = vunpack.c.l.b16 %v6863
        %v6999 = vunpack.c.l.b16 %v6864
        %v7000 = vunpack.c.l.b16 %v6865
        %v7001 = vunpack.c.l.b16 %v6866
        %v7002 = vunpack.c.l.b16 %v6867
        %v7003 = vunpack.c.l.b16 %v6868
        %v7004 = vunpack.c.l.b16 %v6869
        %v7005 = vunpack.c.l.b16 %v6870
        %v7006 = vunpack.c.l.b16 %v6871
        %v7007 = vunpack.c.l.b16 %v6872
        %v7008 = vunpack.c.l.b16 %v6873
        %v7009 = vunpack.c.l.b16 %v6874
        %v7010 = vunpack.c.l.b16 %v6875
        %v7011 = vunpack.c.l.b16 %v6876
        %v7012 = vunpack.c.l.b16 %v6877
        %v7013 = vunpack.c.l.b16 %v6878
        %v7014 = vunpack.c.l.b16 %v6879
        %v7015 = vpack.c.b16 %v6952, %v6951
        %v7016 = vpack.c.b16 %v6954, %v6953
        %v7017 = vpack.c.b16 %v6956, %v6955
        %v7018 = vpack.c.b16 %v6958, %v6957
        %v7019 = vpack.c.b16 %v6960, %v6959
        %v7020 = vpack.c.b16 %v6962, %v6961
        %v7021 = vpack.c.b16 %v6964, %v6963
        %v7022 = vpack.c.b16 %v6966, %v6965
        %v7023 = vpack.c.b16 %v6968, %v6967
        %v7024 = vpack.c.b16 %v6970, %v6969
        %v7025 = vpack.c.b16 %v6972, %v6971
        %v7026 = vpack.c.b16 %v6974, %v6973
        %v7027 = vpack.c.b16 %v6976, %v6975
        %v7028 = vpack.c.b16 %v6978, %v6977
        %v7029 = vpack.c.b16 %v6980, %v6979
        %v7030 = vpack.c.b16 %v6982, %v6981
        %v7031 = vpack.c.b16 %v6984, %v6983
        %v7032 = vpack.c.b16 %v6986, %v6985
        %v7033 = vpack.c.b16 %v6988, %v6987
        %v7034 = vpack.c.b16 %v6990, %v6989
        %v7035 = vpack.c.b16 %v6992, %v6991
        %v7036 = vpack.c.b16 %v6994, %v6993
        %v7037 = vpack.c.b16 %v6996, %v6995
        %v7038 = vpack.c.b16 %v6998, %v6997
        %v7039 = vpack.c.b16 %v7000, %v6999
        %v7040 = vpack.c.b16 %v7002, %v7001
        %v7041 = vpack.c.b16 %v7004, %v7003
        %v7042 = vpack.c.b16 %v7006, %v7005
        %v7043 = vpack.c.b16 %v7008, %v7007
        %v7044 = vpack.c.b16 %v7010, %v7009
        %v7045 = vpack.c.b16 %v7012, %v7011
        %v7046 = vpack.c.b16 %v7014, %v7013
        %7079 = vmatprep.subr.bf16.mxu0 0
        %7080 = vmatpush1.bf16.msra.mxu0 %v7022
        %7081 = vmatprep.subr.bf16.mxu0 0
        %7082 = vmatpush1.bf16.msra.mxu0 %v7021
        %7083 = vmatprep.subr.bf16.mxu0 0
        %7084 = vmatpush1.bf16.msra.mxu0 %v7020
        %7085 = vmatprep.subr.bf16.mxu0 0
        %7086 = vmatpush1.bf16.msra.mxu0 %v7019
        %7087 = vmatprep.subr.bf16.mxu0 0
        %7088 = vmatpush1.bf16.msra.mxu0 %v7018
        %7089 = vmatprep.subr.bf16.mxu0 0
        %7090 = vmatpush1.bf16.msra.mxu0 %v7017
        %7091 = vmatprep.subr.bf16.mxu0 0
        %7092 = vmatpush1.bf16.msra.mxu0 %v7016
        %7093 = vmatprep.subr.bf16.mxu0 0
        %7094 = vmatpush1.bf16.msra.mxu0 %v7015
        %7095 = vmatprep.subr.bf16.mxu0 0
        %7096 = vmatpush2.bf16.msra.mxu0 %v7030
        %7097 = vmatprep.subr.bf16.mxu0 0
        %7098 = vmatpush2.bf16.msra.mxu0 %v7029
        %7099 = vmatprep.subr.bf16.mxu0 0
        %7100 = vmatpush2.bf16.msra.mxu0 %v7028
        %7101 = vmatprep.subr.bf16.mxu0 0
        %7102 = vmatpush2.bf16.msra.mxu0 %v7027
        %7103 = vmatprep.subr.bf16.mxu0 0
        %7104 = vmatpush2.bf16.msra.mxu0 %v7026
        %7105 = vmatprep.subr.bf16.mxu0 0
        %7106 = vmatpush2.bf16.msra.mxu0 %v7025
        %7107 = vmatprep.subr.bf16.mxu0 0
        %7108 = vmatpush2.bf16.msra.mxu0 %v7024
        %7109 = vmatprep.subr.bf16.mxu0 0
        %7110 = vmatpush2.bf16.msra.mxu0 %v7023
        %7111 = vmatprep.mubr.bf16.mxu0 %v6813
        %7112 = vmatmul.mubr.bf16.gmra.mxu0 %v6812
        %v7113 = vpop.f32.mrf.mxu0
        %v7114 = vadd.f32 %v6885, %v7113
        %v7115 = vpop.f32.mrf.mxu0
        %v7116 = vpop.f32.mrf.mxu0
        %v7117 = vadd.f32 %v6885, %v7116
        %v7118 = vpop.f32.mrf.mxu0
        %7119 = vdwg.mxu0
        %7120 = vmatprep.subr.bf16.mxu0 0
        %7121 = vmatpush1.bf16.msra.mxu0 %v7038
        %7122 = vmatprep.subr.bf16.mxu0 0
        %7123 = vmatpush1.bf16.msra.mxu0 %v7037
        %7124 = vmatprep.subr.bf16.mxu0 0
        %7125 = vmatpush1.bf16.msra.mxu0 %v7036
        %7126 = vmatprep.subr.bf16.mxu0 0
        %7127 = vmatpush1.bf16.msra.mxu0 %v7035
        %7128 = vmatprep.subr.bf16.mxu0 0
        %7129 = vmatpush1.bf16.msra.mxu0 %v7034
        %7130 = vmatprep.subr.bf16.mxu0 0
        %7131 = vmatpush1.bf16.msra.mxu0 %v7033
        %7132 = vmatprep.subr.bf16.mxu0 0
        %7133 = vmatpush1.bf16.msra.mxu0 %v7032
        %7134 = vmatprep.subr.bf16.mxu0 0
        %7135 = vmatpush1.bf16.msra.mxu0 %v7031
        %7136 = vmatprep.subr.bf16.mxu0 0
        %7137 = vmatpush2.bf16.msra.mxu0 %v7046
        %7138 = vmatprep.subr.bf16.mxu0 0
        %7139 = vmatpush2.bf16.msra.mxu0 %v7045
        %7140 = vmatprep.subr.bf16.mxu0 0
        %7141 = vmatpush2.bf16.msra.mxu0 %v7044
        %7142 = vmatprep.subr.bf16.mxu0 0
        %7143 = vmatpush2.bf16.msra.mxu0 %v7043
        %7144 = vmatprep.subr.bf16.mxu0 0
        %7145 = vmatpush2.bf16.msra.mxu0 %v7042
        %7146 = vmatprep.subr.bf16.mxu0 0
        %7147 = vmatpush2.bf16.msra.mxu0 %v7041
        %7148 = vmatprep.subr.bf16.mxu0 0
        %7149 = vmatpush2.bf16.msra.mxu0 %v7040
        %7150 = vmatprep.subr.bf16.mxu0 0
        %7151 = vmatpush2.bf16.msra.mxu0 %v7039
        %7152 = vmatprep.mubr.bf16.mxu0 %v6815
        %7153 = vmatmul.mubr.bf16.gmra.mxu0 %v6814
        %v7154 = vpop.f32.mrf.mxu0
        %v7155 = vadd.f32 %v7114, %v7154
        %v7156 = vpop.f32.mrf.mxu0
        %v7157 = vpop.f32.mrf.mxu0
        %v7158 = vadd.f32 %v7117, %v7157
        %v7159 = vpop.f32.mrf.mxu0
        %7160 = vdwg.mxu0
        %v7161 = vmax.f32 %v7155, 0.0
        %v7162 = vmax.f32 %v7158, 0.0
        %v7163 = vld [vmem:[#allocation16] sm:$0x1]
        %v7165 = vlaneseq
        %v7166 = vshrl.u32 %v7165, 7
        %v7167 = vsub.s32 0, %v7166
        %v7168 = vrot.slane %v7163, %v7167
        %v7170 = vmul.f32 %v7161, %v7168
        %v7171 = vmul.f32 %v7162, %v7168
        %7172 = vadd.xlane.f32.xlu0 %v7170
        %v7173 = vpop.xlane.xlu0 %7172
        %7174 = vadd.xlane.f32.xlu0 %v7171
        %v7175 = vpop.xlane.xlu0 %7174
        %s7176 = sld [smem:[#allocation2]]
        %v7177 = vstv %s7176
        %v7178 = vadd.f32 %v7173, %v7177
        %v7179 = vadd.f32 %v7175, %v7177
        %v7180 = vsub.f32 0.0, %v7178
        %v7181 = vsub.f32 0.0, %v7179
        %v7182 = vmul.f32 %v7180, 1.442695
        %v7183 = vpow.pop %v7182
        %v7184 = vmul.f32 %v7181, 1.442695
        %v7185 = vpow.pop %v7184
        %v7186 = vadd.f32 %v7183, 1.0
        %v7187 = vadd.f32 %v7185, 1.0
        %v7188 = vrcp.pop %v7186
        %v7189 = vrcp.pop %v7187
        %vm7190 = vcmask 7168
        %7191 = vst.msk [vmem:[%s513] sm:$0xff] %vm7190, %v7188
        %7192 = vst.msk [vmem:[%s513 + $0x8] sm:$0xff] %vm7190, %v7189
        %s7193 = smul.u32 2, %s28
        %p7194 = scmp.lt.s32.totalorder %s7193, 3
        %s7195 = scalar_select %p7194, %s7193, 3
        %s7196 = smul.addr %s7195, 8
        %s7197 = scalar_lea.vmem %s11, %s7196
        // Predicated region
        $region101: #{discriminator_conv_forward.1} parent=63 // pred_check
          %p7198 = pneg %p282
        $region102: #{discriminator_conv_forward.1} parent=63 // pred_check_branch
          %7200 = sbr.rel (%p7198) target = $region104
        $region103: #{discriminator_conv_forward.1} parent=63 // pred_region
          %s7201 = smul.u32 2, %s28
        $region104: #{discriminator_conv_forward.1} parent=63 // pred_fallthru
          _
      $region64: #{discriminator_conv_forward.1} parent=5 // pred_fallthru
        _
      %p7202 = scmp.le.s32.totalorder 2, %s23
      // Predicated region
      $region105: #{discriminator_conv_forward.1} parent=5 // pred_check
        %p7203 = pneg %p7202
      $region106: #{discriminator_conv_forward.1} parent=5 // pred_check_branch
        %7205 = sbr.rel (%p7203) target = $region108
      $region107: #{discriminator_conv_forward.1} parent=5 // pred_region
        %s7206 = ssub.s32 %s23, 2
        // Predicated region
        $region109: #{discriminator_conv_forward.1} parent=107 // pred_check
          %p7207 = pneg %p288
        $region110: #{discriminator_conv_forward.1} parent=107 // pred_check_branch
          %7209 = sbr.rel (%p7207) target = $region112
        $region111: #{discriminator_conv_forward.1} parent=107 // pred_region
          %s7210 = smul.u32 2, %s29
          %p7211 = scmp.lt.s32.totalorder %s7210, 3
          %s7212 = scalar_select %p7211, %s7210, 3
          %s7213 = smul.addr %s7212, 8
          %s7214 = scalar_lea.vmem %s11, %s7213
        $region112: #{discriminator_conv_forward.1} parent=107 // pred_fallthru
          _
      $region108: #{discriminator_conv_forward.1} parent=5 // pred_fallthru
        _
    $region6: #{discriminator_conv_forward.1} parent=1 // loop_footer
      %s27 = sadd.s32 1, %s23
    $region7: #{discriminator_conv_forward.1} parent=1 // loop_footer_branch
      %22 = sbr.rel target = $region3
    $region8: #{discriminator_conv_forward.1} parent=1 // loop_exit
      _
    %7215 = vsyncpa [#allocation4], 1
    %s7216 = scalar_lea.sflag [#allocation4], 1
    %7217 = vsyncpa %s7216, 1
    %7218 = vsyncpa [#allocation6], 1
    %7219 = vsyncpa [#allocation9], 1
    %7220 = vsyncpa [#allocation12], 1
    %7221 = vsyncpa [#allocation15], 1

</llo_original>
